<compile_context>
chip_gen: v7x
topology: tpu7x:2x2x1
jax: 0.10.0
libtpu: 0.0.40
codegen_flags: <defaults>
</compile_context>

<pallas_src>
import jax
import jax.numpy as jnp
from jax.experimental import pallas as pl
from jax.experimental.pallas import tpu as pltpu

_ALIGN = 8            # sublane alignment of the padded row stride (f32 carried layout)
_CONV1_CIN_PAD = 8    # conv1 input channels zero-padded 3 -> 8
_NUM_CLASSES = 10
_FC_LANES = 128       # lane-dense FC output (real 10 columns, rest zero)


def _round_up(v, m):
    return -(-v // m) * m


_VMEM_LIMIT = []


def _vmem_limit_bytes():
    """Generation-aware scoped VMEM limit (v7x only has 64 MiB per TensorCore)."""
    if not _VMEM_LIMIT:
        try:
            cap = int(pltpu.get_tpu_info().vmem_capacity_bytes)
            lim = max(32 << 20, min(96 << 20, (cap * 3) // 5))
        except Exception:  # conservative fallback, safe on every generation
            lim = 40 << 20
        _VMEM_LIMIT.append(lim)
    return _VMEM_LIMIT[0]


def _compiler_params(num_parallel_grid_axes=0):
    kwargs = dict(vmem_limit_bytes=_vmem_limit_bytes())
    if num_parallel_grid_axes:
        kwargs["dimension_semantics"] = ("parallel",) * num_parallel_grid_axes
    return pltpu.CompilerParams(**kwargs)


# ----------------------- in-kernel helpers (traced) ---------------------------

def _shift_prev_pixel(v, col):
    """v at pixel p-1, zeroed where the previous pixel is the left zero pad.

    v, col : (m, c) arrays; col holds each pixel's column inside its padded row.
    """
    m = v.shape[0]
    zrow = jnp.zeros((1, v.shape[1]), v.dtype)
    s = jnp.concatenate([zrow, v[: m - 1]], axis=0)
    return jnp.where(col >= 1, s, jnp.zeros_like(s))


def _shift_next_pixel(v, col, w_real):
    """v at pixel p+1, zeroed where the next pixel is the right zero pad."""
    m = v.shape[0]
    zrow = jnp.zeros((1, v.shape[1]), v.dtype)
    s = jnp.concatenate([v[1:m], zrow], axis=0)
    return jnp.where(col <= w_real - 2, s, jnp.zeros_like(s))


def _tap_dot(lhs, wk, cin, folded):
    """One ky row tap on the MXU.

    lhs : (m, 3*cin) bf16 folded LHS, or a tuple of 3 (m, cin) bf16 kx groups.
    wk  : (3*cin, cout) bf16 per-ky weight block [w[ky,0]; w[ky,1]; w[ky,2]].
    """
    if folded:
        return jnp.dot(lhs, wk, preferred_element_type=jnp.float32)
    parts = [jnp.dot(g, wk[i * cin:(i + 1) * cin],
                     preferred_element_type=jnp.float32)
             for i, g in enumerate(lhs)]
    return parts[0] + parts[1] + parts[2]


# ------------------------ fused 3x3 stride-1 conv ------------------------------

def conv3x3_s1(x, hw, w, *, pre=None, post=None, residual=None):
    """Fused Conv2d 3x3/s1/p1 (+pre BN/ReLU, +post BN/ReLU, +residual add).

    x        : (N, H*Wp, Cin) f32, width-padded carried layout (Wp = row stride).
    w        : (3, 3*Cin, Cout) bf16 (per-ky blocks, K ordered (kx, cin)).
    pre/post : optional (scale, bias) of shape (1, Cin) / (1, Cout) (folded BN).
    residual : optional (N, H*Wp, Cout) f32 added in the epilogue.
    Returns (N, H*Wp, Cout) f32 in the same carried layout.
    """
    n, m, cin = x.shape
    h, w_real = hw
    wp = m // h
    assert h * wp == m and wp % _ALIGN == 0, (hw, x.shape)
    cout = w.shape[-1]
    assert w.shape == (3, 3 * cin, cout), (w.shape, cin, cout)
    folded = (cin % 128 == 0)   # lane-aligned K-fold only for 128-multiple Cin
    has_pre, has_post, has_res = pre is not None, post is not None, residual is not None

    def kernel(*refs):
        i = 0
        x_ref = refs[i]; i += 1
        w_ref = refs[i]; i += 1
        if has_pre:
            prs_ref, prb_ref = refs[i], refs[i + 1]; i += 2
        if has_post:
            pos_ref, pob_ref = refs[i], refs[i + 1]; i += 2
        if has_res:
            res_ref = refs[i]; i += 1
        out_ref = refs[i]

        xv = x_ref[0]                                            # (m, cin) f32
        if has_pre:                                              # fused bn1 + ReLU
            xv = jnp.maximum(xv * prs_ref[...] + prb_ref[...], 0.0)
        hb = xv.astype(jnp.bfloat16)                             # single bf16 cast

        # column position of every pixel inside its padded row
        col = jax.lax.broadcasted_iota(jnp.int32, (m, cin), 0) % wp
        groups = (_shift_prev_pixel(hb, col),                    # kx = 0 (x-1)
                  hb,                                            # kx = 1 (x)
                  _shift_next_pixel(hb, col, w_real))            # kx = 2 (x+1)
        lhs = jnp.concatenate(groups, axis=1) if folded else groups

        # one MXU matmul per ky row tap (K = 3*Cin when folded)
        t0 = _tap_dot(lhs, w_ref[0], cin, folded)                # ky = 0 (row y-1)
        t1 = _tap_dot(lhs, w_ref[1], cin, folded)                # ky = 1 (row y)
        t2 = _tap_dot(lhs, w_ref[2], cin, folded)                # ky = 2 (row y+1)

        # ky taps = aligned row-block shifts of the f32 partials (offset = wp)
        zrows = jnp.zeros((wp, cout), jnp.float32)
        acc = (t1
               + jnp.concatenate([zrows, t0[: m - wp]], axis=0)
               + jnp.concatenate([t2[wp:], zrows], axis=0))

        if has_post:                                             # fused bn2 + ReLU
            acc = jnp.maximum(acc * pos_ref[...] + pob_ref[...], 0.0)
        if has_res:                                              # fused residual
            acc = acc + res_ref[0]
        out_ref[0] = acc.astype(out_ref.dtype)                   # single slab store

    in_specs = [pl.BlockSpec((1, m, cin), lambda b: (b, 0, 0)),
                pl.BlockSpec((3, 3 * cin, cout), lambda b: (0, 0, 0))]
    args = [x, w]
    if has_pre:
        in_specs += [pl.BlockSpec((1, cin), lambda b: (0, 0))] * 2
        args += [pre[0], pre[1]]
    if has_post:
        in_specs += [pl.BlockSpec((1, cout), lambda b: (0, 0))] * 2
        args += [post[0], post[1]]
    if has_res:
        in_specs.append(pl.BlockSpec((1, m, cout), lambda b: (b, 0, 0)))
        args.append(residual)

    return pl.pallas_call(
        kernel,
        out_shape=jax.ShapeDtypeStruct((n, m, cout), jnp.float32),
        grid=(n,),
        in_specs=in_specs,
        out_specs=pl.BlockSpec((1, m, cout), lambda b: (b, 0, 0)),
        compiler_params=_compiler_params(num_parallel_grid_axes=1),
    )(*args)


# --------- fused 3x3 stride-2 conv + 1x1 stride-2 shortcut (block head) --------

def preact_down_block_head(x, hw, w, w_sc, *, pre, post):
    """conv1 of a downsampling PreAct block (3x3/s2/p1) fused with bn1+ReLU
    prologue, bn2+ReLU epilogue and the 1x1/s2 shortcut conv (which reuses the
    already pre-activated even/even phase).  Stride is handled by a cheap JAX
    2x2 phase split; all in-kernel accesses stay contiguous & aligned.

    Returns (conv1_out, shortcut_out, (H/2, W/2)), both (N, H2*Wq, Cout) f32.
    """
    n, m, cin = x.shape
    h, w_real = hw
    wp = m // h
    h2, w2 = h // 2, w_real // 2
    wq = max(_round_up(w2, _ALIGN), _ALIGN)
    m2 = h2 * wq
    cout = w.shape[-1]
    assert w.shape == (3, 3 * cin, cout) and w_sc.shape == (cin, cout)
    folded = (cin % 128 == 0)

    # ---- JAX glue: 2x2 phase split (dense per-phase sub-images, ~1x copy) ----
    x4 = x.reshape(n, h, wp, cin)[:, :, :w_real, :]

    def _phase(py, px):
        p = x4[:, py::2, px::2, :]
        if wq > w2:
            p = jnp.pad(p, ((0, 0), (0, 0), (0, wq - w2), (0, 0)))
        return p.reshape(n, m2, cin)

    xee, xeo, xoe, xoo = _phase(0, 0), _phase(0, 1), _phase(1, 0), _phase(1, 1)
    prs_a, prb_a = pre
    pos_a, pob_a = post

    def kernel(ee_ref, eo_ref, oe_ref, oo_ref, w_ref, wsc_ref,
               prs_ref, prb_ref, pos_ref, pob_ref, out_ref, sc_ref):
        prs, prb = prs_ref[...], prb_ref[...]

        def act(r):                                   # fused bn1 + ReLU + bf16 cast
            return jnp.maximum(r[0] * prs + prb, 0.0).astype(jnp.bfloat16)

        hee, heo, hoe, hoo = act(ee_ref), act(eo_ref), act(oe_ref), act(oo_ref)

        col = jax.lax.broadcasted_iota(jnp.int32, (m2, cin), 0) % wq
        # output (y',x') reads input cols 2x'-1, 2x', 2x'+1 and rows 2y'-1, 2y', 2y'+1
        even_groups = (_shift_prev_pixel(heo, col), hee, heo)   # input row 2y'   (ky=1)
        odd_groups = (_shift_prev_pixel(hoo, col), hoe, hoo)    # input rows 2y'+-1 (ky=0,2)
        if folded:
            even_lhs = jnp.concatenate(even_groups, axis=1)
            odd_lhs = jnp.concatenate(odd_groups, axis=1)
        else:
            even_lhs, odd_lhs = even_groups, odd_groups

        t1 = _tap_dot(even_lhs, w_ref[1], cin, folded)          # ky = 1, no row shift
        t0 = _tap_dot(odd_lhs, w_ref[0], cin, folded)           # ky = 0, shift down
        t2 = _tap_dot(odd_lhs, w_ref[2], cin, folded)           # ky = 2, no row shift
        zrows = jnp.zeros((wq, cout), jnp.float32)
        acc = t1 + t2 + jnp.concatenate([zrows, t0[: m2 - wq]], axis=0)

        acc = jnp.maximum(acc * pos_ref[...] + pob_ref[...], 0.0)   # fused bn2 + ReLU
        out_ref[0] = acc.astype(out_ref.dtype)

        # fused 1x1 stride-2 shortcut conv on the already pre-activated ee phase
        sc = jnp.dot(hee, wsc_ref[...], preferred_element_type=jnp.float32)
        sc_ref[0] = sc.astype(sc_ref.dtype)

    act_spec = pl.BlockSpec((1, m2, cin), lambda b: (b, 0, 0))
    out_spec = pl.BlockSpec((1, m2, cout), lambda b: (b, 0, 0))
    in_specs = [act_spec] * 4 + [
        pl.BlockSpec((3, 3 * cin, cout), lambda b: (0, 0, 0)),
        pl.BlockSpec((cin, cout), lambda b: (0, 0)),
        pl.BlockSpec((1, cin), lambda b: (0, 0)),
        pl.BlockSpec((1, cin), lambda b: (0, 0)),
        pl.BlockSpec((1, cout), lambda b: (0, 0)),
        pl.BlockSpec((1, cout), lambda b: (0, 0)),
    ]
    out1, sc = pl.pallas_call(
        kernel,
        out_shape=(jax.ShapeDtypeStruct((n, m2, cout), jnp.float32),
                   jax.ShapeDtypeStruct((n, m2, cout), jnp.float32)),
        grid=(n,),
        in_specs=in_specs,
        out_specs=(out_spec, out_spec),
        compiler_params=_compiler_params(num_parallel_grid_axes=1),
    )(xee, xeo, xoe, xoo, w, w_sc, prs_a, prb_a, pos_a, pob_a)
    return out1, sc, (h2, w2)


# ------------------- fused global average pool + Linear ------------------------

def pool_fc(x, hw, w, b):
    """adaptive_avg_pool2d(1) + Linear; gridded over batch, masks padded columns."""
    n, m, c = x.shape
    h, w_real = hw
    wp = m // h
    inv_area = 1.0 / float(h * w_real)

    def kernel(x_ref, w_ref, b_ref, o_ref):
        xv = x_ref[0]                                            # (m, c) f32
        col = jax.lax.broadcasted_iota(jnp.int32, (m, c), 0) % wp
        xv = jnp.where(col < w_real, xv, jnp.zeros_like(xv))     # drop garbage cols
        pooled = jnp.sum(xv, axis=0, keepdims=True) * inv_area   # (1, c)
        o_ref[0] = (jnp.dot(pooled.astype(jnp.bfloat16), w_ref[...],
                            preferred_element_type=jnp.float32) + b_ref[...])

    out = pl.pallas_call(
        kernel,
        out_shape=jax.ShapeDtypeStruct((n, 1, _FC_LANES), jnp.float32),
        grid=(n,),
        in_specs=[pl.BlockSpec((1, m, c), lambda i: (i, 0, 0)),
                  pl.BlockSpec((c, _FC_LANES), lambda i: (0, 0)),
                  pl.BlockSpec((1, _FC_LANES), lambda i: (0, 0))],
        out_specs=pl.BlockSpec((1, 1, _FC_LANES), lambda i: (i, 0, 0)),
        compiler_params=_compiler_params(num_parallel_grid_axes=1),
    )(x, w, b)
    return out[:, 0, :]


# --------------------------------- parameters ----------------------------------

def _conv3_weight(key, cin, cout, cin_pad=None):
    w = jax.random.normal(key, (3, 3, cin, cout), dtype=jnp.float32)
    w = w * jnp.sqrt(2.0 / (9.0 * cin))
    if cin_pad is not None and cin_pad > cin:
        w = jnp.pad(w, ((0, 0), (0, 0), (0, cin_pad - cin), (0, 0)))
    cin_eff = w.shape[2]
    # per-ky blocks, K ordered as (kx, cin) to match the kernels' kx groups
    return w.reshape(3, 3 * cin_eff, cout).astype(jnp.bfloat16)


def _conv1x1_weight(key, cin, cout):
    w = jax.random.normal(key, (cin, cout), dtype=jnp.float32) * jnp.sqrt(2.0 / cin)
    return w.astype(jnp.bfloat16)


def _folded_bn(key, c):
    k1, k2, k3, k4 = jax.random.split(key, 4)
    gamma = 1.0 + 0.1 * jax.random.normal(k1, (c,), dtype=jnp.float32)
    beta = 0.1 * jax.random.normal(k2, (c,), dtype=jnp.float32)
    running_mean = 0.1 * jax.random.normal(k3, (c,), dtype=jnp.float32)
    running_var = 0.5 + jax.random.uniform(k4, (c,), dtype=jnp.float32)
    eps = 1e-5
    scale = gamma / jnp.sqrt(running_var + eps)
    bias = beta - running_mean * scale
    return scale.reshape(1, c), bias.reshape(1, c)


def init_params(key):
    keys = iter(jax.random.split(key, 64))
    params = {'conv1_w': _conv3_weight(next(keys), 3, 64, cin_pad=_CONV1_CIN_PAD)}
    blocks = []
    start_features = 64
    # mirrors ResNetV2Prop._stack_layer: (64,s1)x2, (128,s2)x2, (256,s2)x2, (512,s2)x2
    for out_features, first_stride in ((64, 1), (128, 2), (256, 2), (512, 2)):
        for i in range(2):
            stride = first_stride if i == 0 else 1
            bp = {'stride': stride}
            bp['bn1_scale'], bp['bn1_bias'] = _folded_bn(next(keys), start_features)
            bp['conv1_w'] = _conv3_weight(next(keys), start_features, out_features)
            bp['bn2_scale'], bp['bn2_bias'] = _folded_bn(next(keys), out_features)
            bp['conv2_w'] = _conv3_weight(next(keys), out_features, out_features)
            if stride != 1 or start_features != out_features:
                bp['sc_w'] = _conv1x1_weight(next(keys), start_features, out_features)
            blocks.append(bp)
            start_features = out_features
    params['blocks'] = blocks
    fc_w = jax.random.normal(next(keys), (512, _NUM_CLASSES), jnp.float32) / jnp.sqrt(512.0)
    params['fc_w'] = jnp.pad(fc_w, ((0, 0), (0, _FC_LANES - _NUM_CLASSES))).astype(jnp.bfloat16)
    fc_b = 0.01 * jax.random.normal(next(keys), (1, _NUM_CLASSES), jnp.float32)
    params['fc_b'] = jnp.pad(fc_b, ((0, 0), (0, _FC_LANES - _NUM_CLASSES)))
    return params


# ----------------------------------- forward -----------------------------------

def preact_block(x, hw, bp):
    """ResNetV2 pre-activation basic block (expansion = 1)."""
    pre = (bp['bn1_scale'], bp['bn1_bias'])
    post = (bp['bn2_scale'], bp['bn2_bias'])
    if 'sc_w' in bp:                       # downsampling block (stride 2 + 1x1 shortcut)
        assert bp['stride'] == 2
        out1, shortcut, hw2 = preact_down_block_head(
            x, hw, bp['conv1_w'], bp['sc_w'], pre=pre, post=post)
        out = conv3x3_s1(out1, hw2, bp['conv2_w'], residual=shortcut)
        return out, hw2
    out1 = conv3x3_s1(x, hw, bp['conv1_w'], pre=pre, post=post)
    out = conv3x3_s1(out1, hw, bp['conv2_w'], residual=x)       # identity shortcut
    return out, hw


def forward(x_nchw, params):
    """ResNetV2Prop forward (eval). Input NCHW (PyTorch layout); output (N, 10)."""
    x = jnp.transpose(x_nchw, (0, 2, 3, 1)).astype(jnp.float32)    # NCHW -> NHWC
    n, h, w, c = x.shape
    wp = max(_round_up(w, _ALIGN), _ALIGN)
    x = jnp.pad(x, ((0, 0), (0, 0), (0, wp - w), (0, _CONV1_CIN_PAD - c)))
    x = x.reshape(n, h * wp, _CONV1_CIN_PAD)                       # carried layout
    x = conv3x3_s1(x, (h, w), params['conv1_w'])                   # conv1
    hw = (h, w)
    for bp in params['blocks']:                                    # convStack1..4
        x, hw = preact_block(x, hw, bp)
    logits = pool_fc(x, hw, params['fc_w'], params['fc_b'])        # avg-pool + Linear
    return logits[:, :_NUM_CLASSES]


if __name__ == "__main__":
    key = jax.random.PRNGKey(0)
    pkey, xkey = jax.random.split(key)
    params = init_params(pkey)
    x = jax.random.normal(xkey, (2, 3, 16, 16), dtype=jnp.float32)  # NCHW like PyTorch
    logits = forward(x, params)
    logits = jax.block_until_ready(logits)
    assert logits.shape == (2, 10), logits.shape
    assert bool(jnp.all(jnp.isfinite(logits)))
    print("KERNEL_OK")
</pallas_src>

<mosaic_0001>
module attributes {stable_mosaic.version = 11 : i64} {
  func.func @kernel(%arg0: i32, %arg1: memref<1x256x8xf32, #tpu.memory_space<vmem>>, %arg2: memref<3x24x64xbf16, #tpu.memory_space<vmem>>, %arg3: memref<1x256x64xf32, #tpu.memory_space<vmem>>) attributes {dimension_semantics = [#tpu.dimension_semantics<parallel>], iteration_bounds = array<i64: 2>, scalar_prefetch = 0 : i64, scratch_operands = 0 : i64, tpu.core_type = #tpu.core_type<tc>, window_params = [{transform_indices = @transform_0, window_bounds = array<i64: 1, 256, 8>}, {pipeline_mode = #tpu.pipeline_mode<synchronous>, transform_indices = @transform_1, window_bounds = array<i64: 3, 24, 64>}, {transform_indices = @transform_2, window_bounds = array<i64: 1, 256, 64>}]} {
    %c0 = arith.constant 0 : index
    %c0_0 = arith.constant 0 : index
    %c0_1 = arith.constant 0 : index
    %0 = vector.load %arg1[%c0, %c0_0, %c0_1] : memref<1x256x8xf32, #tpu.memory_space<vmem>>, vector<1x256x8xf32>
    %1 = vector.shape_cast %0 : vector<1x256x8xf32> to vector<256x8xf32>
    %2 = arith.truncf %1 : vector<256x8xf32> to vector<256x8xbf16>
    %3 = tpu.iota {dimensions = array<i32: 0>} : vector<256x8xi32>
    %c16_i32 = arith.constant 16 : i32
    %c0_i32 = arith.constant 0 : i32
    %4 = arith.cmpi eq, %c16_i32, %c0_i32 : i32
    %c1_i32 = arith.constant 1 : i32
    %5 = arith.select %4, %c1_i32, %c16_i32 : i32
    %6 = vector.broadcast %5 : i32 to vector<256x8xi32>
    %7 = arith.remsi %3, %6 : vector<256x8xi32>
    %c0_i32_2 = arith.constant 0 : i32
    %8 = vector.broadcast %c0_i32_2 : i32 to vector<256x8xi32>
    %9 = arith.cmpi ne, %7, %8 : vector<256x8xi32>
    %c0_i32_3 = arith.constant 0 : i32
    %10 = vector.broadcast %c0_i32_3 : i32 to vector<256x8xi32>
    %11 = arith.cmpi slt, %7, %10 : vector<256x8xi32>
    %c0_i32_4 = arith.constant 0 : i32
    %12 = arith.cmpi slt, %5, %c0_i32_4 : i32
    %13 = vector.broadcast %12 : i1 to vector<256x8xi1>
    %14 = vector.broadcast %13 : vector<256x8xi1> to vector<256x8xi1>
    %15 = arith.xori %11, %14 : vector<256x8xi1>
    %16 = arith.andi %15, %9 : vector<256x8xi1>
    %17 = vector.broadcast %5 : i32 to vector<256x8xi32>
    %18 = arith.addi %7, %17 : vector<256x8xi32>
    %19 = arith.select %16, %18, %7 : vector<256x8xi1>, vector<256x8xi32>
    %cst = arith.constant 0.000000e+00 : bf16
    %20 = vector.broadcast %cst : bf16 to vector<1x8xbf16>
    %21 = vector.extract_strided_slice %2 {offsets = [0, 0], sizes = [255, 8], strides = [1, 1]} : vector<256x8xbf16> to vector<255x8xbf16>
    %22 = tpu.concatenate %20, %21 in 0 : vector<1x8xbf16>, vector<255x8xbf16> -> vector<256x8xbf16>
    %c1_i32_5 = arith.constant 1 : i32
    %23 = vector.broadcast %c1_i32_5 : i32 to vector<256x8xi32>
    %24 = arith.cmpi sge, %19, %23 : vector<256x8xi32>
    %cst_6 = arith.constant 0.000000e+00 : bf16
    %25 = vector.broadcast %cst_6 : bf16 to vector<256x8xbf16>
    %26 = arith.select %24, %22, %25 : vector<256x8xi1>, vector<256x8xbf16>
    %cst_7 = arith.constant 0.000000e+00 : bf16
    %27 = vector.broadcast %cst_7 : bf16 to vector<1x8xbf16>
    %28 = vector.extract_strided_slice %2 {offsets = [1, 0], sizes = [255, 8], strides = [1, 1]} : vector<256x8xbf16> to vector<255x8xbf16>
    %29 = tpu.concatenate %28, %27 in 0 : vector<255x8xbf16>, vector<1x8xbf16> -> vector<256x8xbf16>
    %c14_i32 = arith.constant 14 : i32
    %30 = vector.broadcast %c14_i32 : i32 to vector<256x8xi32>
    %31 = arith.cmpi sle, %19, %30 : vector<256x8xi32>
    %cst_8 = arith.constant 0.000000e+00 : bf16
    %32 = vector.broadcast %cst_8 : bf16 to vector<256x8xbf16>
    %33 = arith.select %31, %29, %32 : vector<256x8xi1>, vector<256x8xbf16>
    %c0_9 = arith.constant 0 : index
    %c0_10 = arith.constant 0 : index
    %c0_11 = arith.constant 0 : index
    %34 = vector.load %arg2[%c0_9, %c0_10, %c0_11] : memref<3x24x64xbf16, #tpu.memory_space<vmem>>, vector<1x24x64xbf16>
    %35 = vector.shape_cast %34 : vector<1x24x64xbf16> to vector<24x64xbf16>
    %36 = vector.extract_strided_slice %35 {offsets = [0, 0], sizes = [8, 64], strides = [1, 1]} : vector<24x64xbf16> to vector<8x64xbf16>
    %cst_12 = arith.constant dense<0.000000e+00> : vector<256x64xf32>
    %37 = tpu.matmul %26, %36, %cst_12 {dimension_numbers = #tpu.dot_dimension_numbers<[1], [0], [0], [1], [0, 0, 1, 1], [], []>} : vector<256x8xbf16>, vector<8x64xbf16>, vector<256x64xf32> -> vector<256x64xf32>
    %38 = vector.extract_strided_slice %35 {offsets = [8, 0], sizes = [8, 64], strides = [1, 1]} : vector<24x64xbf16> to vector<8x64xbf16>
    %cst_13 = arith.constant dense<0.000000e+00> : vector<256x64xf32>
    %39 = tpu.matmul %2, %38, %cst_13 {dimension_numbers = #tpu.dot_dimension_numbers<[1], [0], [0], [1], [0, 0, 1, 1], [], []>} : vector<256x8xbf16>, vector<8x64xbf16>, vector<256x64xf32> -> vector<256x64xf32>
    %40 = vector.extract_strided_slice %35 {offsets = [16, 0], sizes = [8, 64], strides = [1, 1]} : vector<24x64xbf16> to vector<8x64xbf16>
    %cst_14 = arith.constant dense<0.000000e+00> : vector<256x64xf32>
    %41 = tpu.matmul %33, %40, %cst_14 {dimension_numbers = #tpu.dot_dimension_numbers<[1], [0], [0], [1], [0, 0, 1, 1], [], []>} : vector<256x8xbf16>, vector<8x64xbf16>, vector<256x64xf32> -> vector<256x64xf32>
    %42 = arith.addf %37, %39 : vector<256x64xf32>
    %43 = arith.addf %42, %41 : vector<256x64xf32>
    %c1 = arith.constant 1 : index
    %c0_15 = arith.constant 0 : index
    %c0_16 = arith.constant 0 : index
    %44 = vector.load %arg2[%c1, %c0_15, %c0_16] : memref<3x24x64xbf16, #tpu.memory_space<vmem>>, vector<1x24x64xbf16>
    %45 = vector.shape_cast %44 : vector<1x24x64xbf16> to vector<24x64xbf16>
    %46 = vector.extract_strided_slice %45 {offsets = [0, 0], sizes = [8, 64], strides = [1, 1]} : vector<24x64xbf16> to vector<8x64xbf16>
    %cst_17 = arith.constant dense<0.000000e+00> : vector<256x64xf32>
    %47 = tpu.matmul %26, %46, %cst_17 {dimension_numbers = #tpu.dot_dimension_numbers<[1], [0], [0], [1], [0, 0, 1, 1], [], []>} : vector<256x8xbf16>, vector<8x64xbf16>, vector<256x64xf32> -> vector<256x64xf32>
    %48 = vector.extract_strided_slice %45 {offsets = [8, 0], sizes = [8, 64], strides = [1, 1]} : vector<24x64xbf16> to vector<8x64xbf16>
    %cst_18 = arith.constant dense<0.000000e+00> : vector<256x64xf32>
    %49 = tpu.matmul %2, %48, %cst_18 {dimension_numbers = #tpu.dot_dimension_numbers<[1], [0], [0], [1], [0, 0, 1, 1], [], []>} : vector<256x8xbf16>, vector<8x64xbf16>, vector<256x64xf32> -> vector<256x64xf32>
    %50 = vector.extract_strided_slice %45 {offsets = [16, 0], sizes = [8, 64], strides = [1, 1]} : vector<24x64xbf16> to vector<8x64xbf16>
    %cst_19 = arith.constant dense<0.000000e+00> : vector<256x64xf32>
    %51 = tpu.matmul %33, %50, %cst_19 {dimension_numbers = #tpu.dot_dimension_numbers<[1], [0], [0], [1], [0, 0, 1, 1], [], []>} : vector<256x8xbf16>, vector<8x64xbf16>, vector<256x64xf32> -> vector<256x64xf32>
    %52 = arith.addf %47, %49 : vector<256x64xf32>
    %53 = arith.addf %52, %51 : vector<256x64xf32>
    %c2 = arith.constant 2 : index
    %c0_20 = arith.constant 0 : index
    %c0_21 = arith.constant 0 : index
    %54 = vector.load %arg2[%c2, %c0_20, %c0_21] : memref<3x24x64xbf16, #tpu.memory_space<vmem>>, vector<1x24x64xbf16>
    %55 = vector.shape_cast %54 : vector<1x24x64xbf16> to vector<24x64xbf16>
    %56 = vector.extract_strided_slice %55 {offsets = [0, 0], sizes = [8, 64], strides = [1, 1]} : vector<24x64xbf16> to vector<8x64xbf16>
    %cst_22 = arith.constant dense<0.000000e+00> : vector<256x64xf32>
    %57 = tpu.matmul %26, %56, %cst_22 {dimension_numbers = #tpu.dot_dimension_numbers<[1], [0], [0], [1], [0, 0, 1, 1], [], []>} : vector<256x8xbf16>, vector<8x64xbf16>, vector<256x64xf32> -> vector<256x64xf32>
    %58 = vector.extract_strided_slice %55 {offsets = [8, 0], sizes = [8, 64], strides = [1, 1]} : vector<24x64xbf16> to vector<8x64xbf16>
    %cst_23 = arith.constant dense<0.000000e+00> : vector<256x64xf32>
    %59 = tpu.matmul %2, %58, %cst_23 {dimension_numbers = #tpu.dot_dimension_numbers<[1], [0], [0], [1], [0, 0, 1, 1], [], []>} : vector<256x8xbf16>, vector<8x64xbf16>, vector<256x64xf32> -> vector<256x64xf32>
    %60 = vector.extract_strided_slice %55 {offsets = [16, 0], sizes = [8, 64], strides = [1, 1]} : vector<24x64xbf16> to vector<8x64xbf16>
    %cst_24 = arith.constant dense<0.000000e+00> : vector<256x64xf32>
    %61 = tpu.matmul %33, %60, %cst_24 {dimension_numbers = #tpu.dot_dimension_numbers<[1], [0], [0], [1], [0, 0, 1, 1], [], []>} : vector<256x8xbf16>, vector<8x64xbf16>, vector<256x64xf32> -> vector<256x64xf32>
    %62 = arith.addf %57, %59 : vector<256x64xf32>
    %63 = arith.addf %62, %61 : vector<256x64xf32>
    %cst_25 = arith.constant 0.000000e+00 : f32
    %64 = vector.broadcast %cst_25 : f32 to vector<16x64xf32>
    %65 = vector.extract_strided_slice %43 {offsets = [0, 0], sizes = [240, 64], strides = [1, 1]} : vector<256x64xf32> to vector<240x64xf32>
    %66 = tpu.concatenate %64, %65 in 0 : vector<16x64xf32>, vector<240x64xf32> -> vector<256x64xf32>
    %67 = arith.addf %53, %66 : vector<256x64xf32>
    %68 = vector.extract_strided_slice %63 {offsets = [16, 0], sizes = [240, 64], strides = [1, 1]} : vector<256x64xf32> to vector<240x64xf32>
    %69 = tpu.concatenate %68, %64 in 0 : vector<240x64xf32>, vector<16x64xf32> -> vector<256x64xf32>
    %70 = arith.addf %67, %69 : vector<256x64xf32>
    %c0_26 = arith.constant 0 : index
    %c0_27 = arith.constant 0 : index
    %c0_28 = arith.constant 0 : index
    %71 = vector.load %arg3[%c0_26, %c0_27, %c0_28] : memref<1x256x64xf32, #tpu.memory_space<vmem>>, vector<1x256x64xf32>
    %72 = vector.shape_cast %71 : vector<1x256x64xf32> to vector<256x64xf32>
    %73 = vector.shape_cast %70 : vector<256x64xf32> to vector<1x256x64xf32>
    tpu.vector_store %arg3[%c0_26, %c0_27, %c0_28], %73 {strides = array<i32>} : memref<1x256x64xf32, #tpu.memory_space<vmem>>, vector<1x256x64xf32>,
    return
  }
  func.func @transform_0(%arg0: i32) -> (i32, i32, i32) {
    %c0_i32 = arith.constant 0 : i32
    %c0_i32_0 = arith.constant 0 : i32
    %c0_i32_1 = arith.constant 0 : i32
    return %arg0, %c0_i32, %c0_i32_0 : i32, i32, i32
  }
  func.func @transform_1(%arg0: i32) -> (i32, i32, i32) {
    %c0_i32 = arith.constant 0 : i32
    %c0_i32_0 = arith.constant 0 : i32
    %c0_i32_1 = arith.constant 0 : i32
    %c0_i32_2 = arith.constant 0 : i32
    return %c0_i32, %c0_i32_0, %c0_i32_1 : i32, i32, i32
  }
  func.func @transform_2(%arg0: i32) -> (i32, i32, i32) {
    %c0_i32 = arith.constant 0 : i32
    %c0_i32_0 = arith.constant 0 : i32
    %c0_i32_1 = arith.constant 0 : i32
    return %arg0, %c0_i32, %c0_i32_0 : i32, i32, i32
  }
}

</mosaic_0001>

<llo_original>
// kernel: tpu_custom_call.1
$region0: #{tpu_custom_call.1}
  #allocation0 [shape = 'u32[]', space=smem, size = 0x4, offset = 0x4, fixed_abs, tag = 'smem constant byte address 0x4 - core index']
  #allocation1 [shape = 'u32[144,128]{1,0:T(1,128)}', space=vmem, size = 0x12000, scoped, tag = 'internal scratch']
  %s0 = inlined_call_operand.vmem [shape: f32[2,256,8], index: 0, kind: input, shape index: {}]
  %s1 = inlined_call_operand.vmem [shape: bf16[3,24,64], index: 1, kind: input, shape index: {}]
  %s2 = inlined_call_operand.vmem [shape: f32[2,256,64], index: 2, kind: output, shape index: {}]
  %s3 = sld [smem:[#allocation0]]
  $region41: #{tpu_custom_call.1} parent=0
    _
  %s5 = ssub.s32 1, %s3
  %s6 = scalar_select 0, %s5, %s3
  loop: start=0, step=1, limit=4
  $region2: #{tpu_custom_call.1} parent=0 // loop_pre_header
    _
  $region3: #{tpu_custom_call.1} parent=0 // loop_header
    %s8 = sphi 0, %s12
    %p9 = scmp.ge.s32.totalorder %s8, 4
    %s18 = sphi 0, %s20
    %s21 = sphi 0, %s18
    %s22 = sphi 0, %s21
    %s38 = sphi 0, %s22
    %s42 = sphi 0, %s42
    %s44 = sphi 0, %s42
    %s45 = sphi 0, %s44
    %s59 = sphi 0, %s45
    %s65 = sphi 0, %s67
    %s68 = sphi 0, %s65
    %s69 = sphi 0, %s68
    %s85 = sphi 0, %s69
  $region4: #{tpu_custom_call.1} parent=0 // loop_header_branch
    %11 = sbr.rel (%p9) target = $region8
  $region5: #{tpu_custom_call.1} parent=0 // loop_body
    %s13 = ssub.s32 %s8, 1
    %s14 = ssub.s32 %s8, 2
    %s15 = sadd.s32 %s8, 1
    %s16 = ssub.s32 %s8, %s15
    %p17 = scmp.eq.s32.totalorder %s16, 0
    %s19 = sadd.s32 %s18, 1
    %s20 = scalar_select %p17, %s18, %s19
    %p23 = pneg %p17
    %p24 = scmp.eq.s32.totalorder %s8, 1
    %p25 = por %p23, %p24
    %p26 = scmp.ne.s32.totalorder %s18, %s21
    %p27 = scmp.eq.s32.totalorder %s8, 0
    %p28 = por %p26, %p27
    %p29 = scmp.ne.s32.totalorder %s18, %s21
    %p30 = scmp.eq.s32.totalorder %s13, 1
    %p31 = por %p29, %p30
    %p32 = scmp.ne.s32.totalorder %s21, %s22
    %p33 = scmp.eq.s32.totalorder %s13, 0
    %p34 = por %p32, %p33
    %p35 = scmp.ne.s32.totalorder %s21, %s22
    %p36 = scmp.eq.s32.totalorder %s14, 1
    %p37 = por %p35, %p36
    %p39 = scmp.ne.s32.totalorder %s22, %s38
    %p40 = scmp.eq.s32.totalorder %s14, 0
    %p41 = por %p39, %p40
    %s43 = sadd.s32 %s42, 1
    %p46 = scmp.eq.s32.totalorder %s8, 1
    %p47 = scmp.ne.s32.totalorder %s42, %s44
    %p48 = scmp.eq.s32.totalorder %s8, 0
    %p49 = por %p47, %p48
    %p50 = scmp.ne.s32.totalorder %s42, %s44
    %p51 = scmp.eq.s32.totalorder %s13, 1
    %p52 = por %p50, %p51
    %p53 = scmp.ne.s32.totalorder %s44, %s45
    %p54 = scmp.eq.s32.totalorder %s13, 0
    %p55 = por %p53, %p54
    %p56 = scmp.ne.s32.totalorder %s44, %s45
    %p57 = scmp.eq.s32.totalorder %s14, 1
    %p58 = por %p56, %p57
    %p60 = scmp.ne.s32.totalorder %s45, %s59
    %p61 = scmp.eq.s32.totalorder %s14, 0
    %p62 = por %p60, %p61
    %s63 = ssub.s32 %s8, %s15
    %p64 = scmp.eq.s32.totalorder %s63, 0
    %s66 = sadd.s32 %s65, 1
    %s67 = scalar_select %p64, %s65, %s66
    %p70 = pneg %p64
    %p71 = scmp.eq.s32.totalorder %s8, 1
    %p72 = por %p70, %p71
    %p73 = scmp.ne.s32.totalorder %s65, %s68
    %p74 = scmp.eq.s32.totalorder %s8, 0
    %p75 = por %p73, %p74
    %p76 = scmp.ne.s32.totalorder %s65, %s68
    %p77 = scmp.eq.s32.totalorder %s13, 1
    %p78 = por %p76, %p77
    %p79 = scmp.ne.s32.totalorder %s68, %s69
    %p80 = scmp.eq.s32.totalorder %s13, 0
    %p81 = por %p79, %p80
    %p82 = scmp.ne.s32.totalorder %s68, %s69
    %p83 = scmp.eq.s32.totalorder %s14, 1
    %p84 = por %p82, %p83
    %p86 = scmp.ne.s32.totalorder %s69, %s85
    %p87 = scmp.eq.s32.totalorder %s14, 0
    %p88 = por %p86, %p87
    %p89 = scmp.le.s32.totalorder 1, %s8
    %p90 = scmp.lt.s32.totalorder %s8, 3
    %p91 = pnand %p89, %p90
    %p92 = pneg %p91
    // Predicated region
    $region9: #{tpu_custom_call.1} parent=5 // pred_check
      _
    $region10: #{tpu_custom_call.1} parent=5 // pred_check_branch
      %94 = sbr.rel (%p91) target = $region12
    $region11: #{tpu_custom_call.1} parent=5 // pred_region
      %s95 = ssub.s32 %s8, 1
      // Predicated region
      $region13: #{tpu_custom_call.1} parent=11 // pred_check
        %p96 = pneg %p55
      $region14: #{tpu_custom_call.1} parent=11 // pred_check_branch
        %98 = sbr.rel (%p96) target = $region16
      $region15: #{tpu_custom_call.1} parent=11 // pred_region
        _
      $region16: #{tpu_custom_call.1} parent=11 // pred_fallthru
        _
    $region12: #{tpu_custom_call.1} parent=5 // pred_fallthru
      _
    %p99 = scmp.lt.s32.totalorder %s8, 2
    // Predicated region
    $region17: #{tpu_custom_call.1} parent=5 // pred_check
      %p100 = pneg %p99
    $region18: #{tpu_custom_call.1} parent=5 // pred_check_branch
      %102 = sbr.rel (%p100) target = $region20
    $region19: #{tpu_custom_call.1} parent=5 // pred_region
      // Predicated region
      $region21: #{tpu_custom_call.1} parent=19 // pred_check
        %p103 = pneg %p28
      $region22: #{tpu_custom_call.1} parent=19 // pred_check_branch
        %105 = sbr.rel (%p103) target = $region24
      $region23: #{tpu_custom_call.1} parent=19 // pred_region
        %p106 = scmp.lt.s32.totalorder %s8, 1
        %s107 = scalar_select %p106, %s8, 1
        %s108 = smul.addr %s107, 32
        %s109 = smul.addr %s108, 8
        %s110 = scalar_lea.vmem %s0, %s109
      $region24: #{tpu_custom_call.1} parent=19 // pred_fallthru
        _
    $region20: #{tpu_custom_call.1} parent=5 // pred_fallthru
      _
    %p111 = scmp.le.s32.totalorder 1, %s8
    %p112 = scmp.lt.s32.totalorder %s8, 3
    %p113 = pnand %p111, %p112
    %p114 = pneg %p113
    // Predicated region
    $region25: #{tpu_custom_call.1} parent=5 // pred_check
      _
    $region26: #{tpu_custom_call.1} parent=5 // pred_check_branch
      %116 = sbr.rel (%p113) target = $region28
    $region27: #{tpu_custom_call.1} parent=5 // pred_region
      %s117 = ssub.s32 %s8, 1
      %p118 = scmp.lt.s32.totalorder %s13, 1
      %s119 = scalar_select %p118, %s13, 1
      %s120 = smul.addr %s119, 32
      %s121 = smul.addr %s120, 8
      %s122 = scalar_lea.vmem %s0, %s121
      %p123 = pneg %p34
      %p124 = pneg %p31
      %p125 = pneg %p55
      %p126 = pneg %p52
      %p127 = pneg %p81
      %p128 = pneg %p78
      %p129 = scmp.lt.s32.totalorder %s13, 1
      %s130 = scalar_select %p129, %s13, 1
      %s131 = smul.addr %s130, 32
      %s132 = smul.addr %s131, 8
      %s133 = scalar_lea.vmem %s2, %s132
      %p134 = scmp.lt.s32.totalorder %s13, 1
      %s135 = scalar_select %p134, %s13, 1
      %s136 = smul.addr %s135, 32
      %s137 = smul.addr %s136, 8
      %s138 = scalar_lea.vmem %s0, %s137
      %p139 = scmp.lt.s32.totalorder %s13, 1
      %s140 = scalar_select %p139, %s13, 1
      %s141 = smul.addr %s140, 32
      %s142 = smul.addr %s141, 8
      %s143 = scalar_lea.vmem %s2, %s142
      %v147 = vld [vmem:[%s138] sm:$0xff]
      %v148 = vld [vmem:[%s138 + $0x8] sm:$0xff]
      %v149 = vld [vmem:[%s138 + $0x10] sm:$0xff]
      %v150 = vld [vmem:[%s138 + $0x18] sm:$0xff]
      %v151 = vld [vmem:[%s138 + $0x20] sm:$0xff]
      %v152 = vld [vmem:[%s138 + $0x28] sm:$0xff]
      %v153 = vld [vmem:[%s138 + $0x30] sm:$0xff]
      %v154 = vld [vmem:[%s138 + $0x38] sm:$0xff]
      %v155 = vld [vmem:[%s138 + $0x40] sm:$0xff]
      %v156 = vld [vmem:[%s138 + $0x48] sm:$0xff]
      %v157 = vld [vmem:[%s138 + $0x50] sm:$0xff]
      %v158 = vld [vmem:[%s138 + $0x58] sm:$0xff]
      %v159 = vld [vmem:[%s138 + $0x60] sm:$0xff]
      %v160 = vld [vmem:[%s138 + $0x68] sm:$0xff]
      %v161 = vld [vmem:[%s138 + $0x70] sm:$0xff]
      %v162 = vld [vmem:[%s138 + $0x78] sm:$0xff]
      %v163 = vld [vmem:[%s138 + $0x80] sm:$0xff]
      %v164 = vld [vmem:[%s138 + $0x88] sm:$0xff]
      %v165 = vld [vmem:[%s138 + $0x90] sm:$0xff]
      %v166 = vld [vmem:[%s138 + $0x98] sm:$0xff]
      %v167 = vld [vmem:[%s138 + $0xa0] sm:$0xff]
      %v168 = vld [vmem:[%s138 + $0xa8] sm:$0xff]
      %v169 = vld [vmem:[%s138 + $0xb0] sm:$0xff]
      %v170 = vld [vmem:[%s138 + $0xb8] sm:$0xff]
      %v171 = vld [vmem:[%s138 + $0xc0] sm:$0xff]
      %v172 = vld [vmem:[%s138 + $0xc8] sm:$0xff]
      %v173 = vld [vmem:[%s138 + $0xd0] sm:$0xff]
      %v174 = vld [vmem:[%s138 + $0xd8] sm:$0xff]
      %v175 = vld [vmem:[%s138 + $0xe0] sm:$0xff]
      %v176 = vld [vmem:[%s138 + $0xe8] sm:$0xff]
      %v177 = vld [vmem:[%s138 + $0xf0] sm:$0xff]
      %v178 = vld [vmem:[%s138 + $0xf8] sm:$0xff]
      %v179 = vpack.c.bf16 %v148, %v147
      %v180 = vpack.c.bf16 %v150, %v149
      %v181 = vpack.c.bf16 %v152, %v151
      %v182 = vpack.c.bf16 %v154, %v153
      %v183 = vpack.c.bf16 %v156, %v155
      %v184 = vpack.c.bf16 %v158, %v157
      %v185 = vpack.c.bf16 %v160, %v159
      %v186 = vpack.c.bf16 %v162, %v161
      %v187 = vpack.c.bf16 %v164, %v163
      %v188 = vpack.c.bf16 %v166, %v165
      %v189 = vpack.c.bf16 %v168, %v167
      %v190 = vpack.c.bf16 %v170, %v169
      %v191 = vpack.c.bf16 %v172, %v171
      %v192 = vpack.c.bf16 %v174, %v173
      %v193 = vpack.c.bf16 %v176, %v175
      %v194 = vpack.c.bf16 %v178, %v177
      %v195 = vlaneseq
      %v196 = vshrl.u32 %v195, 7
      %v197 = vadd.s32 %v196, 8
      %v198 = vadd.s32 %v196, 16
      %v199 = vadd.s32 %v196, 24
      %v200 = vadd.s32 %v196, 32
      %v201 = vadd.s32 %v196, 40
      %v202 = vadd.s32 %v196, 48
      %v203 = vadd.s32 %v196, 56
      %v204 = vadd.s32 %v196, 64
      %v205 = vadd.s32 %v196, 72
      %v206 = vadd.s32 %v196, 80
      %v207 = vadd.s32 %v196, 88
      %v208 = vadd.s32 %v196, 96
      %v209 = vadd.s32 %v196, 104
      %v210 = vadd.s32 %v196, 112
      %v211 = vadd.s32 %v196, 120
      %v212 = vadd.s32 %v196, 128
      %v213 = vadd.s32 %v196, 136
      %v214 = vadd.s32 %v196, 144
      %v215 = vadd.s32 %v196, 152
      %v216 = vadd.s32 %v196, 160
      %v217 = vadd.s32 %v196, 168
      %v218 = vadd.s32 %v196, 176
      %v219 = vadd.s32 %v196, 184
      %v220 = vadd.s32 %v196, 192
      %v221 = vadd.s32 %v196, 200
      %v222 = vadd.s32 %v196, 208
      %v223 = vadd.s32 %v196, 216
      %v224 = vadd.s32 %v196, 224
      %v225 = vadd.s32 %v196, 232
      %v226 = vadd.s32 %v196, 240
      %v227 = vadd.s32 %v196, 248
      %vm228 = vcmp.lt.s32.totalorder %v196, 0
      %v229 = vsub.s32 0, %v196
      %v230 = vsel %vm228, %v229, %v196
      %v231 = vshrl.u32 %v230, 4
      %v232 = vand.u32 %v230, 15
      %v233 = vsub.s32 0, %v232
      %v234 = vsel %vm228, %v233, %v232
      %vm235 = vcmp.lt.s32.totalorder %v197, 0
      %v236 = vsub.s32 0, %v197
      %v237 = vsel %vm235, %v236, %v197
      %v238 = vshrl.u32 %v237, 4
      %v239 = vand.u32 %v237, 15
      %v240 = vsub.s32 0, %v239
      %v241 = vsel %vm235, %v240, %v239
      %vm242 = vcmp.lt.s32.totalorder %v198, 0
      %v243 = vsub.s32 0, %v198
      %v244 = vsel %vm242, %v243, %v198
      %v245 = vshrl.u32 %v244, 4
      %v246 = vand.u32 %v244, 15
      %v247 = vsub.s32 0, %v246
      %v248 = vsel %vm242, %v247, %v246
      %vm249 = vcmp.lt.s32.totalorder %v199, 0
      %v250 = vsub.s32 0, %v199
      %v251 = vsel %vm249, %v250, %v199
      %v252 = vshrl.u32 %v251, 4
      %v253 = vand.u32 %v251, 15
      %v254 = vsub.s32 0, %v253
      %v255 = vsel %vm249, %v254, %v253
      %vm256 = vcmp.lt.s32.totalorder %v200, 0
      %v257 = vsub.s32 0, %v200
      %v258 = vsel %vm256, %v257, %v200
      %v259 = vshrl.u32 %v258, 4
      %v260 = vand.u32 %v258, 15
      %v261 = vsub.s32 0, %v260
      %v262 = vsel %vm256, %v261, %v260
      %vm263 = vcmp.lt.s32.totalorder %v201, 0
      %v264 = vsub.s32 0, %v201
      %v265 = vsel %vm263, %v264, %v201
      %v266 = vshrl.u32 %v265, 4
      %v267 = vand.u32 %v265, 15
      %v268 = vsub.s32 0, %v267
      %v269 = vsel %vm263, %v268, %v267
      %vm270 = vcmp.lt.s32.totalorder %v202, 0
      %v271 = vsub.s32 0, %v202
      %v272 = vsel %vm270, %v271, %v202
      %v273 = vshrl.u32 %v272, 4
      %v274 = vand.u32 %v272, 15
      %v275 = vsub.s32 0, %v274
      %v276 = vsel %vm270, %v275, %v274
      %vm277 = vcmp.lt.s32.totalorder %v203, 0
      %v278 = vsub.s32 0, %v203
      %v279 = vsel %vm277, %v278, %v203
      %v280 = vshrl.u32 %v279, 4
      %v281 = vand.u32 %v279, 15
      %v282 = vsub.s32 0, %v281
      %v283 = vsel %vm277, %v282, %v281
      %vm284 = vcmp.lt.s32.totalorder %v204, 0
      %v285 = vsub.s32 0, %v204
      %v286 = vsel %vm284, %v285, %v204
      %v287 = vshrl.u32 %v286, 4
      %v288 = vand.u32 %v286, 15
      %v289 = vsub.s32 0, %v288
      %v290 = vsel %vm284, %v289, %v288
      %vm291 = vcmp.lt.s32.totalorder %v205, 0
      %v292 = vsub.s32 0, %v205
      %v293 = vsel %vm291, %v292, %v205
      %v294 = vshrl.u32 %v293, 4
      %v295 = vand.u32 %v293, 15
      %v296 = vsub.s32 0, %v295
      %v297 = vsel %vm291, %v296, %v295
      %vm298 = vcmp.lt.s32.totalorder %v206, 0
      %v299 = vsub.s32 0, %v206
      %v300 = vsel %vm298, %v299, %v206
      %v301 = vshrl.u32 %v300, 4
      %v302 = vand.u32 %v300, 15
      %v303 = vsub.s32 0, %v302
      %v304 = vsel %vm298, %v303, %v302
      %vm305 = vcmp.lt.s32.totalorder %v207, 0
      %v306 = vsub.s32 0, %v207
      %v307 = vsel %vm305, %v306, %v207
      %v308 = vshrl.u32 %v307, 4
      %v309 = vand.u32 %v307, 15
      %v310 = vsub.s32 0, %v309
      %v311 = vsel %vm305, %v310, %v309
      %vm312 = vcmp.lt.s32.totalorder %v208, 0
      %v313 = vsub.s32 0, %v208
      %v314 = vsel %vm312, %v313, %v208
      %v315 = vshrl.u32 %v314, 4
      %v316 = vand.u32 %v314, 15
      %v317 = vsub.s32 0, %v316
      %v318 = vsel %vm312, %v317, %v316
      %vm319 = vcmp.lt.s32.totalorder %v209, 0
      %v320 = vsub.s32 0, %v209
      %v321 = vsel %vm319, %v320, %v209
      %v322 = vshrl.u32 %v321, 4
      %v323 = vand.u32 %v321, 15
      %v324 = vsub.s32 0, %v323
      %v325 = vsel %vm319, %v324, %v323
      %vm326 = vcmp.lt.s32.totalorder %v210, 0
      %v327 = vsub.s32 0, %v210
      %v328 = vsel %vm326, %v327, %v210
      %v329 = vshrl.u32 %v328, 4
      %v330 = vand.u32 %v328, 15
      %v331 = vsub.s32 0, %v330
      %v332 = vsel %vm326, %v331, %v330
      %vm333 = vcmp.lt.s32.totalorder %v211, 0
      %v334 = vsub.s32 0, %v211
      %v335 = vsel %vm333, %v334, %v211
      %v336 = vshrl.u32 %v335, 4
      %v337 = vand.u32 %v335, 15
      %v338 = vsub.s32 0, %v337
      %v339 = vsel %vm333, %v338, %v337
      %vm340 = vcmp.lt.s32.totalorder %v212, 0
      %v341 = vsub.s32 0, %v212
      %v342 = vsel %vm340, %v341, %v212
      %v343 = vshrl.u32 %v342, 4
      %v344 = vand.u32 %v342, 15
      %v345 = vsub.s32 0, %v344
      %v346 = vsel %vm340, %v345, %v344
      %vm347 = vcmp.lt.s32.totalorder %v213, 0
      %v348 = vsub.s32 0, %v213
      %v349 = vsel %vm347, %v348, %v213
      %v350 = vshrl.u32 %v349, 4
      %v351 = vand.u32 %v349, 15
      %v352 = vsub.s32 0, %v351
      %v353 = vsel %vm347, %v352, %v351
      %vm354 = vcmp.lt.s32.totalorder %v214, 0
      %v355 = vsub.s32 0, %v214
      %v356 = vsel %vm354, %v355, %v214
      %v357 = vshrl.u32 %v356, 4
      %v358 = vand.u32 %v356, 15
      %v359 = vsub.s32 0, %v358
      %v360 = vsel %vm354, %v359, %v358
      %vm361 = vcmp.lt.s32.totalorder %v215, 0
      %v362 = vsub.s32 0, %v215
      %v363 = vsel %vm361, %v362, %v215
      %v364 = vshrl.u32 %v363, 4
      %v365 = vand.u32 %v363, 15
      %v366 = vsub.s32 0, %v365
      %v367 = vsel %vm361, %v366, %v365
      %vm368 = vcmp.lt.s32.totalorder %v216, 0
      %v369 = vsub.s32 0, %v216
      %v370 = vsel %vm368, %v369, %v216
      %v371 = vshrl.u32 %v370, 4
      %v372 = vand.u32 %v370, 15
      %v373 = vsub.s32 0, %v372
      %v374 = vsel %vm368, %v373, %v372
      %vm375 = vcmp.lt.s32.totalorder %v217, 0
      %v376 = vsub.s32 0, %v217
      %v377 = vsel %vm375, %v376, %v217
      %v378 = vshrl.u32 %v377, 4
      %v379 = vand.u32 %v377, 15
      %v380 = vsub.s32 0, %v379
      %v381 = vsel %vm375, %v380, %v379
      %vm382 = vcmp.lt.s32.totalorder %v218, 0
      %v383 = vsub.s32 0, %v218
      %v384 = vsel %vm382, %v383, %v218
      %v385 = vshrl.u32 %v384, 4
      %v386 = vand.u32 %v384, 15
      %v387 = vsub.s32 0, %v386
      %v388 = vsel %vm382, %v387, %v386
      %vm389 = vcmp.lt.s32.totalorder %v219, 0
      %v390 = vsub.s32 0, %v219
      %v391 = vsel %vm389, %v390, %v219
      %v392 = vshrl.u32 %v391, 4
      %v393 = vand.u32 %v391, 15
      %v394 = vsub.s32 0, %v393
      %v395 = vsel %vm389, %v394, %v393
      %vm396 = vcmp.lt.s32.totalorder %v220, 0
      %v397 = vsub.s32 0, %v220
      %v398 = vsel %vm396, %v397, %v220
      %v399 = vshrl.u32 %v398, 4
      %v400 = vand.u32 %v398, 15
      %v401 = vsub.s32 0, %v400
      %v402 = vsel %vm396, %v401, %v400
      %vm403 = vcmp.lt.s32.totalorder %v221, 0
      %v404 = vsub.s32 0, %v221
      %v405 = vsel %vm403, %v404, %v221
      %v406 = vshrl.u32 %v405, 4
      %v407 = vand.u32 %v405, 15
      %v408 = vsub.s32 0, %v407
      %v409 = vsel %vm403, %v408, %v407
      %vm410 = vcmp.lt.s32.totalorder %v222, 0
      %v411 = vsub.s32 0, %v222
      %v412 = vsel %vm410, %v411, %v222
      %v413 = vshrl.u32 %v412, 4
      %v414 = vand.u32 %v412, 15
      %v415 = vsub.s32 0, %v414
      %v416 = vsel %vm410, %v415, %v414
      %vm417 = vcmp.lt.s32.totalorder %v223, 0
      %v418 = vsub.s32 0, %v223
      %v419 = vsel %vm417, %v418, %v223
      %v420 = vshrl.u32 %v419, 4
      %v421 = vand.u32 %v419, 15
      %v422 = vsub.s32 0, %v421
      %v423 = vsel %vm417, %v422, %v421
      %vm424 = vcmp.lt.s32.totalorder %v224, 0
      %v425 = vsub.s32 0, %v224
      %v426 = vsel %vm424, %v425, %v224
      %v427 = vshrl.u32 %v426, 4
      %v428 = vand.u32 %v426, 15
      %v429 = vsub.s32 0, %v428
      %v430 = vsel %vm424, %v429, %v428
      %vm431 = vcmp.lt.s32.totalorder %v225, 0
      %v432 = vsub.s32 0, %v225
      %v433 = vsel %vm431, %v432, %v225
      %v434 = vshrl.u32 %v433, 4
      %v435 = vand.u32 %v433, 15
      %v436 = vsub.s32 0, %v435
      %v437 = vsel %vm431, %v436, %v435
      %vm438 = vcmp.lt.s32.totalorder %v226, 0
      %v439 = vsub.s32 0, %v226
      %v440 = vsel %vm438, %v439, %v226
      %v441 = vshrl.u32 %v440, 4
      %v442 = vand.u32 %v440, 15
      %v443 = vsub.s32 0, %v442
      %v444 = vsel %vm438, %v443, %v442
      %vm445 = vcmp.lt.s32.totalorder %v227, 0
      %v446 = vsub.s32 0, %v227
      %v447 = vsel %vm445, %v446, %v227
      %v448 = vshrl.u32 %v447, 4
      %v449 = vand.u32 %v447, 15
      %v450 = vsub.s32 0, %v449
      %v451 = vsel %vm445, %v450, %v449
      %vm452 = vcmp.ne.s32.totalorder %v234, 0
      %vm453 = vcmp.ne.s32.totalorder %v241, 0
      %vm454 = vcmp.ne.s32.totalorder %v248, 0
      %vm455 = vcmp.ne.s32.totalorder %v255, 0
      %vm456 = vcmp.ne.s32.totalorder %v262, 0
      %vm457 = vcmp.ne.s32.totalorder %v269, 0
      %vm458 = vcmp.ne.s32.totalorder %v276, 0
      %vm459 = vcmp.ne.s32.totalorder %v283, 0
      %vm460 = vcmp.ne.s32.totalorder %v290, 0
      %vm461 = vcmp.ne.s32.totalorder %v297, 0
      %vm462 = vcmp.ne.s32.totalorder %v304, 0
      %vm463 = vcmp.ne.s32.totalorder %v311, 0
      %vm464 = vcmp.ne.s32.totalorder %v318, 0
      %vm465 = vcmp.ne.s32.totalorder %v325, 0
      %vm466 = vcmp.ne.s32.totalorder %v332, 0
      %vm467 = vcmp.ne.s32.totalorder %v339, 0
      %vm468 = vcmp.ne.s32.totalorder %v346, 0
      %vm469 = vcmp.ne.s32.totalorder %v353, 0
      %vm470 = vcmp.ne.s32.totalorder %v360, 0
      %vm471 = vcmp.ne.s32.totalorder %v367, 0
      %vm472 = vcmp.ne.s32.totalorder %v374, 0
      %vm473 = vcmp.ne.s32.totalorder %v381, 0
      %vm474 = vcmp.ne.s32.totalorder %v388, 0
      %vm475 = vcmp.ne.s32.totalorder %v395, 0
      %vm476 = vcmp.ne.s32.totalorder %v402, 0
      %vm477 = vcmp.ne.s32.totalorder %v409, 0
      %vm478 = vcmp.ne.s32.totalorder %v416, 0
      %vm479 = vcmp.ne.s32.totalorder %v423, 0
      %vm480 = vcmp.ne.s32.totalorder %v430, 0
      %vm481 = vcmp.ne.s32.totalorder %v437, 0
      %vm482 = vcmp.ne.s32.totalorder %v444, 0
      %vm483 = vcmp.ne.s32.totalorder %v451, 0
      %vm484 = vcmp.lt.s32.totalorder %v234, 0
      %vm485 = vcmp.lt.s32.totalorder %v241, 0
      %vm486 = vcmp.lt.s32.totalorder %v248, 0
      %vm487 = vcmp.lt.s32.totalorder %v255, 0
      %vm488 = vcmp.lt.s32.totalorder %v262, 0
      %vm489 = vcmp.lt.s32.totalorder %v269, 0
      %vm490 = vcmp.lt.s32.totalorder %v276, 0
      %vm491 = vcmp.lt.s32.totalorder %v283, 0
      %vm492 = vcmp.lt.s32.totalorder %v290, 0
      %vm493 = vcmp.lt.s32.totalorder %v297, 0
      %vm494 = vcmp.lt.s32.totalorder %v304, 0
      %vm495 = vcmp.lt.s32.totalorder %v311, 0
      %vm496 = vcmp.lt.s32.totalorder %v318, 0
      %vm497 = vcmp.lt.s32.totalorder %v325, 0
      %vm498 = vcmp.lt.s32.totalorder %v332, 0
      %vm499 = vcmp.lt.s32.totalorder %v339, 0
      %vm500 = vcmp.lt.s32.totalorder %v346, 0
      %vm501 = vcmp.lt.s32.totalorder %v353, 0
      %vm502 = vcmp.lt.s32.totalorder %v360, 0
      %vm503 = vcmp.lt.s32.totalorder %v367, 0
      %vm504 = vcmp.lt.s32.totalorder %v374, 0
      %vm505 = vcmp.lt.s32.totalorder %v381, 0
      %vm506 = vcmp.lt.s32.totalorder %v388, 0
      %vm507 = vcmp.lt.s32.totalorder %v395, 0
      %vm508 = vcmp.lt.s32.totalorder %v402, 0
      %vm509 = vcmp.lt.s32.totalorder %v409, 0
      %vm510 = vcmp.lt.s32.totalorder %v416, 0
      %vm511 = vcmp.lt.s32.totalorder %v423, 0
      %vm512 = vcmp.lt.s32.totalorder %v430, 0
      %vm513 = vcmp.lt.s32.totalorder %v437, 0
      %vm514 = vcmp.lt.s32.totalorder %v444, 0
      %vm515 = vcmp.lt.s32.totalorder %v451, 0
      %vm516 = vmand %vm484, %vm452
      %vm517 = vmand %vm485, %vm453
      %vm518 = vmand %vm486, %vm454
      %vm519 = vmand %vm487, %vm455
      %vm520 = vmand %vm488, %vm456
      %vm521 = vmand %vm489, %vm457
      %vm522 = vmand %vm490, %vm458
      %vm523 = vmand %vm491, %vm459
      %vm524 = vmand %vm492, %vm460
      %vm525 = vmand %vm493, %vm461
      %vm526 = vmand %vm494, %vm462
      %vm527 = vmand %vm495, %vm463
      %vm528 = vmand %vm496, %vm464
      %vm529 = vmand %vm497, %vm465
      %vm530 = vmand %vm498, %vm466
      %vm531 = vmand %vm499, %vm467
      %vm532 = vmand %vm500, %vm468
      %vm533 = vmand %vm501, %vm469
      %vm534 = vmand %vm502, %vm470
      %vm535 = vmand %vm503, %vm471
      %vm536 = vmand %vm504, %vm472
      %vm537 = vmand %vm505, %vm473
      %vm538 = vmand %vm506, %vm474
      %vm539 = vmand %vm507, %vm475
      %vm540 = vmand %vm508, %vm476
      %vm541 = vmand %vm509, %vm477
      %vm542 = vmand %vm510, %vm478
      %vm543 = vmand %vm511, %vm479
      %vm544 = vmand %vm512, %vm480
      %vm545 = vmand %vm513, %vm481
      %vm546 = vmand %vm514, %vm482
      %vm547 = vmand %vm515, %vm483
      %v548 = vadd.s32 %v234, 16
      %v549 = vadd.s32 %v241, 16
      %v550 = vadd.s32 %v248, 16
      %v551 = vadd.s32 %v255, 16
      %v552 = vadd.s32 %v262, 16
      %v553 = vadd.s32 %v269, 16
      %v554 = vadd.s32 %v276, 16
      %v555 = vadd.s32 %v283, 16
      %v556 = vadd.s32 %v290, 16
      %v557 = vadd.s32 %v297, 16
      %v558 = vadd.s32 %v304, 16
      %v559 = vadd.s32 %v311, 16
      %v560 = vadd.s32 %v318, 16
      %v561 = vadd.s32 %v325, 16
      %v562 = vadd.s32 %v332, 16
      %v563 = vadd.s32 %v339, 16
      %v564 = vadd.s32 %v346, 16
      %v565 = vadd.s32 %v353, 16
      %v566 = vadd.s32 %v360, 16
      %v567 = vadd.s32 %v367, 16
      %v568 = vadd.s32 %v374, 16
      %v569 = vadd.s32 %v381, 16
      %v570 = vadd.s32 %v388, 16
      %v571 = vadd.s32 %v395, 16
      %v572 = vadd.s32 %v402, 16
      %v573 = vadd.s32 %v409, 16
      %v574 = vadd.s32 %v416, 16
      %v575 = vadd.s32 %v423, 16
      %v576 = vadd.s32 %v430, 16
      %v577 = vadd.s32 %v437, 16
      %v578 = vadd.s32 %v444, 16
      %v579 = vadd.s32 %v451, 16
      %v580 = vsel %vm516, %v548, %v234
      %v581 = vsel %vm517, %v549, %v241
      %v582 = vsel %vm518, %v550, %v248
      %v583 = vsel %vm519, %v551, %v255
      %v584 = vsel %vm520, %v552, %v262
      %v585 = vsel %vm521, %v553, %v269
      %v586 = vsel %vm522, %v554, %v276
      %v587 = vsel %vm523, %v555, %v283
      %v588 = vsel %vm524, %v556, %v290
      %v589 = vsel %vm525, %v557, %v297
      %v590 = vsel %vm526, %v558, %v304
      %v591 = vsel %vm527, %v559, %v311
      %v592 = vsel %vm528, %v560, %v318
      %v593 = vsel %vm529, %v561, %v325
      %v594 = vsel %vm530, %v562, %v332
      %v595 = vsel %vm531, %v563, %v339
      %v596 = vsel %vm532, %v564, %v346
      %v597 = vsel %vm533, %v565, %v353
      %v598 = vsel %vm534, %v566, %v360
      %v599 = vsel %vm535, %v567, %v367
      %v600 = vsel %vm536, %v568, %v374
      %v601 = vsel %vm537, %v569, %v381
      %v602 = vsel %vm538, %v570, %v388
      %v603 = vsel %vm539, %v571, %v395
      %v604 = vsel %vm540, %v572, %v402
      %v605 = vsel %vm541, %v573, %v409
      %v606 = vsel %vm542, %v574, %v416
      %v607 = vsel %vm543, %v575, %v423
      %v608 = vsel %vm544, %v576, %v430
      %v609 = vsel %vm545, %v577, %v437
      %v610 = vsel %vm546, %v578, %v444
      %v611 = vsel %vm547, %v579, %v451
      %vm612 = vsmask.f32 256
      %v614 = vshrl.u32 %v179, 16
      %v616 = vrot.slane %v614, 7
      %v617 = vshll.u32 %v179, 16
      %v619 = vor.u32 %v616, %v617
      %v621 = vshrl.u32 %v180, 16
      %v623 = vrot.slane %v621, 7
      %v624 = vshll.u32 %v180, 16
      %v626 = vor.u32 %v623, %v624
      %v627 = vsel %vm612, %v616, %v626
      %v629 = vshrl.u32 %v181, 16
      %v631 = vrot.slane %v629, 7
      %v632 = vshll.u32 %v181, 16
      %v634 = vor.u32 %v631, %v632
      %v635 = vsel %vm612, %v623, %v634
      %v637 = vshrl.u32 %v182, 16
      %v639 = vrot.slane %v637, 7
      %v640 = vshll.u32 %v182, 16
      %v642 = vor.u32 %v639, %v640
      %v643 = vsel %vm612, %v631, %v642
      %v645 = vshrl.u32 %v183, 16
      %v647 = vrot.slane %v645, 7
      %v648 = vshll.u32 %v183, 16
      %v650 = vor.u32 %v647, %v648
      %v651 = vsel %vm612, %v639, %v650
      %v653 = vshrl.u32 %v184, 16
      %v655 = vrot.slane %v653, 7
      %v656 = vshll.u32 %v184, 16
      %v658 = vor.u32 %v655, %v656
      %v659 = vsel %vm612, %v647, %v658
      %v661 = vshrl.u32 %v185, 16
      %v663 = vrot.slane %v661, 7
      %v664 = vshll.u32 %v185, 16
      %v666 = vor.u32 %v663, %v664
      %v667 = vsel %vm612, %v655, %v666
      %v669 = vshrl.u32 %v186, 16
      %v671 = vrot.slane %v669, 7
      %v672 = vshll.u32 %v186, 16
      %v674 = vor.u32 %v671, %v672
      %v675 = vsel %vm612, %v663, %v674
      %v677 = vshrl.u32 %v187, 16
      %v679 = vrot.slane %v677, 7
      %v680 = vshll.u32 %v187, 16
      %v682 = vor.u32 %v679, %v680
      %v683 = vsel %vm612, %v671, %v682
      %v685 = vshrl.u32 %v188, 16
      %v687 = vrot.slane %v685, 7
      %v688 = vshll.u32 %v188, 16
      %v690 = vor.u32 %v687, %v688
      %v691 = vsel %vm612, %v679, %v690
      %v693 = vshrl.u32 %v189, 16
      %v695 = vrot.slane %v693, 7
      %v696 = vshll.u32 %v189, 16
      %v698 = vor.u32 %v695, %v696
      %v699 = vsel %vm612, %v687, %v698
      %v701 = vshrl.u32 %v190, 16
      %v703 = vrot.slane %v701, 7
      %v704 = vshll.u32 %v190, 16
      %v706 = vor.u32 %v703, %v704
      %v707 = vsel %vm612, %v695, %v706
      %v709 = vshrl.u32 %v191, 16
      %v711 = vrot.slane %v709, 7
      %v712 = vshll.u32 %v191, 16
      %v714 = vor.u32 %v711, %v712
      %v715 = vsel %vm612, %v703, %v714
      %v717 = vshrl.u32 %v192, 16
      %v719 = vrot.slane %v717, 7
      %v720 = vshll.u32 %v192, 16
      %v722 = vor.u32 %v719, %v720
      %v723 = vsel %vm612, %v711, %v722
      %v725 = vshrl.u32 %v193, 16
      %v727 = vrot.slane %v725, 7
      %v728 = vshll.u32 %v193, 16
      %v730 = vor.u32 %v727, %v728
      %v731 = vsel %vm612, %v719, %v730
      %v733 = vshrl.u32 %v194, 16
      %v735 = vrot.slane %v733, 7
      %v736 = vshll.u32 %v194, 16
      %v738 = vor.u32 %v735, %v736
      %v739 = vsel %vm612, %v727, %v738
      %vm756 = vcmask 1040384
      %vm757 = vmand %vm756, %vm612
      %v758 = vsel %vm757, 0, %v619
      %vm759 = vcmp.ge.s32.totalorder %v580, 1
      %vm760 = vcmp.ge.s32.totalorder %v581, 1
      %vm761 = vcmp.ge.s32.totalorder %v582, 1
      %vm762 = vcmp.ge.s32.totalorder %v583, 1
      %vm763 = vcmp.ge.s32.totalorder %v584, 1
      %vm764 = vcmp.ge.s32.totalorder %v585, 1
      %vm765 = vcmp.ge.s32.totalorder %v586, 1
      %vm766 = vcmp.ge.s32.totalorder %v587, 1
      %vm767 = vcmp.ge.s32.totalorder %v588, 1
      %vm768 = vcmp.ge.s32.totalorder %v589, 1
      %vm769 = vcmp.ge.s32.totalorder %v590, 1
      %vm770 = vcmp.ge.s32.totalorder %v591, 1
      %vm771 = vcmp.ge.s32.totalorder %v592, 1
      %vm772 = vcmp.ge.s32.totalorder %v593, 1
      %vm773 = vcmp.ge.s32.totalorder %v594, 1
      %vm774 = vcmp.ge.s32.totalorder %v595, 1
      %vm775 = vcmp.ge.s32.totalorder %v596, 1
      %vm776 = vcmp.ge.s32.totalorder %v597, 1
      %vm777 = vcmp.ge.s32.totalorder %v598, 1
      %vm778 = vcmp.ge.s32.totalorder %v599, 1
      %vm779 = vcmp.ge.s32.totalorder %v600, 1
      %vm780 = vcmp.ge.s32.totalorder %v601, 1
      %vm781 = vcmp.ge.s32.totalorder %v602, 1
      %vm782 = vcmp.ge.s32.totalorder %v603, 1
      %vm783 = vcmp.ge.s32.totalorder %v604, 1
      %vm784 = vcmp.ge.s32.totalorder %v605, 1
      %vm785 = vcmp.ge.s32.totalorder %v606, 1
      %vm786 = vcmp.ge.s32.totalorder %v607, 1
      %vm787 = vcmp.ge.s32.totalorder %v608, 1
      %vm788 = vcmp.ge.s32.totalorder %v609, 1
      %vm789 = vcmp.ge.s32.totalorder %v610, 1
      %vm790 = vcmp.ge.s32.totalorder %v611, 1
      %vm791 = vmpackc.low %vm759, %vm759
      %vm792 = vmpackc.low %vm760, %vm760
      %vm793 = vmpackc.low %vm761, %vm761
      %vm794 = vmpackc.low %vm762, %vm762
      %vm795 = vmpackc.low %vm763, %vm763
      %vm796 = vmpackc.low %vm764, %vm764
      %vm797 = vmpackc.low %vm765, %vm765
      %vm798 = vmpackc.low %vm766, %vm766
      %vm799 = vmpackc.low %vm767, %vm767
      %vm800 = vmpackc.low %vm768, %vm768
      %vm801 = vmpackc.low %vm769, %vm769
      %vm802 = vmpackc.low %vm770, %vm770
      %vm803 = vmpackc.low %vm771, %vm771
      %vm804 = vmpackc.low %vm772, %vm772
      %vm805 = vmpackc.low %vm773, %vm773
      %vm806 = vmpackc.low %vm774, %vm774
      %vm807 = vmpackc.low %vm775, %vm775
      %vm808 = vmpackc.low %vm776, %vm776
      %vm809 = vmpackc.low %vm777, %vm777
      %vm810 = vmpackc.low %vm778, %vm778
      %vm811 = vmpackc.low %vm779, %vm779
      %vm812 = vmpackc.low %vm780, %vm780
      %vm813 = vmpackc.low %vm781, %vm781
      %vm814 = vmpackc.low %vm782, %vm782
      %vm815 = vmpackc.low %vm783, %vm783
      %vm816 = vmpackc.low %vm784, %vm784
      %vm817 = vmpackc.low %vm785, %vm785
      %vm818 = vmpackc.low %vm786, %vm786
      %vm819 = vmpackc.low %vm787, %vm787
      %vm820 = vmpackc.low %vm788, %vm788
      %vm821 = vmpackc.low %vm789, %vm789
      %vm822 = vmpackc.low %vm790, %vm790
      %v823 = vsel %vm791, 65537, 0
      %v824 = vsel %vm792, 65537, 0
      %v825 = vsel %vm793, 65537, 0
      %v826 = vsel %vm794, 65537, 0
      %v827 = vsel %vm795, 65537, 0
      %v828 = vsel %vm796, 65537, 0
      %v829 = vsel %vm797, 65537, 0
      %v830 = vsel %vm798, 65537, 0
      %v831 = vsel %vm799, 65537, 0
      %v832 = vsel %vm800, 65537, 0
      %v833 = vsel %vm801, 65537, 0
      %v834 = vsel %vm802, 65537, 0
      %v835 = vsel %vm803, 65537, 0
      %v836 = vsel %vm804, 65537, 0
      %v837 = vsel %vm805, 65537, 0
      %v838 = vsel %vm806, 65537, 0
      %v839 = vsel %vm807, 65537, 0
      %v840 = vsel %vm808, 65537, 0
      %v841 = vsel %vm809, 65537, 0
      %v842 = vsel %vm810, 65537, 0
      %v843 = vsel %vm811, 65537, 0
      %v844 = vsel %vm812, 65537, 0
      %v845 = vsel %vm813, 65537, 0
      %v846 = vsel %vm814, 65537, 0
      %v847 = vsel %vm815, 65537, 0
      %v848 = vsel %vm816, 65537, 0
      %v849 = vsel %vm817, 65537, 0
      %v850 = vsel %vm818, 65537, 0
      %v851 = vsel %vm819, 65537, 0
      %v852 = vsel %vm820, 65537, 0
      %v853 = vsel %vm821, 65537, 0
      %v854 = vsel %vm822, 65537, 0
      %v855 = vunpack.c.l.b16 %v823
      %v856 = vunpack.c.l.b16 %v824
      %v857 = vunpack.c.l.b16 %v825
      %v858 = vunpack.c.l.b16 %v826
      %v859 = vunpack.c.l.b16 %v827
      %v860 = vunpack.c.l.b16 %v828
      %v861 = vunpack.c.l.b16 %v829
      %v862 = vunpack.c.l.b16 %v830
      %v863 = vunpack.c.l.b16 %v831
      %v864 = vunpack.c.l.b16 %v832
      %v865 = vunpack.c.l.b16 %v833
      %v866 = vunpack.c.l.b16 %v834
      %v867 = vunpack.c.l.b16 %v835
      %v868 = vunpack.c.l.b16 %v836
      %v869 = vunpack.c.l.b16 %v837
      %v870 = vunpack.c.l.b16 %v838
      %v871 = vunpack.c.l.b16 %v839
      %v872 = vunpack.c.l.b16 %v840
      %v873 = vunpack.c.l.b16 %v841
      %v874 = vunpack.c.l.b16 %v842
      %v875 = vunpack.c.l.b16 %v843
      %v876 = vunpack.c.l.b16 %v844
      %v877 = vunpack.c.l.b16 %v845
      %v878 = vunpack.c.l.b16 %v846
      %v879 = vunpack.c.l.b16 %v847
      %v880 = vunpack.c.l.b16 %v848
      %v881 = vunpack.c.l.b16 %v849
      %v882 = vunpack.c.l.b16 %v850
      %v883 = vunpack.c.l.b16 %v851
      %v884 = vunpack.c.l.b16 %v852
      %v885 = vunpack.c.l.b16 %v853
      %v886 = vunpack.c.l.b16 %v854
      %v887 = vpack.c.b16 %v856, %v855
      %v888 = vpack.c.b16 %v858, %v857
      %v889 = vpack.c.b16 %v860, %v859
      %v890 = vpack.c.b16 %v862, %v861
      %v891 = vpack.c.b16 %v864, %v863
      %v892 = vpack.c.b16 %v866, %v865
      %v893 = vpack.c.b16 %v868, %v867
      %v894 = vpack.c.b16 %v870, %v869
      %v895 = vpack.c.b16 %v872, %v871
      %v896 = vpack.c.b16 %v874, %v873
      %v897 = vpack.c.b16 %v876, %v875
      %v898 = vpack.c.b16 %v878, %v877
      %v899 = vpack.c.b16 %v880, %v879
      %v900 = vpack.c.b16 %v882, %v881
      %v901 = vpack.c.b16 %v884, %v883
      %v902 = vpack.c.b16 %v886, %v885
      %vm903 = vcmp.ne.s16.totalorder %v887, 0
      %vm904 = vcmp.ne.s16.totalorder %v888, 0
      %vm905 = vcmp.ne.s16.totalorder %v889, 0
      %vm906 = vcmp.ne.s16.totalorder %v890, 0
      %vm907 = vcmp.ne.s16.totalorder %v891, 0
      %vm908 = vcmp.ne.s16.totalorder %v892, 0
      %vm909 = vcmp.ne.s16.totalorder %v893, 0
      %vm910 = vcmp.ne.s16.totalorder %v894, 0
      %vm911 = vcmp.ne.s16.totalorder %v895, 0
      %vm912 = vcmp.ne.s16.totalorder %v896, 0
      %vm913 = vcmp.ne.s16.totalorder %v897, 0
      %vm914 = vcmp.ne.s16.totalorder %v898, 0
      %vm915 = vcmp.ne.s16.totalorder %v899, 0
      %vm916 = vcmp.ne.s16.totalorder %v900, 0
      %vm917 = vcmp.ne.s16.totalorder %v901, 0
      %vm918 = vcmp.ne.s16.totalorder %v902, 0
      %v919 = vsel %vm903, %v758, 0
      %v920 = vsel %vm904, %v627, 0
      %v921 = vsel %vm905, %v635, 0
      %v922 = vsel %vm906, %v643, 0
      %v923 = vsel %vm907, %v651, 0
      %v924 = vsel %vm908, %v659, 0
      %v925 = vsel %vm909, %v667, 0
      %v926 = vsel %vm910, %v675, 0
      %v927 = vsel %vm911, %v683, 0
      %v928 = vsel %vm912, %v691, 0
      %v929 = vsel %vm913, %v699, 0
      %v930 = vsel %vm914, %v707, 0
      %v931 = vsel %vm915, %v715, 0
      %v932 = vsel %vm916, %v723, 0
      %v933 = vsel %vm917, %v731, 0
      %v934 = vsel %vm918, %v739, 0
      %vm935 = vsmask.f32 7424
      %v936 = vrot.slane %v617, 1
      %v937 = vor.u32 %v614, %v936
      %v938 = vrot.slane %v624, 1
      %v939 = vsel %vm935, %v937, %v938
      %v940 = vor.u32 %v621, %v938
      %v941 = vrot.slane %v632, 1
      %v942 = vsel %vm935, %v940, %v941
      %v943 = vor.u32 %v629, %v941
      %v944 = vrot.slane %v640, 1
      %v945 = vsel %vm935, %v943, %v944
      %v946 = vor.u32 %v637, %v944
      %v947 = vrot.slane %v648, 1
      %v948 = vsel %vm935, %v946, %v947
      %v949 = vor.u32 %v645, %v947
      %v950 = vrot.slane %v656, 1
      %v951 = vsel %vm935, %v949, %v950
      %v952 = vor.u32 %v653, %v950
      %v953 = vrot.slane %v664, 1
      %v954 = vsel %vm935, %v952, %v953
      %v955 = vor.u32 %v661, %v953
      %v956 = vrot.slane %v672, 1
      %v957 = vsel %vm935, %v955, %v956
      %v958 = vor.u32 %v669, %v956
      %v959 = vrot.slane %v680, 1
      %v960 = vsel %vm935, %v958, %v959
      %v961 = vor.u32 %v677, %v959
      %v962 = vrot.slane %v688, 1
      %v963 = vsel %vm935, %v961, %v962
      %v964 = vor.u32 %v685, %v962
      %v965 = vrot.slane %v696, 1
      %v966 = vsel %vm935, %v964, %v965
      %v967 = vor.u32 %v693, %v965
      %v968 = vrot.slane %v704, 1
      %v969 = vsel %vm935, %v967, %v968
      %v970 = vor.u32 %v701, %v968
      %v971 = vrot.slane %v712, 1
      %v972 = vsel %vm935, %v970, %v971
      %v973 = vor.u32 %v709, %v971
      %v974 = vrot.slane %v720, 1
      %v975 = vsel %vm935, %v973, %v974
      %v976 = vor.u32 %v717, %v974
      %v977 = vrot.slane %v728, 1
      %v978 = vsel %vm935, %v976, %v977
      %v979 = vor.u32 %v725, %v977
      %v980 = vrot.slane %v736, 1
      %v981 = vsel %vm935, %v979, %v980
      %v982 = vor.u32 %v733, %v980
      %vm999 = vcmask 1047552
      %vm1000 = vmand %vm999, %vm935
      %v1001 = vsel %vm1000, %v982, 0
      %vm1002 = vcmp.le.s32.totalorder %v580, 14
      %vm1003 = vcmp.le.s32.totalorder %v581, 14
      %vm1004 = vcmp.le.s32.totalorder %v582, 14
      %vm1005 = vcmp.le.s32.totalorder %v583, 14
      %vm1006 = vcmp.le.s32.totalorder %v584, 14
      %vm1007 = vcmp.le.s32.totalorder %v585, 14
      %vm1008 = vcmp.le.s32.totalorder %v586, 14
      %vm1009 = vcmp.le.s32.totalorder %v587, 14
      %vm1010 = vcmp.le.s32.totalorder %v588, 14
      %vm1011 = vcmp.le.s32.totalorder %v589, 14
      %vm1012 = vcmp.le.s32.totalorder %v590, 14
      %vm1013 = vcmp.le.s32.totalorder %v591, 14
      %vm1014 = vcmp.le.s32.totalorder %v592, 14
      %vm1015 = vcmp.le.s32.totalorder %v593, 14
      %vm1016 = vcmp.le.s32.totalorder %v594, 14
      %vm1017 = vcmp.le.s32.totalorder %v595, 14
      %vm1018 = vcmp.le.s32.totalorder %v596, 14
      %vm1019 = vcmp.le.s32.totalorder %v597, 14
      %vm1020 = vcmp.le.s32.totalorder %v598, 14
      %vm1021 = vcmp.le.s32.totalorder %v599, 14
      %vm1022 = vcmp.le.s32.totalorder %v600, 14
      %vm1023 = vcmp.le.s32.totalorder %v601, 14
      %vm1024 = vcmp.le.s32.totalorder %v602, 14
      %vm1025 = vcmp.le.s32.totalorder %v603, 14
      %vm1026 = vcmp.le.s32.totalorder %v604, 14
      %vm1027 = vcmp.le.s32.totalorder %v605, 14
      %vm1028 = vcmp.le.s32.totalorder %v606, 14
      %vm1029 = vcmp.le.s32.totalorder %v607, 14
      %vm1030 = vcmp.le.s32.totalorder %v608, 14
      %vm1031 = vcmp.le.s32.totalorder %v609, 14
      %vm1032 = vcmp.le.s32.totalorder %v610, 14
      %vm1033 = vcmp.le.s32.totalorder %v611, 14
      %vm1034 = vmpackc.low %vm1002, %vm1002
      %vm1035 = vmpackc.low %vm1003, %vm1003
      %vm1036 = vmpackc.low %vm1004, %vm1004
      %vm1037 = vmpackc.low %vm1005, %vm1005
      %vm1038 = vmpackc.low %vm1006, %vm1006
      %vm1039 = vmpackc.low %vm1007, %vm1007
      %vm1040 = vmpackc.low %vm1008, %vm1008
      %vm1041 = vmpackc.low %vm1009, %vm1009
      %vm1042 = vmpackc.low %vm1010, %vm1010
      %vm1043 = vmpackc.low %vm1011, %vm1011
      %vm1044 = vmpackc.low %vm1012, %vm1012
      %vm1045 = vmpackc.low %vm1013, %vm1013
      %vm1046 = vmpackc.low %vm1014, %vm1014
      %vm1047 = vmpackc.low %vm1015, %vm1015
      %vm1048 = vmpackc.low %vm1016, %vm1016
      %vm1049 = vmpackc.low %vm1017, %vm1017
      %vm1050 = vmpackc.low %vm1018, %vm1018
      %vm1051 = vmpackc.low %vm1019, %vm1019
      %vm1052 = vmpackc.low %vm1020, %vm1020
      %vm1053 = vmpackc.low %vm1021, %vm1021
      %vm1054 = vmpackc.low %vm1022, %vm1022
      %vm1055 = vmpackc.low %vm1023, %vm1023
      %vm1056 = vmpackc.low %vm1024, %vm1024
      %vm1057 = vmpackc.low %vm1025, %vm1025
      %vm1058 = vmpackc.low %vm1026, %vm1026
      %vm1059 = vmpackc.low %vm1027, %vm1027
      %vm1060 = vmpackc.low %vm1028, %vm1028
      %vm1061 = vmpackc.low %vm1029, %vm1029
      %vm1062 = vmpackc.low %vm1030, %vm1030
      %vm1063 = vmpackc.low %vm1031, %vm1031
      %vm1064 = vmpackc.low %vm1032, %vm1032
      %vm1065 = vmpackc.low %vm1033, %vm1033
      %v1066 = vsel %vm1034, 65537, 0
      %v1067 = vsel %vm1035, 65537, 0
      %v1068 = vsel %vm1036, 65537, 0
      %v1069 = vsel %vm1037, 65537, 0
      %v1070 = vsel %vm1038, 65537, 0
      %v1071 = vsel %vm1039, 65537, 0
      %v1072 = vsel %vm1040, 65537, 0
      %v1073 = vsel %vm1041, 65537, 0
      %v1074 = vsel %vm1042, 65537, 0
      %v1075 = vsel %vm1043, 65537, 0
      %v1076 = vsel %vm1044, 65537, 0
      %v1077 = vsel %vm1045, 65537, 0
      %v1078 = vsel %vm1046, 65537, 0
      %v1079 = vsel %vm1047, 65537, 0
      %v1080 = vsel %vm1048, 65537, 0
      %v1081 = vsel %vm1049, 65537, 0
      %v1082 = vsel %vm1050, 65537, 0
      %v1083 = vsel %vm1051, 65537, 0
      %v1084 = vsel %vm1052, 65537, 0
      %v1085 = vsel %vm1053, 65537, 0
      %v1086 = vsel %vm1054, 65537, 0
      %v1087 = vsel %vm1055, 65537, 0
      %v1088 = vsel %vm1056, 65537, 0
      %v1089 = vsel %vm1057, 65537, 0
      %v1090 = vsel %vm1058, 65537, 0
      %v1091 = vsel %vm1059, 65537, 0
      %v1092 = vsel %vm1060, 65537, 0
      %v1093 = vsel %vm1061, 65537, 0
      %v1094 = vsel %vm1062, 65537, 0
      %v1095 = vsel %vm1063, 65537, 0
      %v1096 = vsel %vm1064, 65537, 0
      %v1097 = vsel %vm1065, 65537, 0
      %v1098 = vunpack.c.l.b16 %v1066
      %v1099 = vunpack.c.l.b16 %v1067
      %v1100 = vunpack.c.l.b16 %v1068
      %v1101 = vunpack.c.l.b16 %v1069
      %v1102 = vunpack.c.l.b16 %v1070
      %v1103 = vunpack.c.l.b16 %v1071
      %v1104 = vunpack.c.l.b16 %v1072
      %v1105 = vunpack.c.l.b16 %v1073
      %v1106 = vunpack.c.l.b16 %v1074
      %v1107 = vunpack.c.l.b16 %v1075
      %v1108 = vunpack.c.l.b16 %v1076
      %v1109 = vunpack.c.l.b16 %v1077
      %v1110 = vunpack.c.l.b16 %v1078
      %v1111 = vunpack.c.l.b16 %v1079
      %v1112 = vunpack.c.l.b16 %v1080
      %v1113 = vunpack.c.l.b16 %v1081
      %v1114 = vunpack.c.l.b16 %v1082
      %v1115 = vunpack.c.l.b16 %v1083
      %v1116 = vunpack.c.l.b16 %v1084
      %v1117 = vunpack.c.l.b16 %v1085
      %v1118 = vunpack.c.l.b16 %v1086
      %v1119 = vunpack.c.l.b16 %v1087
      %v1120 = vunpack.c.l.b16 %v1088
      %v1121 = vunpack.c.l.b16 %v1089
      %v1122 = vunpack.c.l.b16 %v1090
      %v1123 = vunpack.c.l.b16 %v1091
      %v1124 = vunpack.c.l.b16 %v1092
      %v1125 = vunpack.c.l.b16 %v1093
      %v1126 = vunpack.c.l.b16 %v1094
      %v1127 = vunpack.c.l.b16 %v1095
      %v1128 = vunpack.c.l.b16 %v1096
      %v1129 = vunpack.c.l.b16 %v1097
      %v1130 = vpack.c.b16 %v1099, %v1098
      %v1131 = vpack.c.b16 %v1101, %v1100
      %v1132 = vpack.c.b16 %v1103, %v1102
      %v1133 = vpack.c.b16 %v1105, %v1104
      %v1134 = vpack.c.b16 %v1107, %v1106
      %v1135 = vpack.c.b16 %v1109, %v1108
      %v1136 = vpack.c.b16 %v1111, %v1110
      %v1137 = vpack.c.b16 %v1113, %v1112
      %v1138 = vpack.c.b16 %v1115, %v1114
      %v1139 = vpack.c.b16 %v1117, %v1116
      %v1140 = vpack.c.b16 %v1119, %v1118
      %v1141 = vpack.c.b16 %v1121, %v1120
      %v1142 = vpack.c.b16 %v1123, %v1122
      %v1143 = vpack.c.b16 %v1125, %v1124
      %v1144 = vpack.c.b16 %v1127, %v1126
      %v1145 = vpack.c.b16 %v1129, %v1128
      %vm1146 = vcmp.ne.s16.totalorder %v1130, 0
      %vm1147 = vcmp.ne.s16.totalorder %v1131, 0
      %vm1148 = vcmp.ne.s16.totalorder %v1132, 0
      %vm1149 = vcmp.ne.s16.totalorder %v1133, 0
      %vm1150 = vcmp.ne.s16.totalorder %v1134, 0
      %vm1151 = vcmp.ne.s16.totalorder %v1135, 0
      %vm1152 = vcmp.ne.s16.totalorder %v1136, 0
      %vm1153 = vcmp.ne.s16.totalorder %v1137, 0
      %vm1154 = vcmp.ne.s16.totalorder %v1138, 0
      %vm1155 = vcmp.ne.s16.totalorder %v1139, 0
      %vm1156 = vcmp.ne.s16.totalorder %v1140, 0
      %vm1157 = vcmp.ne.s16.totalorder %v1141, 0
      %vm1158 = vcmp.ne.s16.totalorder %v1142, 0
      %vm1159 = vcmp.ne.s16.totalorder %v1143, 0
      %vm1160 = vcmp.ne.s16.totalorder %v1144, 0
      %vm1161 = vcmp.ne.s16.totalorder %v1145, 0
      %v1162 = vsel %vm1146, %v939, 0
      %v1163 = vsel %vm1147, %v942, 0
      %v1164 = vsel %vm1148, %v945, 0
      %v1165 = vsel %vm1149, %v948, 0
      %v1166 = vsel %vm1150, %v951, 0
      %v1167 = vsel %vm1151, %v954, 0
      %v1168 = vsel %vm1152, %v957, 0
      %v1169 = vsel %vm1153, %v960, 0
      %v1170 = vsel %vm1154, %v963, 0
      %v1171 = vsel %vm1155, %v966, 0
      %v1172 = vsel %vm1156, %v969, 0
      %v1173 = vsel %vm1157, %v972, 0
      %v1174 = vsel %vm1158, %v975, 0
      %v1175 = vsel %vm1159, %v978, 0
      %v1176 = vsel %vm1160, %v981, 0
      %v1177 = vsel %vm1161, %v1001, 0
      %v1178 = vld [vmem:[%s1] sm:$0xf]
      %v1179 = vld [vmem:[%s1 + $0x4] sm:$0xf]
      %v1180 = vld [vmem:[%s1 + $0x8] sm:$0xf]
      %vm1181 = vcmask 64512
      %v1182 = vsel %vm1181, %v179, 0
      %v1184 = vsel %vm1181, %v180, 0
      %v1186 = vsel %vm1181, %v181, 0
      %v1188 = vsel %vm1181, %v182, 0
      %v1190 = vsel %vm1181, %v183, 0
      %v1192 = vsel %vm1181, %v184, 0
      %v1194 = vsel %vm1181, %v185, 0
      %v1196 = vsel %vm1181, %v186, 0
      %v1198 = vsel %vm1181, %v187, 0
      %v1200 = vsel %vm1181, %v188, 0
      %v1202 = vsel %vm1181, %v189, 0
      %v1204 = vsel %vm1181, %v190, 0
      %v1206 = vsel %vm1181, %v191, 0
      %v1208 = vsel %vm1181, %v192, 0
      %v1210 = vsel %vm1181, %v193, 0
      %v1212 = vsel %vm1181, %v194, 0
      %vm1214 = vcmask 1043456
      %v1216 = vsel %vm1214, %v1179, 0
      %1218 = vmatprep.subr.bf16.mxu0 0
      %1219 = vmatpush1.bf16.msra.mxu0 %v1216
      %1220 = vmatprep.subr.bf16.mxu0 0
      %1221 = vmatpush1.bf16.msra.mxu0 0
      %1222 = vmatprep.subr.bf16.mxu0 0
      %1223 = vmatpush1.bf16.msra.mxu0 0
      %1224 = vmatprep.subr.bf16.mxu0 0
      %1225 = vmatpush1.bf16.msra.mxu0 0
      %1226 = vmatprep.subr.bf16.mxu0 0
      %1227 = vmatpush1.bf16.msra.mxu0 0
      %1228 = vmatprep.subr.bf16.mxu0 0
      %1229 = vmatpush1.bf16.msra.mxu0 0
      %1230 = vmatprep.subr.bf16.mxu0 0
      %1231 = vmatpush1.bf16.msra.mxu0 0
      %1232 = vmatprep.subr.bf16.mxu0 0
      %1233 = vmatpush1.bf16.msra.mxu0 0
      %1234 = vmatprep.subr.bf16.mxu0 0
      %1235 = vmatpush1.bf16.msra.mxu0 0
      %1236 = vmatprep.subr.bf16.mxu0 0
      %1237 = vmatpush1.bf16.msra.mxu0 0
      %1238 = vmatprep.subr.bf16.mxu0 0
      %1239 = vmatpush1.bf16.msra.mxu0 0
      %1240 = vmatprep.subr.bf16.mxu0 0
      %1241 = vmatpush1.bf16.msra.mxu0 0
      %1242 = vmatprep.subr.bf16.mxu0 0
      %1243 = vmatpush1.bf16.msra.mxu0 0
      %1244 = vmatprep.subr.bf16.mxu0 0
      %1245 = vmatpush1.bf16.msra.mxu0 0
      %1246 = vmatprep.subr.bf16.mxu0 0
      %1247 = vmatpush1.bf16.msra.mxu0 0
      %1248 = vmatprep.subr.bf16.mxu0 0
      %1249 = vmatpush1.bf16.msra.mxu0 0
      %1250 = vmatprep.mubr.bf16.mxu0 0
      %1251 = vmatmul.mubr.bf16.gmra.mrb[0].mxu0 %v1182
      %v1252 = vpop.f32.mrb[0].mxu0
      %v1253 = vadd.f32 0.0, %v1252
      %v1254 = vpop.f32.mrb[0].mxu0
      %v1255 = vpop.f32.mrb[0].mxu0
      %v1256 = vadd.f32 0.0, %v1255
      %v1257 = vpop.f32.mrb[0].mxu0
      %1258 = vmatprep.mubr.bf16.mxu0 0
      %1259 = vmatmul.mubr.bf16.gmra.mrb[0].mxu0 %v1184
      %v1260 = vpop.f32.mrb[0].mxu0
      %v1261 = vadd.f32 0.0, %v1260
      %v1262 = vpop.f32.mrb[0].mxu0
      %v1263 = vpop.f32.mrb[0].mxu0
      %v1264 = vadd.f32 0.0, %v1263
      %v1265 = vpop.f32.mrb[0].mxu0
      %1266 = vmatprep.mubr.bf16.mxu0 0
      %1267 = vmatmul.mubr.bf16.gmra.mrb[0].mxu0 %v1186
      %v1268 = vpop.f32.mrb[0].mxu0
      %v1269 = vadd.f32 0.0, %v1268
      %v1270 = vpop.f32.mrb[0].mxu0
      %v1271 = vpop.f32.mrb[0].mxu0
      %v1272 = vadd.f32 0.0, %v1271
      %v1273 = vpop.f32.mrb[0].mxu0
      %1274 = vmatprep.mubr.bf16.mxu0 0
      %1275 = vmatmul.mubr.bf16.gmra.mrb[0].mxu0 %v1188
      %v1276 = vpop.f32.mrb[0].mxu0
      %v1277 = vadd.f32 0.0, %v1276
      %v1278 = vpop.f32.mrb[0].mxu0
      %v1279 = vpop.f32.mrb[0].mxu0
      %v1280 = vadd.f32 0.0, %v1279
      %v1281 = vpop.f32.mrb[0].mxu0
      %1282 = vmatprep.mubr.bf16.mxu0 0
      %1283 = vmatmul.mubr.bf16.gmra.mrb[0].mxu0 %v1190
      %v1284 = vpop.f32.mrb[0].mxu0
      %v1285 = vadd.f32 0.0, %v1284
      %v1286 = vpop.f32.mrb[0].mxu0
      %v1287 = vpop.f32.mrb[0].mxu0
      %v1288 = vadd.f32 0.0, %v1287
      %v1289 = vpop.f32.mrb[0].mxu0
      %1290 = vmatprep.mubr.bf16.mxu0 0
      %1291 = vmatmul.mubr.bf16.gmra.mrb[0].mxu0 %v1192
      %v1292 = vpop.f32.mrb[0].mxu0
      %v1293 = vadd.f32 0.0, %v1292
      %v1294 = vpop.f32.mrb[0].mxu0
      %v1295 = vpop.f32.mrb[0].mxu0
      %v1296 = vadd.f32 0.0, %v1295
      %v1297 = vpop.f32.mrb[0].mxu0
      %1298 = vmatprep.mubr.bf16.mxu0 0
      %1299 = vmatmul.mubr.bf16.gmra.mrb[0].mxu0 %v1194
      %v1300 = vpop.f32.mrb[0].mxu0
      %v1301 = vadd.f32 0.0, %v1300
      %v1302 = vpop.f32.mrb[0].mxu0
      %v1303 = vpop.f32.mrb[0].mxu0
      %v1304 = vadd.f32 0.0, %v1303
      %v1305 = vpop.f32.mrb[0].mxu0
      %1306 = vmatprep.mubr.bf16.mxu0 0
      %1307 = vmatmul.mubr.bf16.gmra.mrb[0].mxu0 %v1196
      %v1308 = vpop.f32.mrb[0].mxu0
      %v1309 = vadd.f32 0.0, %v1308
      %v1310 = vpop.f32.mrb[0].mxu0
      %v1311 = vpop.f32.mrb[0].mxu0
      %v1312 = vadd.f32 0.0, %v1311
      %v1313 = vpop.f32.mrb[0].mxu0
      %1314 = vmatprep.mubr.bf16.mxu0 0
      %1315 = vmatmul.mubr.bf16.gmra.mrb[0].mxu0 %v1198
      %v1316 = vpop.f32.mrb[0].mxu0
      %v1317 = vadd.f32 0.0, %v1316
      %v1318 = vpop.f32.mrb[0].mxu0
      %v1319 = vpop.f32.mrb[0].mxu0
      %v1320 = vadd.f32 0.0, %v1319
      %v1321 = vpop.f32.mrb[0].mxu0
      %1322 = vmatprep.mubr.bf16.mxu0 0
      %1323 = vmatmul.mubr.bf16.gmra.mrb[0].mxu0 %v1200
      %v1324 = vpop.f32.mrb[0].mxu0
      %v1325 = vadd.f32 0.0, %v1324
      %v1326 = vpop.f32.mrb[0].mxu0
      %v1327 = vpop.f32.mrb[0].mxu0
      %v1328 = vadd.f32 0.0, %v1327
      %v1329 = vpop.f32.mrb[0].mxu0
      %1330 = vmatprep.mubr.bf16.mxu0 0
      %1331 = vmatmul.mubr.bf16.gmra.mrb[0].mxu0 %v1202
      %v1332 = vpop.f32.mrb[0].mxu0
      %v1333 = vadd.f32 0.0, %v1332
      %v1334 = vpop.f32.mrb[0].mxu0
      %v1335 = vpop.f32.mrb[0].mxu0
      %v1336 = vadd.f32 0.0, %v1335
      %v1337 = vpop.f32.mrb[0].mxu0
      %1338 = vmatprep.mubr.bf16.mxu0 0
      %1339 = vmatmul.mubr.bf16.gmra.mrb[0].mxu0 %v1204
      %v1340 = vpop.f32.mrb[0].mxu0
      %v1341 = vadd.f32 0.0, %v1340
      %v1342 = vpop.f32.mrb[0].mxu0
      %v1343 = vpop.f32.mrb[0].mxu0
      %v1344 = vadd.f32 0.0, %v1343
      %v1345 = vpop.f32.mrb[0].mxu0
      %1346 = vmatprep.mubr.bf16.mxu0 0
      %1347 = vmatmul.mubr.bf16.gmra.mrb[0].mxu0 %v1206
      %v1348 = vpop.f32.mrb[0].mxu0
      %v1349 = vadd.f32 0.0, %v1348
      %v1350 = vpop.f32.mrb[0].mxu0
      %v1351 = vpop.f32.mrb[0].mxu0
      %v1352 = vadd.f32 0.0, %v1351
      %v1353 = vpop.f32.mrb[0].mxu0
      %1354 = vmatprep.mubr.bf16.mxu0 0
      %1355 = vmatmul.mubr.bf16.gmra.mrb[0].mxu0 %v1208
      %v1356 = vpop.f32.mrb[0].mxu0
      %v1357 = vadd.f32 0.0, %v1356
      %v1358 = vpop.f32.mrb[0].mxu0
      %v1359 = vpop.f32.mrb[0].mxu0
      %v1360 = vadd.f32 0.0, %v1359
      %v1361 = vpop.f32.mrb[0].mxu0
      %1362 = vmatprep.mubr.bf16.mxu0 0
      %1363 = vmatmul.mubr.bf16.gmra.mrb[0].mxu0 %v1210
      %v1364 = vpop.f32.mrb[0].mxu0
      %v1365 = vadd.f32 0.0, %v1364
      %v1366 = vpop.f32.mrb[0].mxu0
      %v1367 = vpop.f32.mrb[0].mxu0
      %v1368 = vadd.f32 0.0, %v1367
      %v1369 = vpop.f32.mrb[0].mxu0
      %1370 = vmatprep.mubr.bf16.mxu0 0
      %1371 = vmatmul.mubr.bf16.gmra.mrb[0].mxu0 %v1212
      %v1372 = vpop.f32.mrb[0].mxu0
      %v1373 = vpop.f32.mrb[0].mxu0
      %v1374 = vpop.f32.mrb[0].mxu0
      %v1375 = vpop.f32.mrb[0].mxu0
      %1376 = vdwg.mxu0
      %v1378 = vsel %vm1181, %v1162, 0
      %v1381 = vsel %vm1181, %v1163, 0
      %v1384 = vsel %vm1181, %v1164, 0
      %v1387 = vsel %vm1181, %v1165, 0
      %v1390 = vsel %vm1181, %v1166, 0
      %v1393 = vsel %vm1181, %v1167, 0
      %v1396 = vsel %vm1181, %v1168, 0
      %v1399 = vsel %vm1181, %v1169, 0
      %v1402 = vsel %vm1181, %v1170, 0
      %v1405 = vsel %vm1181, %v1171, 0
      %v1408 = vsel %vm1181, %v1172, 0
      %v1411 = vsel %vm1181, %v1173, 0
      %v1414 = vsel %vm1181, %v1174, 0
      %v1417 = vsel %vm1181, %v1175, 0
      %v1420 = vsel %vm1181, %v1176, 0
      %v1423 = vsel %vm1181, %v1177, 0
      %v1426 = vsel %vm1214, %v1180, 0
      %1428 = vmatprep.subr.bf16.mxu0 0
      %1429 = vmatpush1.bf16.msra.mxu0 %v1426
      %1430 = vmatprep.subr.bf16.mxu0 0
      %1431 = vmatpush1.bf16.msra.mxu0 0
      %1432 = vmatprep.subr.bf16.mxu0 0
      %1433 = vmatpush1.bf16.msra.mxu0 0
      %1434 = vmatprep.subr.bf16.mxu0 0
      %1435 = vmatpush1.bf16.msra.mxu0 0
      %1436 = vmatprep.subr.bf16.mxu0 0
      %1437 = vmatpush1.bf16.msra.mxu0 0
      %1438 = vmatprep.subr.bf16.mxu0 0
      %1439 = vmatpush1.bf16.msra.mxu0 0
      %1440 = vmatprep.subr.bf16.mxu0 0
      %1441 = vmatpush1.bf16.msra.mxu0 0
      %1442 = vmatprep.subr.bf16.mxu0 0
      %1443 = vmatpush1.bf16.msra.mxu0 0
      %1444 = vmatprep.subr.bf16.mxu0 0
      %1445 = vmatpush1.bf16.msra.mxu0 0
      %1446 = vmatprep.subr.bf16.mxu0 0
      %1447 = vmatpush1.bf16.msra.mxu0 0
      %1448 = vmatprep.subr.bf16.mxu0 0
      %1449 = vmatpush1.bf16.msra.mxu0 0
      %1450 = vmatprep.subr.bf16.mxu0 0
      %1451 = vmatpush1.bf16.msra.mxu0 0
      %1452 = vmatprep.subr.bf16.mxu0 0
      %1453 = vmatpush1.bf16.msra.mxu0 0
      %1454 = vmatprep.subr.bf16.mxu0 0
      %1455 = vmatpush1.bf16.msra.mxu0 0
      %1456 = vmatprep.subr.bf16.mxu0 0
      %1457 = vmatpush1.bf16.msra.mxu0 0
      %1458 = vmatprep.subr.bf16.mxu0 0
      %1459 = vmatpush1.bf16.msra.mxu0 0
      %1460 = vmatprep.mubr.bf16.mxu0 0
      %1461 = vmatmul.mubr.bf16.gmra.mrb[0].mxu0 %v1378
      %v1462 = vpop.f32.mrb[0].mxu0
      %v1463 = vadd.f32 0.0, %v1462
      %v1464 = vpop.f32.mrb[0].mxu0
      %v1465 = vpop.f32.mrb[0].mxu0
      %v1466 = vadd.f32 0.0, %v1465
      %v1467 = vpop.f32.mrb[0].mxu0
      %1468 = vmatprep.mubr.bf16.mxu0 0
      %1469 = vmatmul.mubr.bf16.gmra.mrb[0].mxu0 %v1381
      %v1470 = vpop.f32.mrb[0].mxu0
      %v1471 = vadd.f32 0.0, %v1470
      %v1472 = vpop.f32.mrb[0].mxu0
      %v1473 = vpop.f32.mrb[0].mxu0
      %v1474 = vadd.f32 0.0, %v1473
      %v1475 = vpop.f32.mrb[0].mxu0
      %1476 = vmatprep.mubr.bf16.mxu0 0
      %1477 = vmatmul.mubr.bf16.gmra.mrb[0].mxu0 %v1384
      %v1478 = vpop.f32.mrb[0].mxu0
      %v1479 = vadd.f32 0.0, %v1478
      %v1480 = vpop.f32.mrb[0].mxu0
      %v1481 = vpop.f32.mrb[0].mxu0
      %v1482 = vadd.f32 0.0, %v1481
      %v1483 = vpop.f32.mrb[0].mxu0
      %1484 = vmatprep.mubr.bf16.mxu0 0
      %1485 = vmatmul.mubr.bf16.gmra.mrb[0].mxu0 %v1387
      %v1486 = vpop.f32.mrb[0].mxu0
      %v1487 = vadd.f32 0.0, %v1486
      %v1488 = vpop.f32.mrb[0].mxu0
      %v1489 = vpop.f32.mrb[0].mxu0
      %v1490 = vadd.f32 0.0, %v1489
      %v1491 = vpop.f32.mrb[0].mxu0
      %1492 = vmatprep.mubr.bf16.mxu0 0
      %1493 = vmatmul.mubr.bf16.gmra.mrb[0].mxu0 %v1390
      %v1494 = vpop.f32.mrb[0].mxu0
      %v1495 = vadd.f32 0.0, %v1494
      %v1496 = vpop.f32.mrb[0].mxu0
      %v1497 = vpop.f32.mrb[0].mxu0
      %v1498 = vadd.f32 0.0, %v1497
      %v1499 = vpop.f32.mrb[0].mxu0
      %1500 = vmatprep.mubr.bf16.mxu0 0
      %1501 = vmatmul.mubr.bf16.gmra.mrb[0].mxu0 %v1393
      %v1502 = vpop.f32.mrb[0].mxu0
      %v1503 = vadd.f32 0.0, %v1502
      %v1504 = vpop.f32.mrb[0].mxu0
      %v1505 = vpop.f32.mrb[0].mxu0
      %v1506 = vadd.f32 0.0, %v1505
      %v1507 = vpop.f32.mrb[0].mxu0
      %1508 = vmatprep.mubr.bf16.mxu0 0
      %1509 = vmatmul.mubr.bf16.gmra.mrb[0].mxu0 %v1396
      %v1510 = vpop.f32.mrb[0].mxu0
      %v1511 = vadd.f32 0.0, %v1510
      %v1512 = vpop.f32.mrb[0].mxu0
      %v1513 = vpop.f32.mrb[0].mxu0
      %v1514 = vadd.f32 0.0, %v1513
      %v1515 = vpop.f32.mrb[0].mxu0
      %1516 = vmatprep.mubr.bf16.mxu0 0
      %1517 = vmatmul.mubr.bf16.gmra.mrb[0].mxu0 %v1399
      %v1518 = vpop.f32.mrb[0].mxu0
      %v1519 = vadd.f32 0.0, %v1518
      %v1520 = vpop.f32.mrb[0].mxu0
      %v1521 = vpop.f32.mrb[0].mxu0
      %v1522 = vadd.f32 0.0, %v1521
      %v1523 = vpop.f32.mrb[0].mxu0
      %1524 = vmatprep.mubr.bf16.mxu0 0
      %1525 = vmatmul.mubr.bf16.gmra.mrb[0].mxu0 %v1402
      %v1526 = vpop.f32.mrb[0].mxu0
      %v1527 = vadd.f32 0.0, %v1526
      %v1528 = vpop.f32.mrb[0].mxu0
      %v1529 = vpop.f32.mrb[0].mxu0
      %v1530 = vadd.f32 0.0, %v1529
      %v1531 = vpop.f32.mrb[0].mxu0
      %1532 = vmatprep.mubr.bf16.mxu0 0
      %1533 = vmatmul.mubr.bf16.gmra.mrb[0].mxu0 %v1405
      %v1534 = vpop.f32.mrb[0].mxu0
      %v1535 = vadd.f32 0.0, %v1534
      %v1536 = vpop.f32.mrb[0].mxu0
      %v1537 = vpop.f32.mrb[0].mxu0
      %v1538 = vadd.f32 0.0, %v1537
      %v1539 = vpop.f32.mrb[0].mxu0
      %1540 = vmatprep.mubr.bf16.mxu0 0
      %1541 = vmatmul.mubr.bf16.gmra.mrb[0].mxu0 %v1408
      %v1542 = vpop.f32.mrb[0].mxu0
      %v1543 = vadd.f32 0.0, %v1542
      %v1544 = vpop.f32.mrb[0].mxu0
      %v1545 = vpop.f32.mrb[0].mxu0
      %v1546 = vadd.f32 0.0, %v1545
      %v1547 = vpop.f32.mrb[0].mxu0
      %1548 = vmatprep.mubr.bf16.mxu0 0
      %1549 = vmatmul.mubr.bf16.gmra.mrb[0].mxu0 %v1411
      %v1550 = vpop.f32.mrb[0].mxu0
      %v1551 = vadd.f32 0.0, %v1550
      %v1552 = vpop.f32.mrb[0].mxu0
      %v1553 = vpop.f32.mrb[0].mxu0
      %v1554 = vadd.f32 0.0, %v1553
      %v1555 = vpop.f32.mrb[0].mxu0
      %1556 = vmatprep.mubr.bf16.mxu0 0
      %1557 = vmatmul.mubr.bf16.gmra.mrb[0].mxu0 %v1414
      %v1558 = vpop.f32.mrb[0].mxu0
      %v1559 = vadd.f32 0.0, %v1558
      %v1560 = vpop.f32.mrb[0].mxu0
      %v1561 = vpop.f32.mrb[0].mxu0
      %v1562 = vadd.f32 0.0, %v1561
      %v1563 = vpop.f32.mrb[0].mxu0
      %1564 = vmatprep.mubr.bf16.mxu0 0
      %1565 = vmatmul.mubr.bf16.gmra.mrb[0].mxu0 %v1417
      %v1566 = vpop.f32.mrb[0].mxu0
      %v1567 = vadd.f32 0.0, %v1566
      %v1568 = vpop.f32.mrb[0].mxu0
      %v1569 = vpop.f32.mrb[0].mxu0
      %v1570 = vadd.f32 0.0, %v1569
      %v1571 = vpop.f32.mrb[0].mxu0
      %1572 = vmatprep.mubr.bf16.mxu0 0
      %1573 = vmatmul.mubr.bf16.gmra.mrb[0].mxu0 %v1420
      %v1574 = vpop.f32.mrb[0].mxu0
      %v1575 = vadd.f32 0.0, %v1574
      %v1576 = vpop.f32.mrb[0].mxu0
      %v1577 = vpop.f32.mrb[0].mxu0
      %v1578 = vadd.f32 0.0, %v1577
      %v1579 = vpop.f32.mrb[0].mxu0
      %1580 = vmatprep.mubr.bf16.mxu0 0
      %1581 = vmatmul.mubr.bf16.gmra.mrb[0].mxu0 %v1423
      %v1582 = vpop.f32.mrb[0].mxu0
      %v1583 = vpop.f32.mrb[0].mxu0
      %v1584 = vpop.f32.mrb[0].mxu0
      %v1585 = vpop.f32.mrb[0].mxu0
      %1586 = vdwg.mxu0
      %v1588 = vsel %vm1181, %v919, 0
      %v1591 = vsel %vm1181, %v920, 0
      %v1594 = vsel %vm1181, %v921, 0
      %v1597 = vsel %vm1181, %v922, 0
      %v1600 = vsel %vm1181, %v923, 0
      %v1603 = vsel %vm1181, %v924, 0
      %v1606 = vsel %vm1181, %v925, 0
      %v1609 = vsel %vm1181, %v926, 0
      %v1612 = vsel %vm1181, %v927, 0
      %v1615 = vsel %vm1181, %v928, 0
      %v1618 = vsel %vm1181, %v929, 0
      %v1621 = vsel %vm1181, %v930, 0
      %v1624 = vsel %vm1181, %v931, 0
      %v1627 = vsel %vm1181, %v932, 0
      %v1630 = vsel %vm1181, %v933, 0
      %v1633 = vsel %vm1181, %v934, 0
      %v1636 = vsel %vm1214, %v1178, 0
      %1638 = vmatprep.subr.bf16.mxu0 0
      %1639 = vmatpush1.bf16.msra.mxu0 %v1636
      %1640 = vmatprep.subr.bf16.mxu0 0
      %1641 = vmatpush1.bf16.msra.mxu0 0
      %1642 = vmatprep.subr.bf16.mxu0 0
      %1643 = vmatpush1.bf16.msra.mxu0 0
      %1644 = vmatprep.subr.bf16.mxu0 0
      %1645 = vmatpush1.bf16.msra.mxu0 0
      %1646 = vmatprep.subr.bf16.mxu0 0
      %1647 = vmatpush1.bf16.msra.mxu0 0
      %1648 = vmatprep.subr.bf16.mxu0 0
      %1649 = vmatpush1.bf16.msra.mxu0 0
      %1650 = vmatprep.subr.bf16.mxu0 0
      %1651 = vmatpush1.bf16.msra.mxu0 0
      %1652 = vmatprep.subr.bf16.mxu0 0
      %1653 = vmatpush1.bf16.msra.mxu0 0
      %1654 = vmatprep.subr.bf16.mxu0 0
      %1655 = vmatpush1.bf16.msra.mxu0 0
      %1656 = vmatprep.subr.bf16.mxu0 0
      %1657 = vmatpush1.bf16.msra.mxu0 0
      %1658 = vmatprep.subr.bf16.mxu0 0
      %1659 = vmatpush1.bf16.msra.mxu0 0
      %1660 = vmatprep.subr.bf16.mxu0 0
      %1661 = vmatpush1.bf16.msra.mxu0 0
      %1662 = vmatprep.subr.bf16.mxu0 0
      %1663 = vmatpush1.bf16.msra.mxu0 0
      %1664 = vmatprep.subr.bf16.mxu0 0
      %1665 = vmatpush1.bf16.msra.mxu0 0
      %1666 = vmatprep.subr.bf16.mxu0 0
      %1667 = vmatpush1.bf16.msra.mxu0 0
      %1668 = vmatprep.subr.bf16.mxu0 0
      %1669 = vmatpush1.bf16.msra.mxu0 0
      %1670 = vmatprep.mubr.bf16.mxu0 0
      %1671 = vmatmul.mubr.bf16.gmra.mrb[0].mxu0 %v1588
      %v1672 = vpop.f32.mrb[0].mxu0
      %v1673 = vadd.f32 %v1253, %v1672
      %v1674 = vpop.f32.mrb[0].mxu0
      %v1675 = vpop.f32.mrb[0].mxu0
      %v1676 = vadd.f32 %v1256, %v1675
      %v1677 = vpop.f32.mrb[0].mxu0
      %1678 = vmatprep.mubr.bf16.mxu0 0
      %1679 = vmatmul.mubr.bf16.gmra.mrb[0].mxu0 %v1591
      %v1680 = vpop.f32.mrb[0].mxu0
      %v1681 = vadd.f32 %v1261, %v1680
      %v1682 = vpop.f32.mrb[0].mxu0
      %v1683 = vpop.f32.mrb[0].mxu0
      %v1684 = vadd.f32 %v1264, %v1683
      %v1685 = vpop.f32.mrb[0].mxu0
      %1686 = vmatprep.mubr.bf16.mxu0 0
      %1687 = vmatmul.mubr.bf16.gmra.mrb[0].mxu0 %v1594
      %v1688 = vpop.f32.mrb[0].mxu0
      %v1689 = vadd.f32 %v1269, %v1688
      %v1690 = vpop.f32.mrb[0].mxu0
      %v1691 = vpop.f32.mrb[0].mxu0
      %v1692 = vadd.f32 %v1272, %v1691
      %v1693 = vpop.f32.mrb[0].mxu0
      %1694 = vmatprep.mubr.bf16.mxu0 0
      %1695 = vmatmul.mubr.bf16.gmra.mrb[0].mxu0 %v1597
      %v1696 = vpop.f32.mrb[0].mxu0
      %v1697 = vadd.f32 %v1277, %v1696
      %v1698 = vpop.f32.mrb[0].mxu0
      %v1699 = vpop.f32.mrb[0].mxu0
      %v1700 = vadd.f32 %v1280, %v1699
      %v1701 = vpop.f32.mrb[0].mxu0
      %1702 = vmatprep.mubr.bf16.mxu0 0
      %1703 = vmatmul.mubr.bf16.gmra.mrb[0].mxu0 %v1600
      %v1704 = vpop.f32.mrb[0].mxu0
      %v1705 = vadd.f32 %v1285, %v1704
      %v1706 = vpop.f32.mrb[0].mxu0
      %v1707 = vpop.f32.mrb[0].mxu0
      %v1708 = vadd.f32 %v1288, %v1707
      %v1709 = vpop.f32.mrb[0].mxu0
      %1710 = vmatprep.mubr.bf16.mxu0 0
      %1711 = vmatmul.mubr.bf16.gmra.mrb[0].mxu0 %v1603
      %v1712 = vpop.f32.mrb[0].mxu0
      %v1713 = vadd.f32 %v1293, %v1712
      %v1714 = vpop.f32.mrb[0].mxu0
      %v1715 = vpop.f32.mrb[0].mxu0
      %v1716 = vadd.f32 %v1296, %v1715
      %v1717 = vpop.f32.mrb[0].mxu0
      %1718 = vmatprep.mubr.bf16.mxu0 0
      %1719 = vmatmul.mubr.bf16.gmra.mrb[0].mxu0 %v1606
      %v1720 = vpop.f32.mrb[0].mxu0
      %v1721 = vadd.f32 %v1301, %v1720
      %v1722 = vpop.f32.mrb[0].mxu0
      %v1723 = vpop.f32.mrb[0].mxu0
      %v1724 = vadd.f32 %v1304, %v1723
      %v1725 = vpop.f32.mrb[0].mxu0
      %1726 = vmatprep.mubr.bf16.mxu0 0
      %1727 = vmatmul.mubr.bf16.gmra.mrb[0].mxu0 %v1609
      %v1728 = vpop.f32.mrb[0].mxu0
      %v1729 = vadd.f32 %v1309, %v1728
      %v1730 = vpop.f32.mrb[0].mxu0
      %v1731 = vpop.f32.mrb[0].mxu0
      %v1732 = vadd.f32 %v1312, %v1731
      %v1733 = vpop.f32.mrb[0].mxu0
      %1734 = vmatprep.mubr.bf16.mxu0 0
      %1735 = vmatmul.mubr.bf16.gmra.mrb[0].mxu0 %v1612
      %v1736 = vpop.f32.mrb[0].mxu0
      %v1737 = vadd.f32 %v1317, %v1736
      %v1738 = vpop.f32.mrb[0].mxu0
      %v1739 = vpop.f32.mrb[0].mxu0
      %v1740 = vadd.f32 %v1320, %v1739
      %v1741 = vpop.f32.mrb[0].mxu0
      %1742 = vmatprep.mubr.bf16.mxu0 0
      %1743 = vmatmul.mubr.bf16.gmra.mrb[0].mxu0 %v1615
      %v1744 = vpop.f32.mrb[0].mxu0
      %v1745 = vadd.f32 %v1325, %v1744
      %v1746 = vpop.f32.mrb[0].mxu0
      %v1747 = vpop.f32.mrb[0].mxu0
      %v1748 = vadd.f32 %v1328, %v1747
      %v1749 = vpop.f32.mrb[0].mxu0
      %1750 = vmatprep.mubr.bf16.mxu0 0
      %1751 = vmatmul.mubr.bf16.gmra.mrb[0].mxu0 %v1618
      %v1752 = vpop.f32.mrb[0].mxu0
      %v1753 = vadd.f32 %v1333, %v1752
      %v1754 = vpop.f32.mrb[0].mxu0
      %v1755 = vpop.f32.mrb[0].mxu0
      %v1756 = vadd.f32 %v1336, %v1755
      %v1757 = vpop.f32.mrb[0].mxu0
      %1758 = vmatprep.mubr.bf16.mxu0 0
      %1759 = vmatmul.mubr.bf16.gmra.mrb[0].mxu0 %v1621
      %v1760 = vpop.f32.mrb[0].mxu0
      %v1761 = vadd.f32 %v1341, %v1760
      %v1762 = vpop.f32.mrb[0].mxu0
      %v1763 = vpop.f32.mrb[0].mxu0
      %v1764 = vadd.f32 %v1344, %v1763
      %v1765 = vpop.f32.mrb[0].mxu0
      %1766 = vmatprep.mubr.bf16.mxu0 0
      %1767 = vmatmul.mubr.bf16.gmra.mrb[0].mxu0 %v1624
      %v1768 = vpop.f32.mrb[0].mxu0
      %v1769 = vadd.f32 %v1349, %v1768
      %v1770 = vpop.f32.mrb[0].mxu0
      %v1771 = vpop.f32.mrb[0].mxu0
      %v1772 = vadd.f32 %v1352, %v1771
      %v1773 = vpop.f32.mrb[0].mxu0
      %1774 = vmatprep.mubr.bf16.mxu0 0
      %1775 = vmatmul.mubr.bf16.gmra.mrb[0].mxu0 %v1627
      %v1776 = vpop.f32.mrb[0].mxu0
      %v1777 = vadd.f32 %v1357, %v1776
      %v1778 = vpop.f32.mrb[0].mxu0
      %v1779 = vpop.f32.mrb[0].mxu0
      %v1780 = vadd.f32 %v1360, %v1779
      %v1781 = vpop.f32.mrb[0].mxu0
      %1782 = vmatprep.mubr.bf16.mxu0 0
      %1783 = vmatmul.mubr.bf16.gmra.mrb[0].mxu0 %v1630
      %v1784 = vpop.f32.mrb[0].mxu0
      %v1785 = vadd.f32 %v1365, %v1784
      %v1786 = vpop.f32.mrb[0].mxu0
      %v1787 = vpop.f32.mrb[0].mxu0
      %v1788 = vadd.f32 %v1368, %v1787
      %v1789 = vpop.f32.mrb[0].mxu0
      %1790 = vmatprep.mubr.bf16.mxu0 0
      %1791 = vmatmul.mubr.bf16.gmra.mrb[0].mxu0 %v1633
      %v1792 = vpop.f32.mrb[0].mxu0
      %v1793 = vpop.f32.mrb[0].mxu0
      %v1794 = vpop.f32.mrb[0].mxu0
      %v1795 = vpop.f32.mrb[0].mxu0
      %1796 = vdwg.mxu0
      %v1797 = vadd.f32 %v1673, %v1463
      %v1798 = vadd.f32 %v1676, %v1466
      %v1799 = vadd.f32 %v1681, %v1471
      %v1800 = vadd.f32 %v1684, %v1474
      %v1801 = vadd.f32 %v1689, %v1479
      %v1802 = vadd.f32 %v1692, %v1482
      %v1803 = vadd.f32 %v1697, %v1487
      %v1804 = vadd.f32 %v1700, %v1490
      %v1805 = vadd.f32 %v1705, %v1495
      %v1806 = vadd.f32 %v1708, %v1498
      %v1807 = vadd.f32 %v1713, %v1503
      %v1808 = vadd.f32 %v1716, %v1506
      %v1809 = vadd.f32 %v1721, %v1511
      %v1810 = vadd.f32 %v1724, %v1514
      %v1811 = vadd.f32 %v1729, %v1519
      %v1812 = vadd.f32 %v1732, %v1522
      %v1813 = vadd.f32 %v1737, %v1527
      %v1814 = vadd.f32 %v1740, %v1530
      %v1815 = vadd.f32 %v1745, %v1535
      %v1816 = vadd.f32 %v1748, %v1538
      %v1817 = vadd.f32 %v1753, %v1543
      %v1818 = vadd.f32 %v1756, %v1546
      %v1819 = vadd.f32 %v1761, %v1551
      %v1820 = vadd.f32 %v1764, %v1554
      %v1821 = vadd.f32 %v1769, %v1559
      %v1822 = vadd.f32 %v1772, %v1562
      %v1823 = vadd.f32 %v1777, %v1567
      %v1824 = vadd.f32 %v1780, %v1570
      %v1825 = vadd.f32 %v1785, %v1575
      %v1826 = vadd.f32 %v1788, %v1578
      %s1827 = scalar_lea.vmem %s1, 12
      %v1828 = vld [vmem:[%s1827] sm:$0xf]
      %v1829 = vld [vmem:[%s1827 + $0x4] sm:$0xf]
      %v1830 = vld [vmem:[%s1827 + $0x8] sm:$0xf]
      %v1832 = vsel %vm1214, %v1829, 0
      %1834 = vmatprep.subr.bf16.mxu0 0
      %1835 = vmatpush1.bf16.msra.mxu0 %v1832
      %1836 = vmatprep.subr.bf16.mxu0 0
      %1837 = vmatpush1.bf16.msra.mxu0 0
      %1838 = vmatprep.subr.bf16.mxu0 0
      %1839 = vmatpush1.bf16.msra.mxu0 0
      %1840 = vmatprep.subr.bf16.mxu0 0
      %1841 = vmatpush1.bf16.msra.mxu0 0
      %1842 = vmatprep.subr.bf16.mxu0 0
      %1843 = vmatpush1.bf16.msra.mxu0 0
      %1844 = vmatprep.subr.bf16.mxu0 0
      %1845 = vmatpush1.bf16.msra.mxu0 0
      %1846 = vmatprep.subr.bf16.mxu0 0
      %1847 = vmatpush1.bf16.msra.mxu0 0
      %1848 = vmatprep.subr.bf16.mxu0 0
      %1849 = vmatpush1.bf16.msra.mxu0 0
      %1850 = vmatprep.subr.bf16.mxu0 0
      %1851 = vmatpush1.bf16.msra.mxu0 0
      %1852 = vmatprep.subr.bf16.mxu0 0
      %1853 = vmatpush1.bf16.msra.mxu0 0
      %1854 = vmatprep.subr.bf16.mxu0 0
      %1855 = vmatpush1.bf16.msra.mxu0 0
      %1856 = vmatprep.subr.bf16.mxu0 0
      %1857 = vmatpush1.bf16.msra.mxu0 0
      %1858 = vmatprep.subr.bf16.mxu0 0
      %1859 = vmatpush1.bf16.msra.mxu0 0
      %1860 = vmatprep.subr.bf16.mxu0 0
      %1861 = vmatpush1.bf16.msra.mxu0 0
      %1862 = vmatprep.subr.bf16.mxu0 0
      %1863 = vmatpush1.bf16.msra.mxu0 0
      %1864 = vmatprep.subr.bf16.mxu0 0
      %1865 = vmatpush1.bf16.msra.mxu0 0
      %1866 = vmatprep.mubr.bf16.mxu0 0
      %1867 = vmatmul.mubr.bf16.gmra.mrb[0].mxu0 %v1182
      %v1868 = vpop.f32.mrb[0].mxu0
      %v1869 = vadd.f32 0.0, %v1868
      %v1870 = vpop.f32.mrb[0].mxu0
      %v1871 = vpop.f32.mrb[0].mxu0
      %v1872 = vadd.f32 0.0, %v1871
      %v1873 = vpop.f32.mrb[0].mxu0
      %1874 = vmatprep.mubr.bf16.mxu0 0
      %1875 = vmatmul.mubr.bf16.gmra.mrb[0].mxu0 %v1184
      %v1876 = vpop.f32.mrb[0].mxu0
      %v1877 = vadd.f32 0.0, %v1876
      %v1878 = vpop.f32.mrb[0].mxu0
      %v1879 = vpop.f32.mrb[0].mxu0
      %v1880 = vadd.f32 0.0, %v1879
      %v1881 = vpop.f32.mrb[0].mxu0
      %1882 = vmatprep.mubr.bf16.mxu0 0
      %1883 = vmatmul.mubr.bf16.gmra.mrb[0].mxu0 %v1186
      %v1884 = vpop.f32.mrb[0].mxu0
      %v1885 = vadd.f32 0.0, %v1884
      %v1886 = vpop.f32.mrb[0].mxu0
      %v1887 = vpop.f32.mrb[0].mxu0
      %v1888 = vadd.f32 0.0, %v1887
      %v1889 = vpop.f32.mrb[0].mxu0
      %1890 = vmatprep.mubr.bf16.mxu0 0
      %1891 = vmatmul.mubr.bf16.gmra.mrb[0].mxu0 %v1188
      %v1892 = vpop.f32.mrb[0].mxu0
      %v1893 = vadd.f32 0.0, %v1892
      %v1894 = vpop.f32.mrb[0].mxu0
      %v1895 = vpop.f32.mrb[0].mxu0
      %v1896 = vadd.f32 0.0, %v1895
      %v1897 = vpop.f32.mrb[0].mxu0
      %1898 = vmatprep.mubr.bf16.mxu0 0
      %1899 = vmatmul.mubr.bf16.gmra.mrb[0].mxu0 %v1190
      %v1900 = vpop.f32.mrb[0].mxu0
      %v1901 = vadd.f32 0.0, %v1900
      %v1902 = vpop.f32.mrb[0].mxu0
      %v1903 = vpop.f32.mrb[0].mxu0
      %v1904 = vadd.f32 0.0, %v1903
      %v1905 = vpop.f32.mrb[0].mxu0
      %1906 = vmatprep.mubr.bf16.mxu0 0
      %1907 = vmatmul.mubr.bf16.gmra.mrb[0].mxu0 %v1192
      %v1908 = vpop.f32.mrb[0].mxu0
      %v1909 = vadd.f32 0.0, %v1908
      %v1910 = vpop.f32.mrb[0].mxu0
      %v1911 = vpop.f32.mrb[0].mxu0
      %v1912 = vadd.f32 0.0, %v1911
      %v1913 = vpop.f32.mrb[0].mxu0
      %1914 = vmatprep.mubr.bf16.mxu0 0
      %1915 = vmatmul.mubr.bf16.gmra.mrb[0].mxu0 %v1194
      %v1916 = vpop.f32.mrb[0].mxu0
      %v1917 = vadd.f32 0.0, %v1916
      %v1918 = vpop.f32.mrb[0].mxu0
      %v1919 = vpop.f32.mrb[0].mxu0
      %v1920 = vadd.f32 0.0, %v1919
      %v1921 = vpop.f32.mrb[0].mxu0
      %1922 = vmatprep.mubr.bf16.mxu0 0
      %1923 = vmatmul.mubr.bf16.gmra.mrb[0].mxu0 %v1196
      %v1924 = vpop.f32.mrb[0].mxu0
      %v1925 = vadd.f32 0.0, %v1924
      %v1926 = vpop.f32.mrb[0].mxu0
      %v1927 = vpop.f32.mrb[0].mxu0
      %v1928 = vadd.f32 0.0, %v1927
      %v1929 = vpop.f32.mrb[0].mxu0
      %1930 = vmatprep.mubr.bf16.mxu0 0
      %1931 = vmatmul.mubr.bf16.gmra.mrb[0].mxu0 %v1198
      %v1932 = vpop.f32.mrb[0].mxu0
      %v1933 = vadd.f32 0.0, %v1932
      %v1934 = vpop.f32.mrb[0].mxu0
      %v1935 = vpop.f32.mrb[0].mxu0
      %v1936 = vadd.f32 0.0, %v1935
      %v1937 = vpop.f32.mrb[0].mxu0
      %1938 = vmatprep.mubr.bf16.mxu0 0
      %1939 = vmatmul.mubr.bf16.gmra.mrb[0].mxu0 %v1200
      %v1940 = vpop.f32.mrb[0].mxu0
      %v1941 = vadd.f32 0.0, %v1940
      %v1942 = vpop.f32.mrb[0].mxu0
      %v1943 = vpop.f32.mrb[0].mxu0
      %v1944 = vadd.f32 0.0, %v1943
      %v1945 = vpop.f32.mrb[0].mxu0
      %1946 = vmatprep.mubr.bf16.mxu0 0
      %1947 = vmatmul.mubr.bf16.gmra.mrb[0].mxu0 %v1202
      %v1948 = vpop.f32.mrb[0].mxu0
      %v1949 = vadd.f32 0.0, %v1948
      %v1950 = vpop.f32.mrb[0].mxu0
      %v1951 = vpop.f32.mrb[0].mxu0
      %v1952 = vadd.f32 0.0, %v1951
      %v1953 = vpop.f32.mrb[0].mxu0
      %1954 = vmatprep.mubr.bf16.mxu0 0
      %1955 = vmatmul.mubr.bf16.gmra.mrb[0].mxu0 %v1204
      %v1956 = vpop.f32.mrb[0].mxu0
      %v1957 = vadd.f32 0.0, %v1956
      %v1958 = vpop.f32.mrb[0].mxu0
      %v1959 = vpop.f32.mrb[0].mxu0
      %v1960 = vadd.f32 0.0, %v1959
      %v1961 = vpop.f32.mrb[0].mxu0
      %1962 = vmatprep.mubr.bf16.mxu0 0
      %1963 = vmatmul.mubr.bf16.gmra.mrb[0].mxu0 %v1206
      %v1964 = vpop.f32.mrb[0].mxu0
      %v1965 = vadd.f32 0.0, %v1964
      %v1966 = vpop.f32.mrb[0].mxu0
      %v1967 = vpop.f32.mrb[0].mxu0
      %v1968 = vadd.f32 0.0, %v1967
      %v1969 = vpop.f32.mrb[0].mxu0
      %1970 = vmatprep.mubr.bf16.mxu0 0
      %1971 = vmatmul.mubr.bf16.gmra.mrb[0].mxu0 %v1208
      %v1972 = vpop.f32.mrb[0].mxu0
      %v1973 = vadd.f32 0.0, %v1972
      %v1974 = vpop.f32.mrb[0].mxu0
      %v1975 = vpop.f32.mrb[0].mxu0
      %v1976 = vadd.f32 0.0, %v1975
      %v1977 = vpop.f32.mrb[0].mxu0
      %1978 = vmatprep.mubr.bf16.mxu0 0
      %1979 = vmatmul.mubr.bf16.gmra.mrb[0].mxu0 %v1210
      %v1980 = vpop.f32.mrb[0].mxu0
      %v1981 = vadd.f32 0.0, %v1980
      %v1982 = vpop.f32.mrb[0].mxu0
      %v1983 = vpop.f32.mrb[0].mxu0
      %v1984 = vadd.f32 0.0, %v1983
      %v1985 = vpop.f32.mrb[0].mxu0
      %1986 = vmatprep.mubr.bf16.mxu0 0
      %1987 = vmatmul.mubr.bf16.gmra.mrb[0].mxu0 %v1212
      %v1988 = vpop.f32.mrb[0].mxu0
      %v1989 = vadd.f32 0.0, %v1988
      %v1990 = vpop.f32.mrb[0].mxu0
      %v1991 = vpop.f32.mrb[0].mxu0
      %v1992 = vadd.f32 0.0, %v1991
      %v1993 = vpop.f32.mrb[0].mxu0
      %1994 = vdwg.mxu0
      %v1996 = vsel %vm1214, %v1830, 0
      %1998 = vmatprep.subr.bf16.mxu0 0
      %1999 = vmatpush1.bf16.msra.mxu0 %v1996
      %2000 = vmatprep.subr.bf16.mxu0 0
      %2001 = vmatpush1.bf16.msra.mxu0 0
      %2002 = vmatprep.subr.bf16.mxu0 0
      %2003 = vmatpush1.bf16.msra.mxu0 0
      %2004 = vmatprep.subr.bf16.mxu0 0
      %2005 = vmatpush1.bf16.msra.mxu0 0
      %2006 = vmatprep.subr.bf16.mxu0 0
      %2007 = vmatpush1.bf16.msra.mxu0 0
      %2008 = vmatprep.subr.bf16.mxu0 0
      %2009 = vmatpush1.bf16.msra.mxu0 0
      %2010 = vmatprep.subr.bf16.mxu0 0
      %2011 = vmatpush1.bf16.msra.mxu0 0
      %2012 = vmatprep.subr.bf16.mxu0 0
      %2013 = vmatpush1.bf16.msra.mxu0 0
      %2014 = vmatprep.subr.bf16.mxu0 0
      %2015 = vmatpush1.bf16.msra.mxu0 0
      %2016 = vmatprep.subr.bf16.mxu0 0
      %2017 = vmatpush1.bf16.msra.mxu0 0
      %2018 = vmatprep.subr.bf16.mxu0 0
      %2019 = vmatpush1.bf16.msra.mxu0 0
      %2020 = vmatprep.subr.bf16.mxu0 0
      %2021 = vmatpush1.bf16.msra.mxu0 0
      %2022 = vmatprep.subr.bf16.mxu0 0
      %2023 = vmatpush1.bf16.msra.mxu0 0
      %2024 = vmatprep.subr.bf16.mxu0 0
      %2025 = vmatpush1.bf16.msra.mxu0 0
      %2026 = vmatprep.subr.bf16.mxu0 0
      %2027 = vmatpush1.bf16.msra.mxu0 0
      %2028 = vmatprep.subr.bf16.mxu0 0
      %2029 = vmatpush1.bf16.msra.mxu0 0
      %2030 = vmatprep.mubr.bf16.mxu0 0
      %2031 = vmatmul.mubr.bf16.gmra.mrb[0].mxu0 %v1378
      %v2032 = vpop.f32.mrb[0].mxu0
      %v2033 = vadd.f32 0.0, %v2032
      %v2034 = vpop.f32.mrb[0].mxu0
      %v2035 = vpop.f32.mrb[0].mxu0
      %v2036 = vadd.f32 0.0, %v2035
      %v2037 = vpop.f32.mrb[0].mxu0
      %2038 = vmatprep.mubr.bf16.mxu0 0
      %2039 = vmatmul.mubr.bf16.gmra.mrb[0].mxu0 %v1381
      %v2040 = vpop.f32.mrb[0].mxu0
      %v2041 = vadd.f32 0.0, %v2040
      %v2042 = vpop.f32.mrb[0].mxu0
      %v2043 = vpop.f32.mrb[0].mxu0
      %v2044 = vadd.f32 0.0, %v2043
      %v2045 = vpop.f32.mrb[0].mxu0
      %2046 = vmatprep.mubr.bf16.mxu0 0
      %2047 = vmatmul.mubr.bf16.gmra.mrb[0].mxu0 %v1384
      %v2048 = vpop.f32.mrb[0].mxu0
      %v2049 = vadd.f32 0.0, %v2048
      %v2050 = vpop.f32.mrb[0].mxu0
      %v2051 = vpop.f32.mrb[0].mxu0
      %v2052 = vadd.f32 0.0, %v2051
      %v2053 = vpop.f32.mrb[0].mxu0
      %2054 = vmatprep.mubr.bf16.mxu0 0
      %2055 = vmatmul.mubr.bf16.gmra.mrb[0].mxu0 %v1387
      %v2056 = vpop.f32.mrb[0].mxu0
      %v2057 = vadd.f32 0.0, %v2056
      %v2058 = vpop.f32.mrb[0].mxu0
      %v2059 = vpop.f32.mrb[0].mxu0
      %v2060 = vadd.f32 0.0, %v2059
      %v2061 = vpop.f32.mrb[0].mxu0
      %2062 = vmatprep.mubr.bf16.mxu0 0
      %2063 = vmatmul.mubr.bf16.gmra.mrb[0].mxu0 %v1390
      %v2064 = vpop.f32.mrb[0].mxu0
      %v2065 = vadd.f32 0.0, %v2064
      %v2066 = vpop.f32.mrb[0].mxu0
      %v2067 = vpop.f32.mrb[0].mxu0
      %v2068 = vadd.f32 0.0, %v2067
      %v2069 = vpop.f32.mrb[0].mxu0
      %2070 = vmatprep.mubr.bf16.mxu0 0
      %2071 = vmatmul.mubr.bf16.gmra.mrb[0].mxu0 %v1393
      %v2072 = vpop.f32.mrb[0].mxu0
      %v2073 = vadd.f32 0.0, %v2072
      %v2074 = vpop.f32.mrb[0].mxu0
      %v2075 = vpop.f32.mrb[0].mxu0
      %v2076 = vadd.f32 0.0, %v2075
      %v2077 = vpop.f32.mrb[0].mxu0
      %2078 = vmatprep.mubr.bf16.mxu0 0
      %2079 = vmatmul.mubr.bf16.gmra.mrb[0].mxu0 %v1396
      %v2080 = vpop.f32.mrb[0].mxu0
      %v2081 = vadd.f32 0.0, %v2080
      %v2082 = vpop.f32.mrb[0].mxu0
      %v2083 = vpop.f32.mrb[0].mxu0
      %v2084 = vadd.f32 0.0, %v2083
      %v2085 = vpop.f32.mrb[0].mxu0
      %2086 = vmatprep.mubr.bf16.mxu0 0
      %2087 = vmatmul.mubr.bf16.gmra.mrb[0].mxu0 %v1399
      %v2088 = vpop.f32.mrb[0].mxu0
      %v2089 = vadd.f32 0.0, %v2088
      %v2090 = vpop.f32.mrb[0].mxu0
      %v2091 = vpop.f32.mrb[0].mxu0
      %v2092 = vadd.f32 0.0, %v2091
      %v2093 = vpop.f32.mrb[0].mxu0
      %2094 = vmatprep.mubr.bf16.mxu0 0
      %2095 = vmatmul.mubr.bf16.gmra.mrb[0].mxu0 %v1402
      %v2096 = vpop.f32.mrb[0].mxu0
      %v2097 = vadd.f32 0.0, %v2096
      %v2098 = vpop.f32.mrb[0].mxu0
      %v2099 = vpop.f32.mrb[0].mxu0
      %v2100 = vadd.f32 0.0, %v2099
      %v2101 = vpop.f32.mrb[0].mxu0
      %2102 = vmatprep.mubr.bf16.mxu0 0
      %2103 = vmatmul.mubr.bf16.gmra.mrb[0].mxu0 %v1405
      %v2104 = vpop.f32.mrb[0].mxu0
      %v2105 = vadd.f32 0.0, %v2104
      %v2106 = vpop.f32.mrb[0].mxu0
      %v2107 = vpop.f32.mrb[0].mxu0
      %v2108 = vadd.f32 0.0, %v2107
      %v2109 = vpop.f32.mrb[0].mxu0
      %2110 = vmatprep.mubr.bf16.mxu0 0
      %2111 = vmatmul.mubr.bf16.gmra.mrb[0].mxu0 %v1408
      %v2112 = vpop.f32.mrb[0].mxu0
      %v2113 = vadd.f32 0.0, %v2112
      %v2114 = vpop.f32.mrb[0].mxu0
      %v2115 = vpop.f32.mrb[0].mxu0
      %v2116 = vadd.f32 0.0, %v2115
      %v2117 = vpop.f32.mrb[0].mxu0
      %2118 = vmatprep.mubr.bf16.mxu0 0
      %2119 = vmatmul.mubr.bf16.gmra.mrb[0].mxu0 %v1411
      %v2120 = vpop.f32.mrb[0].mxu0
      %v2121 = vadd.f32 0.0, %v2120
      %v2122 = vpop.f32.mrb[0].mxu0
      %v2123 = vpop.f32.mrb[0].mxu0
      %v2124 = vadd.f32 0.0, %v2123
      %v2125 = vpop.f32.mrb[0].mxu0
      %2126 = vmatprep.mubr.bf16.mxu0 0
      %2127 = vmatmul.mubr.bf16.gmra.mrb[0].mxu0 %v1414
      %v2128 = vpop.f32.mrb[0].mxu0
      %v2129 = vadd.f32 0.0, %v2128
      %v2130 = vpop.f32.mrb[0].mxu0
      %v2131 = vpop.f32.mrb[0].mxu0
      %v2132 = vadd.f32 0.0, %v2131
      %v2133 = vpop.f32.mrb[0].mxu0
      %2134 = vmatprep.mubr.bf16.mxu0 0
      %2135 = vmatmul.mubr.bf16.gmra.mrb[0].mxu0 %v1417
      %v2136 = vpop.f32.mrb[0].mxu0
      %v2137 = vadd.f32 0.0, %v2136
      %v2138 = vpop.f32.mrb[0].mxu0
      %v2139 = vpop.f32.mrb[0].mxu0
      %v2140 = vadd.f32 0.0, %v2139
      %v2141 = vpop.f32.mrb[0].mxu0
      %2142 = vmatprep.mubr.bf16.mxu0 0
      %2143 = vmatmul.mubr.bf16.gmra.mrb[0].mxu0 %v1420
      %v2144 = vpop.f32.mrb[0].mxu0
      %v2145 = vadd.f32 0.0, %v2144
      %v2146 = vpop.f32.mrb[0].mxu0
      %v2147 = vpop.f32.mrb[0].mxu0
      %v2148 = vadd.f32 0.0, %v2147
      %v2149 = vpop.f32.mrb[0].mxu0
      %2150 = vmatprep.mubr.bf16.mxu0 0
      %2151 = vmatmul.mubr.bf16.gmra.mrb[0].mxu0 %v1423
      %v2152 = vpop.f32.mrb[0].mxu0
      %v2153 = vadd.f32 0.0, %v2152
      %v2154 = vpop.f32.mrb[0].mxu0
      %v2155 = vpop.f32.mrb[0].mxu0
      %v2156 = vadd.f32 0.0, %v2155
      %v2157 = vpop.f32.mrb[0].mxu0
      %2158 = vdwg.mxu0
      %v2160 = vsel %vm1214, %v1828, 0
      %2162 = vmatprep.subr.bf16.mxu0 0
      %2163 = vmatpush1.bf16.msra.mxu0 %v2160
      %2164 = vmatprep.subr.bf16.mxu0 0
      %2165 = vmatpush1.bf16.msra.mxu0 0
      %2166 = vmatprep.subr.bf16.mxu0 0
      %2167 = vmatpush1.bf16.msra.mxu0 0
      %2168 = vmatprep.subr.bf16.mxu0 0
      %2169 = vmatpush1.bf16.msra.mxu0 0
      %2170 = vmatprep.subr.bf16.mxu0 0
      %2171 = vmatpush1.bf16.msra.mxu0 0
      %2172 = vmatprep.subr.bf16.mxu0 0
      %2173 = vmatpush1.bf16.msra.mxu0 0
      %2174 = vmatprep.subr.bf16.mxu0 0
      %2175 = vmatpush1.bf16.msra.mxu0 0
      %2176 = vmatprep.subr.bf16.mxu0 0
      %2177 = vmatpush1.bf16.msra.mxu0 0
      %2178 = vmatprep.subr.bf16.mxu0 0
      %2179 = vmatpush1.bf16.msra.mxu0 0
      %2180 = vmatprep.subr.bf16.mxu0 0
      %2181 = vmatpush1.bf16.msra.mxu0 0
      %2182 = vmatprep.subr.bf16.mxu0 0
      %2183 = vmatpush1.bf16.msra.mxu0 0
      %2184 = vmatprep.subr.bf16.mxu0 0
      %2185 = vmatpush1.bf16.msra.mxu0 0
      %2186 = vmatprep.subr.bf16.mxu0 0
      %2187 = vmatpush1.bf16.msra.mxu0 0
      %2188 = vmatprep.subr.bf16.mxu0 0
      %2189 = vmatpush1.bf16.msra.mxu0 0
      %2190 = vmatprep.subr.bf16.mxu0 0
      %2191 = vmatpush1.bf16.msra.mxu0 0
      %2192 = vmatprep.subr.bf16.mxu0 0
      %2193 = vmatpush1.bf16.msra.mxu0 0
      %2194 = vmatprep.mubr.bf16.mxu0 0
      %2195 = vmatmul.mubr.bf16.gmra.mrb[0].mxu0 %v1588
      %v2196 = vpop.f32.mrb[0].mxu0
      %v2197 = vadd.f32 %v1869, %v2196
      %v2198 = vpop.f32.mrb[0].mxu0
      %v2199 = vpop.f32.mrb[0].mxu0
      %v2200 = vadd.f32 %v1872, %v2199
      %v2201 = vpop.f32.mrb[0].mxu0
      %2202 = vmatprep.mubr.bf16.mxu0 0
      %2203 = vmatmul.mubr.bf16.gmra.mrb[0].mxu0 %v1591
      %v2204 = vpop.f32.mrb[0].mxu0
      %v2205 = vadd.f32 %v1877, %v2204
      %v2206 = vpop.f32.mrb[0].mxu0
      %v2207 = vpop.f32.mrb[0].mxu0
      %v2208 = vadd.f32 %v1880, %v2207
      %v2209 = vpop.f32.mrb[0].mxu0
      %2210 = vmatprep.mubr.bf16.mxu0 0
      %2211 = vmatmul.mubr.bf16.gmra.mrb[0].mxu0 %v1594
      %v2212 = vpop.f32.mrb[0].mxu0
      %v2213 = vadd.f32 %v1885, %v2212
      %v2214 = vpop.f32.mrb[0].mxu0
      %v2215 = vpop.f32.mrb[0].mxu0
      %v2216 = vadd.f32 %v1888, %v2215
      %v2217 = vpop.f32.mrb[0].mxu0
      %2218 = vmatprep.mubr.bf16.mxu0 0
      %2219 = vmatmul.mubr.bf16.gmra.mrb[0].mxu0 %v1597
      %v2220 = vpop.f32.mrb[0].mxu0
      %v2221 = vadd.f32 %v1893, %v2220
      %v2222 = vpop.f32.mrb[0].mxu0
      %v2223 = vpop.f32.mrb[0].mxu0
      %v2224 = vadd.f32 %v1896, %v2223
      %v2225 = vpop.f32.mrb[0].mxu0
      %2226 = vmatprep.mubr.bf16.mxu0 0
      %2227 = vmatmul.mubr.bf16.gmra.mrb[0].mxu0 %v1600
      %v2228 = vpop.f32.mrb[0].mxu0
      %v2229 = vadd.f32 %v1901, %v2228
      %v2230 = vpop.f32.mrb[0].mxu0
      %v2231 = vpop.f32.mrb[0].mxu0
      %v2232 = vadd.f32 %v1904, %v2231
      %v2233 = vpop.f32.mrb[0].mxu0
      %2234 = vmatprep.mubr.bf16.mxu0 0
      %2235 = vmatmul.mubr.bf16.gmra.mrb[0].mxu0 %v1603
      %v2236 = vpop.f32.mrb[0].mxu0
      %v2237 = vadd.f32 %v1909, %v2236
      %v2238 = vpop.f32.mrb[0].mxu0
      %v2239 = vpop.f32.mrb[0].mxu0
      %v2240 = vadd.f32 %v1912, %v2239
      %v2241 = vpop.f32.mrb[0].mxu0
      %2242 = vmatprep.mubr.bf16.mxu0 0
      %2243 = vmatmul.mubr.bf16.gmra.mrb[0].mxu0 %v1606
      %v2244 = vpop.f32.mrb[0].mxu0
      %v2245 = vadd.f32 %v1917, %v2244
      %v2246 = vpop.f32.mrb[0].mxu0
      %v2247 = vpop.f32.mrb[0].mxu0
      %v2248 = vadd.f32 %v1920, %v2247
      %v2249 = vpop.f32.mrb[0].mxu0
      %2250 = vmatprep.mubr.bf16.mxu0 0
      %2251 = vmatmul.mubr.bf16.gmra.mrb[0].mxu0 %v1609
      %v2252 = vpop.f32.mrb[0].mxu0
      %v2253 = vadd.f32 %v1925, %v2252
      %v2254 = vpop.f32.mrb[0].mxu0
      %v2255 = vpop.f32.mrb[0].mxu0
      %v2256 = vadd.f32 %v1928, %v2255
      %v2257 = vpop.f32.mrb[0].mxu0
      %2258 = vmatprep.mubr.bf16.mxu0 0
      %2259 = vmatmul.mubr.bf16.gmra.mrb[0].mxu0 %v1612
      %v2260 = vpop.f32.mrb[0].mxu0
      %v2261 = vadd.f32 %v1933, %v2260
      %v2262 = vpop.f32.mrb[0].mxu0
      %v2263 = vpop.f32.mrb[0].mxu0
      %v2264 = vadd.f32 %v1936, %v2263
      %v2265 = vpop.f32.mrb[0].mxu0
      %2266 = vmatprep.mubr.bf16.mxu0 0
      %2267 = vmatmul.mubr.bf16.gmra.mrb[0].mxu0 %v1615
      %v2268 = vpop.f32.mrb[0].mxu0
      %v2269 = vadd.f32 %v1941, %v2268
      %v2270 = vpop.f32.mrb[0].mxu0
      %v2271 = vpop.f32.mrb[0].mxu0
      %v2272 = vadd.f32 %v1944, %v2271
      %v2273 = vpop.f32.mrb[0].mxu0
      %2274 = vmatprep.mubr.bf16.mxu0 0
      %2275 = vmatmul.mubr.bf16.gmra.mrb[0].mxu0 %v1618
      %v2276 = vpop.f32.mrb[0].mxu0
      %v2277 = vadd.f32 %v1949, %v2276
      %v2278 = vpop.f32.mrb[0].mxu0
      %v2279 = vpop.f32.mrb[0].mxu0
      %v2280 = vadd.f32 %v1952, %v2279
      %v2281 = vpop.f32.mrb[0].mxu0
      %2282 = vmatprep.mubr.bf16.mxu0 0
      %2283 = vmatmul.mubr.bf16.gmra.mrb[0].mxu0 %v1621
      %v2284 = vpop.f32.mrb[0].mxu0
      %v2285 = vadd.f32 %v1957, %v2284
      %v2286 = vpop.f32.mrb[0].mxu0
      %v2287 = vpop.f32.mrb[0].mxu0
      %v2288 = vadd.f32 %v1960, %v2287
      %v2289 = vpop.f32.mrb[0].mxu0
      %2290 = vmatprep.mubr.bf16.mxu0 0
      %2291 = vmatmul.mubr.bf16.gmra.mrb[0].mxu0 %v1624
      %v2292 = vpop.f32.mrb[0].mxu0
      %v2293 = vadd.f32 %v1965, %v2292
      %v2294 = vpop.f32.mrb[0].mxu0
      %v2295 = vpop.f32.mrb[0].mxu0
      %v2296 = vadd.f32 %v1968, %v2295
      %v2297 = vpop.f32.mrb[0].mxu0
      %2298 = vmatprep.mubr.bf16.mxu0 0
      %2299 = vmatmul.mubr.bf16.gmra.mrb[0].mxu0 %v1627
      %v2300 = vpop.f32.mrb[0].mxu0
      %v2301 = vadd.f32 %v1973, %v2300
      %v2302 = vpop.f32.mrb[0].mxu0
      %v2303 = vpop.f32.mrb[0].mxu0
      %v2304 = vadd.f32 %v1976, %v2303
      %v2305 = vpop.f32.mrb[0].mxu0
      %2306 = vmatprep.mubr.bf16.mxu0 0
      %2307 = vmatmul.mubr.bf16.gmra.mrb[0].mxu0 %v1630
      %v2308 = vpop.f32.mrb[0].mxu0
      %v2309 = vadd.f32 %v1981, %v2308
      %v2310 = vpop.f32.mrb[0].mxu0
      %v2311 = vpop.f32.mrb[0].mxu0
      %v2312 = vadd.f32 %v1984, %v2311
      %v2313 = vpop.f32.mrb[0].mxu0
      %2314 = vmatprep.mubr.bf16.mxu0 0
      %2315 = vmatmul.mubr.bf16.gmra.mrb[0].mxu0 %v1633
      %v2316 = vpop.f32.mrb[0].mxu0
      %v2317 = vadd.f32 %v1989, %v2316
      %v2318 = vpop.f32.mrb[0].mxu0
      %v2319 = vpop.f32.mrb[0].mxu0
      %v2320 = vadd.f32 %v1992, %v2319
      %v2321 = vpop.f32.mrb[0].mxu0
      %2322 = vdwg.mxu0
      %v2323 = vadd.f32 %v2197, %v2033
      %v2324 = vadd.f32 %v2200, %v2036
      %v2325 = vadd.f32 %v2205, %v2041
      %v2326 = vadd.f32 %v2208, %v2044
      %v2327 = vadd.f32 %v2213, %v2049
      %v2328 = vadd.f32 %v2216, %v2052
      %v2329 = vadd.f32 %v2221, %v2057
      %v2330 = vadd.f32 %v2224, %v2060
      %v2331 = vadd.f32 %v2229, %v2065
      %v2332 = vadd.f32 %v2232, %v2068
      %v2333 = vadd.f32 %v2237, %v2073
      %v2334 = vadd.f32 %v2240, %v2076
      %v2335 = vadd.f32 %v2245, %v2081
      %v2336 = vadd.f32 %v2248, %v2084
      %v2337 = vadd.f32 %v2253, %v2089
      %v2338 = vadd.f32 %v2256, %v2092
      %v2339 = vadd.f32 %v2261, %v2097
      %v2340 = vadd.f32 %v2264, %v2100
      %v2341 = vadd.f32 %v2269, %v2105
      %v2342 = vadd.f32 %v2272, %v2108
      %v2343 = vadd.f32 %v2277, %v2113
      %v2344 = vadd.f32 %v2280, %v2116
      %v2345 = vadd.f32 %v2285, %v2121
      %v2346 = vadd.f32 %v2288, %v2124
      %v2347 = vadd.f32 %v2293, %v2129
      %v2348 = vadd.f32 %v2296, %v2132
      %v2349 = vadd.f32 %v2301, %v2137
      %v2350 = vadd.f32 %v2304, %v2140
      %v2351 = vadd.f32 %v2309, %v2145
      %v2352 = vadd.f32 %v2312, %v2148
      %v2353 = vadd.f32 %v2317, %v2153
      %v2354 = vadd.f32 %v2320, %v2156
      %s2355 = scalar_lea.vmem %s1, 24
      %v2356 = vld [vmem:[%s2355] sm:$0xf]
      %v2357 = vld [vmem:[%s2355 + $0x4] sm:$0xf]
      %v2358 = vld [vmem:[%s2355 + $0x8] sm:$0xf]
      %v2360 = vsel %vm1214, %v2357, 0
      %2362 = vmatprep.subr.bf16.mxu0 0
      %2363 = vmatpush1.bf16.msra.mxu0 %v2360
      %2364 = vmatprep.subr.bf16.mxu0 0
      %2365 = vmatpush1.bf16.msra.mxu0 0
      %2366 = vmatprep.subr.bf16.mxu0 0
      %2367 = vmatpush1.bf16.msra.mxu0 0
      %2368 = vmatprep.subr.bf16.mxu0 0
      %2369 = vmatpush1.bf16.msra.mxu0 0
      %2370 = vmatprep.subr.bf16.mxu0 0
      %2371 = vmatpush1.bf16.msra.mxu0 0
      %2372 = vmatprep.subr.bf16.mxu0 0
      %2373 = vmatpush1.bf16.msra.mxu0 0
      %2374 = vmatprep.subr.bf16.mxu0 0
      %2375 = vmatpush1.bf16.msra.mxu0 0
      %2376 = vmatprep.subr.bf16.mxu0 0
      %2377 = vmatpush1.bf16.msra.mxu0 0
      %2378 = vmatprep.subr.bf16.mxu0 0
      %2379 = vmatpush1.bf16.msra.mxu0 0
      %2380 = vmatprep.subr.bf16.mxu0 0
      %2381 = vmatpush1.bf16.msra.mxu0 0
      %2382 = vmatprep.subr.bf16.mxu0 0
      %2383 = vmatpush1.bf16.msra.mxu0 0
      %2384 = vmatprep.subr.bf16.mxu0 0
      %2385 = vmatpush1.bf16.msra.mxu0 0
      %2386 = vmatprep.subr.bf16.mxu0 0
      %2387 = vmatpush1.bf16.msra.mxu0 0
      %2388 = vmatprep.subr.bf16.mxu0 0
      %2389 = vmatpush1.bf16.msra.mxu0 0
      %2390 = vmatprep.subr.bf16.mxu0 0
      %2391 = vmatpush1.bf16.msra.mxu0 0
      %2392 = vmatprep.subr.bf16.mxu0 0
      %2393 = vmatpush1.bf16.msra.mxu0 0
      %2394 = vmatprep.mubr.bf16.mxu0 0
      %2395 = vmatmul.mubr.bf16.gmra.mrb[0].mxu0 %v1182
      %v2396 = vpop.f32.mrb[0].mxu0
      %v2397 = vpop.f32.mrb[0].mxu0
      %v2398 = vpop.f32.mrb[0].mxu0
      %v2399 = vpop.f32.mrb[0].mxu0
      %2400 = vmatprep.mubr.bf16.mxu0 0
      %2401 = vmatmul.mubr.bf16.gmra.mrb[0].mxu0 %v1184
      %v2402 = vpop.f32.mrb[0].mxu0
      %v2403 = vadd.f32 0.0, %v2402
      %v2404 = vpop.f32.mrb[0].mxu0
      %v2405 = vpop.f32.mrb[0].mxu0
      %v2406 = vadd.f32 0.0, %v2405
      %v2407 = vpop.f32.mrb[0].mxu0
      %2408 = vmatprep.mubr.bf16.mxu0 0
      %2409 = vmatmul.mubr.bf16.gmra.mrb[0].mxu0 %v1186
      %v2410 = vpop.f32.mrb[0].mxu0
      %v2411 = vadd.f32 0.0, %v2410
      %v2412 = vpop.f32.mrb[0].mxu0
      %v2413 = vpop.f32.mrb[0].mxu0
      %v2414 = vadd.f32 0.0, %v2413
      %v2415 = vpop.f32.mrb[0].mxu0
      %2416 = vmatprep.mubr.bf16.mxu0 0
      %2417 = vmatmul.mubr.bf16.gmra.mrb[0].mxu0 %v1188
      %v2418 = vpop.f32.mrb[0].mxu0
      %v2419 = vadd.f32 0.0, %v2418
      %v2420 = vpop.f32.mrb[0].mxu0
      %v2421 = vpop.f32.mrb[0].mxu0
      %v2422 = vadd.f32 0.0, %v2421
      %v2423 = vpop.f32.mrb[0].mxu0
      %2424 = vmatprep.mubr.bf16.mxu0 0
      %2425 = vmatmul.mubr.bf16.gmra.mrb[0].mxu0 %v1190
      %v2426 = vpop.f32.mrb[0].mxu0
      %v2427 = vadd.f32 0.0, %v2426
      %v2428 = vpop.f32.mrb[0].mxu0
      %v2429 = vpop.f32.mrb[0].mxu0
      %v2430 = vadd.f32 0.0, %v2429
      %v2431 = vpop.f32.mrb[0].mxu0
      %2432 = vmatprep.mubr.bf16.mxu0 0
      %2433 = vmatmul.mubr.bf16.gmra.mrb[0].mxu0 %v1192
      %v2434 = vpop.f32.mrb[0].mxu0
      %v2435 = vadd.f32 0.0, %v2434
      %v2436 = vpop.f32.mrb[0].mxu0
      %v2437 = vpop.f32.mrb[0].mxu0
      %v2438 = vadd.f32 0.0, %v2437
      %v2439 = vpop.f32.mrb[0].mxu0
      %2440 = vmatprep.mubr.bf16.mxu0 0
      %2441 = vmatmul.mubr.bf16.gmra.mrb[0].mxu0 %v1194
      %v2442 = vpop.f32.mrb[0].mxu0
      %v2443 = vadd.f32 0.0, %v2442
      %v2444 = vpop.f32.mrb[0].mxu0
      %v2445 = vpop.f32.mrb[0].mxu0
      %v2446 = vadd.f32 0.0, %v2445
      %v2447 = vpop.f32.mrb[0].mxu0
      %2448 = vmatprep.mubr.bf16.mxu0 0
      %2449 = vmatmul.mubr.bf16.gmra.mrb[0].mxu0 %v1196
      %v2450 = vpop.f32.mrb[0].mxu0
      %v2451 = vadd.f32 0.0, %v2450
      %v2452 = vpop.f32.mrb[0].mxu0
      %v2453 = vpop.f32.mrb[0].mxu0
      %v2454 = vadd.f32 0.0, %v2453
      %v2455 = vpop.f32.mrb[0].mxu0
      %2456 = vmatprep.mubr.bf16.mxu0 0
      %2457 = vmatmul.mubr.bf16.gmra.mrb[0].mxu0 %v1198
      %v2458 = vpop.f32.mrb[0].mxu0
      %v2459 = vadd.f32 0.0, %v2458
      %v2460 = vpop.f32.mrb[0].mxu0
      %v2461 = vpop.f32.mrb[0].mxu0
      %v2462 = vadd.f32 0.0, %v2461
      %v2463 = vpop.f32.mrb[0].mxu0
      %2464 = vmatprep.mubr.bf16.mxu0 0
      %2465 = vmatmul.mubr.bf16.gmra.mrb[0].mxu0 %v1200
      %v2466 = vpop.f32.mrb[0].mxu0
      %v2467 = vadd.f32 0.0, %v2466
      %v2468 = vpop.f32.mrb[0].mxu0
      %v2469 = vpop.f32.mrb[0].mxu0
      %v2470 = vadd.f32 0.0, %v2469
      %v2471 = vpop.f32.mrb[0].mxu0
      %2472 = vmatprep.mubr.bf16.mxu0 0
      %2473 = vmatmul.mubr.bf16.gmra.mrb[0].mxu0 %v1202
      %v2474 = vpop.f32.mrb[0].mxu0
      %v2475 = vadd.f32 0.0, %v2474
      %v2476 = vpop.f32.mrb[0].mxu0
      %v2477 = vpop.f32.mrb[0].mxu0
      %v2478 = vadd.f32 0.0, %v2477
      %v2479 = vpop.f32.mrb[0].mxu0
      %2480 = vmatprep.mubr.bf16.mxu0 0
      %2481 = vmatmul.mubr.bf16.gmra.mrb[0].mxu0 %v1204
      %v2482 = vpop.f32.mrb[0].mxu0
      %v2483 = vadd.f32 0.0, %v2482
      %v2484 = vpop.f32.mrb[0].mxu0
      %v2485 = vpop.f32.mrb[0].mxu0
      %v2486 = vadd.f32 0.0, %v2485
      %v2487 = vpop.f32.mrb[0].mxu0
      %2488 = vmatprep.mubr.bf16.mxu0 0
      %2489 = vmatmul.mubr.bf16.gmra.mrb[0].mxu0 %v1206
      %v2490 = vpop.f32.mrb[0].mxu0
      %v2491 = vadd.f32 0.0, %v2490
      %v2492 = vpop.f32.mrb[0].mxu0
      %v2493 = vpop.f32.mrb[0].mxu0
      %v2494 = vadd.f32 0.0, %v2493
      %v2495 = vpop.f32.mrb[0].mxu0
      %2496 = vmatprep.mubr.bf16.mxu0 0
      %2497 = vmatmul.mubr.bf16.gmra.mrb[0].mxu0 %v1208
      %v2498 = vpop.f32.mrb[0].mxu0
      %v2499 = vadd.f32 0.0, %v2498
      %v2500 = vpop.f32.mrb[0].mxu0
      %v2501 = vpop.f32.mrb[0].mxu0
      %v2502 = vadd.f32 0.0, %v2501
      %v2503 = vpop.f32.mrb[0].mxu0
      %2504 = vmatprep.mubr.bf16.mxu0 0
      %2505 = vmatmul.mubr.bf16.gmra.mrb[0].mxu0 %v1210
      %v2506 = vpop.f32.mrb[0].mxu0
      %v2507 = vadd.f32 0.0, %v2506
      %v2508 = vpop.f32.mrb[0].mxu0
      %v2509 = vpop.f32.mrb[0].mxu0
      %v2510 = vadd.f32 0.0, %v2509
      %v2511 = vpop.f32.mrb[0].mxu0
      %2512 = vmatprep.mubr.bf16.mxu0 0
      %2513 = vmatmul.mubr.bf16.gmra.mrb[0].mxu0 %v1212
      %v2514 = vpop.f32.mrb[0].mxu0
      %v2515 = vadd.f32 0.0, %v2514
      %v2516 = vpop.f32.mrb[0].mxu0
      %v2517 = vpop.f32.mrb[0].mxu0
      %v2518 = vadd.f32 0.0, %v2517
      %v2519 = vpop.f32.mrb[0].mxu0
      %2520 = vdwg.mxu0
      %v2522 = vsel %vm1214, %v2358, 0
      %2524 = vmatprep.subr.bf16.mxu0 0
      %2525 = vmatpush1.bf16.msra.mxu0 %v2522
      %2526 = vmatprep.subr.bf16.mxu0 0
      %2527 = vmatpush1.bf16.msra.mxu0 0
      %2528 = vmatprep.subr.bf16.mxu0 0
      %2529 = vmatpush1.bf16.msra.mxu0 0
      %2530 = vmatprep.subr.bf16.mxu0 0
      %2531 = vmatpush1.bf16.msra.mxu0 0
      %2532 = vmatprep.subr.bf16.mxu0 0
      %2533 = vmatpush1.bf16.msra.mxu0 0
      %2534 = vmatprep.subr.bf16.mxu0 0
      %2535 = vmatpush1.bf16.msra.mxu0 0
      %2536 = vmatprep.subr.bf16.mxu0 0
      %2537 = vmatpush1.bf16.msra.mxu0 0
      %2538 = vmatprep.subr.bf16.mxu0 0
      %2539 = vmatpush1.bf16.msra.mxu0 0
      %2540 = vmatprep.subr.bf16.mxu0 0
      %2541 = vmatpush1.bf16.msra.mxu0 0
      %2542 = vmatprep.subr.bf16.mxu0 0
      %2543 = vmatpush1.bf16.msra.mxu0 0
      %2544 = vmatprep.subr.bf16.mxu0 0
      %2545 = vmatpush1.bf16.msra.mxu0 0
      %2546 = vmatprep.subr.bf16.mxu0 0
      %2547 = vmatpush1.bf16.msra.mxu0 0
      %2548 = vmatprep.subr.bf16.mxu0 0
      %2549 = vmatpush1.bf16.msra.mxu0 0
      %2550 = vmatprep.subr.bf16.mxu0 0
      %2551 = vmatpush1.bf16.msra.mxu0 0
      %2552 = vmatprep.subr.bf16.mxu0 0
      %2553 = vmatpush1.bf16.msra.mxu0 0
      %2554 = vmatprep.subr.bf16.mxu0 0
      %2555 = vmatpush1.bf16.msra.mxu0 0
      %2556 = vmatprep.mubr.bf16.mxu0 0
      %2557 = vmatmul.mubr.bf16.gmra.mrb[0].mxu0 %v1378
      %v2558 = vpop.f32.mrb[0].mxu0
      %v2559 = vpop.f32.mrb[0].mxu0
      %v2560 = vpop.f32.mrb[0].mxu0
      %v2561 = vpop.f32.mrb[0].mxu0
      %2562 = vmatprep.mubr.bf16.mxu0 0
      %2563 = vmatmul.mubr.bf16.gmra.mrb[0].mxu0 %v1381
      %v2564 = vpop.f32.mrb[0].mxu0
      %v2565 = vadd.f32 0.0, %v2564
      %v2566 = vpop.f32.mrb[0].mxu0
      %v2567 = vpop.f32.mrb[0].mxu0
      %v2568 = vadd.f32 0.0, %v2567
      %v2569 = vpop.f32.mrb[0].mxu0
      %2570 = vmatprep.mubr.bf16.mxu0 0
      %2571 = vmatmul.mubr.bf16.gmra.mrb[0].mxu0 %v1384
      %v2572 = vpop.f32.mrb[0].mxu0
      %v2573 = vadd.f32 0.0, %v2572
      %v2574 = vpop.f32.mrb[0].mxu0
      %v2575 = vpop.f32.mrb[0].mxu0
      %v2576 = vadd.f32 0.0, %v2575
      %v2577 = vpop.f32.mrb[0].mxu0
      %2578 = vmatprep.mubr.bf16.mxu0 0
      %2579 = vmatmul.mubr.bf16.gmra.mrb[0].mxu0 %v1387
      %v2580 = vpop.f32.mrb[0].mxu0
      %v2581 = vadd.f32 0.0, %v2580
      %v2582 = vpop.f32.mrb[0].mxu0
      %v2583 = vpop.f32.mrb[0].mxu0
      %v2584 = vadd.f32 0.0, %v2583
      %v2585 = vpop.f32.mrb[0].mxu0
      %2586 = vmatprep.mubr.bf16.mxu0 0
      %2587 = vmatmul.mubr.bf16.gmra.mrb[0].mxu0 %v1390
      %v2588 = vpop.f32.mrb[0].mxu0
      %v2589 = vadd.f32 0.0, %v2588
      %v2590 = vpop.f32.mrb[0].mxu0
      %v2591 = vpop.f32.mrb[0].mxu0
      %v2592 = vadd.f32 0.0, %v2591
      %v2593 = vpop.f32.mrb[0].mxu0
      %2594 = vmatprep.mubr.bf16.mxu0 0
      %2595 = vmatmul.mubr.bf16.gmra.mrb[0].mxu0 %v1393
      %v2596 = vpop.f32.mrb[0].mxu0
      %v2597 = vadd.f32 0.0, %v2596
      %v2598 = vpop.f32.mrb[0].mxu0
      %v2599 = vpop.f32.mrb[0].mxu0
      %v2600 = vadd.f32 0.0, %v2599
      %v2601 = vpop.f32.mrb[0].mxu0
      %2602 = vmatprep.mubr.bf16.mxu0 0
      %2603 = vmatmul.mubr.bf16.gmra.mrb[0].mxu0 %v1396
      %v2604 = vpop.f32.mrb[0].mxu0
      %v2605 = vadd.f32 0.0, %v2604
      %v2606 = vpop.f32.mrb[0].mxu0
      %v2607 = vpop.f32.mrb[0].mxu0
      %v2608 = vadd.f32 0.0, %v2607
      %v2609 = vpop.f32.mrb[0].mxu0
      %2610 = vmatprep.mubr.bf16.mxu0 0
      %2611 = vmatmul.mubr.bf16.gmra.mrb[0].mxu0 %v1399
      %v2612 = vpop.f32.mrb[0].mxu0
      %v2613 = vadd.f32 0.0, %v2612
      %v2614 = vpop.f32.mrb[0].mxu0
      %v2615 = vpop.f32.mrb[0].mxu0
      %v2616 = vadd.f32 0.0, %v2615
      %v2617 = vpop.f32.mrb[0].mxu0
      %2618 = vmatprep.mubr.bf16.mxu0 0
      %2619 = vmatmul.mubr.bf16.gmra.mrb[0].mxu0 %v1402
      %v2620 = vpop.f32.mrb[0].mxu0
      %v2621 = vadd.f32 0.0, %v2620
      %v2622 = vpop.f32.mrb[0].mxu0
      %v2623 = vpop.f32.mrb[0].mxu0
      %v2624 = vadd.f32 0.0, %v2623
      %v2625 = vpop.f32.mrb[0].mxu0
      %2626 = vmatprep.mubr.bf16.mxu0 0
      %2627 = vmatmul.mubr.bf16.gmra.mrb[0].mxu0 %v1405
      %v2628 = vpop.f32.mrb[0].mxu0
      %v2629 = vadd.f32 0.0, %v2628
      %v2630 = vpop.f32.mrb[0].mxu0
      %v2631 = vpop.f32.mrb[0].mxu0
      %v2632 = vadd.f32 0.0, %v2631
      %v2633 = vpop.f32.mrb[0].mxu0
      %2634 = vmatprep.mubr.bf16.mxu0 0
      %2635 = vmatmul.mubr.bf16.gmra.mrb[0].mxu0 %v1408
      %v2636 = vpop.f32.mrb[0].mxu0
      %v2637 = vadd.f32 0.0, %v2636
      %v2638 = vpop.f32.mrb[0].mxu0
      %v2639 = vpop.f32.mrb[0].mxu0
      %v2640 = vadd.f32 0.0, %v2639
      %v2641 = vpop.f32.mrb[0].mxu0
      %2642 = vmatprep.mubr.bf16.mxu0 0
      %2643 = vmatmul.mubr.bf16.gmra.mrb[0].mxu0 %v1411
      %v2644 = vpop.f32.mrb[0].mxu0
      %v2645 = vadd.f32 0.0, %v2644
      %v2646 = vpop.f32.mrb[0].mxu0
      %v2647 = vpop.f32.mrb[0].mxu0
      %v2648 = vadd.f32 0.0, %v2647
      %v2649 = vpop.f32.mrb[0].mxu0
      %2650 = vmatprep.mubr.bf16.mxu0 0
      %2651 = vmatmul.mubr.bf16.gmra.mrb[0].mxu0 %v1414
      %v2652 = vpop.f32.mrb[0].mxu0
      %v2653 = vadd.f32 0.0, %v2652
      %v2654 = vpop.f32.mrb[0].mxu0
      %v2655 = vpop.f32.mrb[0].mxu0
      %v2656 = vadd.f32 0.0, %v2655
      %v2657 = vpop.f32.mrb[0].mxu0
      %2658 = vmatprep.mubr.bf16.mxu0 0
      %2659 = vmatmul.mubr.bf16.gmra.mrb[0].mxu0 %v1417
      %v2660 = vpop.f32.mrb[0].mxu0
      %v2661 = vadd.f32 0.0, %v2660
      %v2662 = vpop.f32.mrb[0].mxu0
      %v2663 = vpop.f32.mrb[0].mxu0
      %v2664 = vadd.f32 0.0, %v2663
      %v2665 = vpop.f32.mrb[0].mxu0
      %2666 = vmatprep.mubr.bf16.mxu0 0
      %2667 = vmatmul.mubr.bf16.gmra.mrb[0].mxu0 %v1420
      %v2668 = vpop.f32.mrb[0].mxu0
      %v2669 = vadd.f32 0.0, %v2668
      %v2670 = vpop.f32.mrb[0].mxu0
      %v2671 = vpop.f32.mrb[0].mxu0
      %v2672 = vadd.f32 0.0, %v2671
      %v2673 = vpop.f32.mrb[0].mxu0
      %2674 = vmatprep.mubr.bf16.mxu0 0
      %2675 = vmatmul.mubr.bf16.gmra.mrb[0].mxu0 %v1423
      %v2676 = vpop.f32.mrb[0].mxu0
      %v2677 = vadd.f32 0.0, %v2676
      %v2678 = vpop.f32.mrb[0].mxu0
      %v2679 = vpop.f32.mrb[0].mxu0
      %v2680 = vadd.f32 0.0, %v2679
      %v2681 = vpop.f32.mrb[0].mxu0
      %2682 = vdwg.mxu0
      %v2684 = vsel %vm1214, %v2356, 0
      %2686 = vmatprep.subr.bf16.mxu0 0
      %2687 = vmatpush1.bf16.msra.mxu0 %v2684
      %2688 = vmatprep.subr.bf16.mxu0 0
      %2689 = vmatpush1.bf16.msra.mxu0 0
      %2690 = vmatprep.subr.bf16.mxu0 0
      %2691 = vmatpush1.bf16.msra.mxu0 0
      %2692 = vmatprep.subr.bf16.mxu0 0
      %2693 = vmatpush1.bf16.msra.mxu0 0
      %2694 = vmatprep.subr.bf16.mxu0 0
      %2695 = vmatpush1.bf16.msra.mxu0 0
      %2696 = vmatprep.subr.bf16.mxu0 0
      %2697 = vmatpush1.bf16.msra.mxu0 0
      %2698 = vmatprep.subr.bf16.mxu0 0
      %2699 = vmatpush1.bf16.msra.mxu0 0
      %2700 = vmatprep.subr.bf16.mxu0 0
      %2701 = vmatpush1.bf16.msra.mxu0 0
      %2702 = vmatprep.subr.bf16.mxu0 0
      %2703 = vmatpush1.bf16.msra.mxu0 0
      %2704 = vmatprep.subr.bf16.mxu0 0
      %2705 = vmatpush1.bf16.msra.mxu0 0
      %2706 = vmatprep.subr.bf16.mxu0 0
      %2707 = vmatpush1.bf16.msra.mxu0 0
      %2708 = vmatprep.subr.bf16.mxu0 0
      %2709 = vmatpush1.bf16.msra.mxu0 0
      %2710 = vmatprep.subr.bf16.mxu0 0
      %2711 = vmatpush1.bf16.msra.mxu0 0
      %2712 = vmatprep.subr.bf16.mxu0 0
      %2713 = vmatpush1.bf16.msra.mxu0 0
      %2714 = vmatprep.subr.bf16.mxu0 0
      %2715 = vmatpush1.bf16.msra.mxu0 0
      %2716 = vmatprep.subr.bf16.mxu0 0
      %2717 = vmatpush1.bf16.msra.mxu0 0
      %2718 = vmatprep.mubr.bf16.mxu0 0
      %2719 = vmatmul.mubr.bf16.gmra.mrb[0].mxu0 %v1588
      %v2720 = vpop.f32.mrb[0].mxu0
      %v2721 = vpop.f32.mrb[0].mxu0
      %v2722 = vpop.f32.mrb[0].mxu0
      %v2723 = vpop.f32.mrb[0].mxu0
      %2724 = vmatprep.mubr.bf16.mxu0 0
      %2725 = vmatmul.mubr.bf16.gmra.mrb[0].mxu0 %v1591
      %v2726 = vpop.f32.mrb[0].mxu0
      %v2727 = vadd.f32 %v2403, %v2726
      %v2728 = vpop.f32.mrb[0].mxu0
      %v2729 = vpop.f32.mrb[0].mxu0
      %v2730 = vadd.f32 %v2406, %v2729
      %v2731 = vpop.f32.mrb[0].mxu0
      %2732 = vmatprep.mubr.bf16.mxu0 0
      %2733 = vmatmul.mubr.bf16.gmra.mrb[0].mxu0 %v1594
      %v2734 = vpop.f32.mrb[0].mxu0
      %v2735 = vadd.f32 %v2411, %v2734
      %v2736 = vpop.f32.mrb[0].mxu0
      %v2737 = vpop.f32.mrb[0].mxu0
      %v2738 = vadd.f32 %v2414, %v2737
      %v2739 = vpop.f32.mrb[0].mxu0
      %2740 = vmatprep.mubr.bf16.mxu0 0
      %2741 = vmatmul.mubr.bf16.gmra.mrb[0].mxu0 %v1597
      %v2742 = vpop.f32.mrb[0].mxu0
      %v2743 = vadd.f32 %v2419, %v2742
      %v2744 = vpop.f32.mrb[0].mxu0
      %v2745 = vpop.f32.mrb[0].mxu0
      %v2746 = vadd.f32 %v2422, %v2745
      %v2747 = vpop.f32.mrb[0].mxu0
      %2748 = vmatprep.mubr.bf16.mxu0 0
      %2749 = vmatmul.mubr.bf16.gmra.mrb[0].mxu0 %v1600
      %v2750 = vpop.f32.mrb[0].mxu0
      %v2751 = vadd.f32 %v2427, %v2750
      %v2752 = vpop.f32.mrb[0].mxu0
      %v2753 = vpop.f32.mrb[0].mxu0
      %v2754 = vadd.f32 %v2430, %v2753
      %v2755 = vpop.f32.mrb[0].mxu0
      %2756 = vmatprep.mubr.bf16.mxu0 0
      %2757 = vmatmul.mubr.bf16.gmra.mrb[0].mxu0 %v1603
      %v2758 = vpop.f32.mrb[0].mxu0
      %v2759 = vadd.f32 %v2435, %v2758
      %v2760 = vpop.f32.mrb[0].mxu0
      %v2761 = vpop.f32.mrb[0].mxu0
      %v2762 = vadd.f32 %v2438, %v2761
      %v2763 = vpop.f32.mrb[0].mxu0
      %2764 = vmatprep.mubr.bf16.mxu0 0
      %2765 = vmatmul.mubr.bf16.gmra.mrb[0].mxu0 %v1606
      %v2766 = vpop.f32.mrb[0].mxu0
      %v2767 = vadd.f32 %v2443, %v2766
      %v2768 = vpop.f32.mrb[0].mxu0
      %v2769 = vpop.f32.mrb[0].mxu0
      %v2770 = vadd.f32 %v2446, %v2769
      %v2771 = vpop.f32.mrb[0].mxu0
      %2772 = vmatprep.mubr.bf16.mxu0 0
      %2773 = vmatmul.mubr.bf16.gmra.mrb[0].mxu0 %v1609
      %v2774 = vpop.f32.mrb[0].mxu0
      %v2775 = vadd.f32 %v2451, %v2774
      %v2776 = vpop.f32.mrb[0].mxu0
      %v2777 = vpop.f32.mrb[0].mxu0
      %v2778 = vadd.f32 %v2454, %v2777
      %v2779 = vpop.f32.mrb[0].mxu0
      %2780 = vmatprep.mubr.bf16.mxu0 0
      %2781 = vmatmul.mubr.bf16.gmra.mrb[0].mxu0 %v1612
      %v2782 = vpop.f32.mrb[0].mxu0
      %v2783 = vadd.f32 %v2459, %v2782
      %v2784 = vpop.f32.mrb[0].mxu0
      %v2785 = vpop.f32.mrb[0].mxu0
      %v2786 = vadd.f32 %v2462, %v2785
      %v2787 = vpop.f32.mrb[0].mxu0
      %2788 = vmatprep.mubr.bf16.mxu0 0
      %2789 = vmatmul.mubr.bf16.gmra.mrb[0].mxu0 %v1615
      %v2790 = vpop.f32.mrb[0].mxu0
      %v2791 = vadd.f32 %v2467, %v2790
      %v2792 = vpop.f32.mrb[0].mxu0
      %v2793 = vpop.f32.mrb[0].mxu0
      %v2794 = vadd.f32 %v2470, %v2793
      %v2795 = vpop.f32.mrb[0].mxu0
      %2796 = vmatprep.mubr.bf16.mxu0 0
      %2797 = vmatmul.mubr.bf16.gmra.mrb[0].mxu0 %v1618
      %v2798 = vpop.f32.mrb[0].mxu0
      %v2799 = vadd.f32 %v2475, %v2798
      %v2800 = vpop.f32.mrb[0].mxu0
      %v2801 = vpop.f32.mrb[0].mxu0
      %v2802 = vadd.f32 %v2478, %v2801
      %v2803 = vpop.f32.mrb[0].mxu0
      %2804 = vmatprep.mubr.bf16.mxu0 0
      %2805 = vmatmul.mubr.bf16.gmra.mrb[0].mxu0 %v1621
      %v2806 = vpop.f32.mrb[0].mxu0
      %v2807 = vadd.f32 %v2483, %v2806
      %v2808 = vpop.f32.mrb[0].mxu0
      %v2809 = vpop.f32.mrb[0].mxu0
      %v2810 = vadd.f32 %v2486, %v2809
      %v2811 = vpop.f32.mrb[0].mxu0
      %2812 = vmatprep.mubr.bf16.mxu0 0
      %2813 = vmatmul.mubr.bf16.gmra.mrb[0].mxu0 %v1624
      %v2814 = vpop.f32.mrb[0].mxu0
      %v2815 = vadd.f32 %v2491, %v2814
      %v2816 = vpop.f32.mrb[0].mxu0
      %v2817 = vpop.f32.mrb[0].mxu0
      %v2818 = vadd.f32 %v2494, %v2817
      %v2819 = vpop.f32.mrb[0].mxu0
      %2820 = vmatprep.mubr.bf16.mxu0 0
      %2821 = vmatmul.mubr.bf16.gmra.mrb[0].mxu0 %v1627
      %v2822 = vpop.f32.mrb[0].mxu0
      %v2823 = vadd.f32 %v2499, %v2822
      %v2824 = vpop.f32.mrb[0].mxu0
      %v2825 = vpop.f32.mrb[0].mxu0
      %v2826 = vadd.f32 %v2502, %v2825
      %v2827 = vpop.f32.mrb[0].mxu0
      %2828 = vmatprep.mubr.bf16.mxu0 0
      %2829 = vmatmul.mubr.bf16.gmra.mrb[0].mxu0 %v1630
      %v2830 = vpop.f32.mrb[0].mxu0
      %v2831 = vadd.f32 %v2507, %v2830
      %v2832 = vpop.f32.mrb[0].mxu0
      %v2833 = vpop.f32.mrb[0].mxu0
      %v2834 = vadd.f32 %v2510, %v2833
      %v2835 = vpop.f32.mrb[0].mxu0
      %2836 = vmatprep.mubr.bf16.mxu0 0
      %2837 = vmatmul.mubr.bf16.gmra.mrb[0].mxu0 %v1633
      %v2838 = vpop.f32.mrb[0].mxu0
      %v2839 = vadd.f32 %v2515, %v2838
      %v2840 = vpop.f32.mrb[0].mxu0
      %v2841 = vpop.f32.mrb[0].mxu0
      %v2842 = vadd.f32 %v2518, %v2841
      %v2843 = vpop.f32.mrb[0].mxu0
      %2844 = vdwg.mxu0
      %v2845 = vadd.f32 %v2727, %v2565
      %v2846 = vadd.f32 %v2730, %v2568
      %v2847 = vadd.f32 %v2735, %v2573
      %v2848 = vadd.f32 %v2738, %v2576
      %v2849 = vadd.f32 %v2743, %v2581
      %v2850 = vadd.f32 %v2746, %v2584
      %v2851 = vadd.f32 %v2751, %v2589
      %v2852 = vadd.f32 %v2754, %v2592
      %v2853 = vadd.f32 %v2759, %v2597
      %v2854 = vadd.f32 %v2762, %v2600
      %v2855 = vadd.f32 %v2767, %v2605
      %v2856 = vadd.f32 %v2770, %v2608
      %v2857 = vadd.f32 %v2775, %v2613
      %v2858 = vadd.f32 %v2778, %v2616
      %v2859 = vadd.f32 %v2783, %v2621
      %v2860 = vadd.f32 %v2786, %v2624
      %v2861 = vadd.f32 %v2791, %v2629
      %v2862 = vadd.f32 %v2794, %v2632
      %v2863 = vadd.f32 %v2799, %v2637
      %v2864 = vadd.f32 %v2802, %v2640
      %v2865 = vadd.f32 %v2807, %v2645
      %v2866 = vadd.f32 %v2810, %v2648
      %v2867 = vadd.f32 %v2815, %v2653
      %v2868 = vadd.f32 %v2818, %v2656
      %v2869 = vadd.f32 %v2823, %v2661
      %v2870 = vadd.f32 %v2826, %v2664
      %v2871 = vadd.f32 %v2831, %v2669
      %v2872 = vadd.f32 %v2834, %v2672
      %v2873 = vadd.f32 %v2839, %v2677
      %v2874 = vadd.f32 %v2842, %v2680
      %v2875 = vadd.f32 %v2323, 0.0
      %v2876 = vadd.f32 %v2324, 0.0
      %v2877 = vadd.f32 %v2325, %v1797
      %v2878 = vadd.f32 %v2326, %v1798
      %v2879 = vadd.f32 %v2327, %v1799
      %v2880 = vadd.f32 %v2328, %v1800
      %v2881 = vadd.f32 %v2329, %v1801
      %v2882 = vadd.f32 %v2330, %v1802
      %v2883 = vadd.f32 %v2331, %v1803
      %v2884 = vadd.f32 %v2332, %v1804
      %v2885 = vadd.f32 %v2333, %v1805
      %v2886 = vadd.f32 %v2334, %v1806
      %v2887 = vadd.f32 %v2335, %v1807
      %v2888 = vadd.f32 %v2336, %v1808
      %v2889 = vadd.f32 %v2337, %v1809
      %v2890 = vadd.f32 %v2338, %v1810
      %v2891 = vadd.f32 %v2339, %v1811
      %v2892 = vadd.f32 %v2340, %v1812
      %v2893 = vadd.f32 %v2341, %v1813
      %v2894 = vadd.f32 %v2342, %v1814
      %v2895 = vadd.f32 %v2343, %v1815
      %v2896 = vadd.f32 %v2344, %v1816
      %v2897 = vadd.f32 %v2345, %v1817
      %v2898 = vadd.f32 %v2346, %v1818
      %v2899 = vadd.f32 %v2347, %v1819
      %v2900 = vadd.f32 %v2348, %v1820
      %v2901 = vadd.f32 %v2349, %v1821
      %v2902 = vadd.f32 %v2350, %v1822
      %v2903 = vadd.f32 %v2351, %v1823
      %v2904 = vadd.f32 %v2352, %v1824
      %v2905 = vadd.f32 %v2353, %v1825
      %v2906 = vadd.f32 %v2354, %v1826
      %v2907 = vadd.f32 %v2875, %v2845
      %v2908 = vadd.f32 %v2876, %v2846
      %v2909 = vadd.f32 %v2877, %v2847
      %v2910 = vadd.f32 %v2878, %v2848
      %v2911 = vadd.f32 %v2879, %v2849
      %v2912 = vadd.f32 %v2880, %v2850
      %v2913 = vadd.f32 %v2881, %v2851
      %v2914 = vadd.f32 %v2882, %v2852
      %v2915 = vadd.f32 %v2883, %v2853
      %v2916 = vadd.f32 %v2884, %v2854
      %v2917 = vadd.f32 %v2885, %v2855
      %v2918 = vadd.f32 %v2886, %v2856
      %v2919 = vadd.f32 %v2887, %v2857
      %v2920 = vadd.f32 %v2888, %v2858
      %v2921 = vadd.f32 %v2889, %v2859
      %v2922 = vadd.f32 %v2890, %v2860
      %v2923 = vadd.f32 %v2891, %v2861
      %v2924 = vadd.f32 %v2892, %v2862
      %v2925 = vadd.f32 %v2893, %v2863
      %v2926 = vadd.f32 %v2894, %v2864
      %v2927 = vadd.f32 %v2895, %v2865
      %v2928 = vadd.f32 %v2896, %v2866
      %v2929 = vadd.f32 %v2897, %v2867
      %v2930 = vadd.f32 %v2898, %v2868
      %v2931 = vadd.f32 %v2899, %v2869
      %v2932 = vadd.f32 %v2900, %v2870
      %v2933 = vadd.f32 %v2901, %v2871
      %v2934 = vadd.f32 %v2902, %v2872
      %v2935 = vadd.f32 %v2903, %v2873
      %v2936 = vadd.f32 %v2904, %v2874
      %v2937 = vadd.f32 %v2905, 0.0
      %v2938 = vadd.f32 %v2906, 0.0
      %vm2939 = vcmask 523264
      %2940 = vst.msk [vmem:[%s143] sm:$0xff] %vm2939, %v2907
      %2941 = vst.msk [vmem:[%s143 + $0x8] sm:$0xff] %vm2939, %v2908
      %2942 = vst.msk [vmem:[%s143 + $0x10] sm:$0xff] %vm2939, %v2909
      %2943 = vst.msk [vmem:[%s143 + $0x18] sm:$0xff] %vm2939, %v2910
      %2944 = vst.msk [vmem:[%s143 + $0x20] sm:$0xff] %vm2939, %v2911
      %2945 = vst.msk [vmem:[%s143 + $0x28] sm:$0xff] %vm2939, %v2912
      %2946 = vst.msk [vmem:[%s143 + $0x30] sm:$0xff] %vm2939, %v2913
      %2947 = vst.msk [vmem:[%s143 + $0x38] sm:$0xff] %vm2939, %v2914
      %2948 = vst.msk [vmem:[%s143 + $0x40] sm:$0xff] %vm2939, %v2915
      %2949 = vst.msk [vmem:[%s143 + $0x48] sm:$0xff] %vm2939, %v2916
      %2950 = vst.msk [vmem:[%s143 + $0x50] sm:$0xff] %vm2939, %v2917
      %2951 = vst.msk [vmem:[%s143 + $0x58] sm:$0xff] %vm2939, %v2918
      %2952 = vst.msk [vmem:[%s143 + $0x60] sm:$0xff] %vm2939, %v2919
      %2953 = vst.msk [vmem:[%s143 + $0x68] sm:$0xff] %vm2939, %v2920
      %2954 = vst.msk [vmem:[%s143 + $0x70] sm:$0xff] %vm2939, %v2921
      %2955 = vst.msk [vmem:[%s143 + $0x78] sm:$0xff] %vm2939, %v2922
      %2956 = vst.msk [vmem:[%s143 + $0x80] sm:$0xff] %vm2939, %v2923
      %2957 = vst.msk [vmem:[%s143 + $0x88] sm:$0xff] %vm2939, %v2924
      %2958 = vst.msk [vmem:[%s143 + $0x90] sm:$0xff] %vm2939, %v2925
      %2959 = vst.msk [vmem:[%s143 + $0x98] sm:$0xff] %vm2939, %v2926
      %2960 = vst.msk [vmem:[%s143 + $0xa0] sm:$0xff] %vm2939, %v2927
      %2961 = vst.msk [vmem:[%s143 + $0xa8] sm:$0xff] %vm2939, %v2928
      %2962 = vst.msk [vmem:[%s143 + $0xb0] sm:$0xff] %vm2939, %v2929
      %2963 = vst.msk [vmem:[%s143 + $0xb8] sm:$0xff] %vm2939, %v2930
      %2964 = vst.msk [vmem:[%s143 + $0xc0] sm:$0xff] %vm2939, %v2931
      %2965 = vst.msk [vmem:[%s143 + $0xc8] sm:$0xff] %vm2939, %v2932
      %2966 = vst.msk [vmem:[%s143 + $0xd0] sm:$0xff] %vm2939, %v2933
      %2967 = vst.msk [vmem:[%s143 + $0xd8] sm:$0xff] %vm2939, %v2934
      %2968 = vst.msk [vmem:[%s143 + $0xe0] sm:$0xff] %vm2939, %v2935
      %2969 = vst.msk [vmem:[%s143 + $0xe8] sm:$0xff] %vm2939, %v2936
      %2970 = vst.msk [vmem:[%s143 + $0xf0] sm:$0xff] %vm2939, %v2937
      %2971 = vst.msk [vmem:[%s143 + $0xf8] sm:$0xff] %vm2939, %v2938
      %p2972 = scmp.lt.s32.totalorder %s13, 1
      %s2973 = scalar_select %p2972, %s13, 1
      %s2974 = smul.addr %s2973, 32
      %s2975 = smul.addr %s2974, 8
      %s2976 = scalar_lea.vmem %s2, %s2975
      // Predicated region
      $region29: #{tpu_custom_call.1} parent=27 // pred_check
        %p2977 = pneg %p78
      $region30: #{tpu_custom_call.1} parent=27 // pred_check_branch
        %2979 = sbr.rel (%p2977) target = $region32
      $region31: #{tpu_custom_call.1} parent=27 // pred_region
        _
      $region32: #{tpu_custom_call.1} parent=27 // pred_fallthru
        _
    $region28: #{tpu_custom_call.1} parent=5 // pred_fallthru
      _
    %p2980 = scmp.le.s32.totalorder 2, %s8
    // Predicated region
    $region33: #{tpu_custom_call.1} parent=5 // pred_check
      %p2981 = pneg %p2980
    $region34: #{tpu_custom_call.1} parent=5 // pred_check_branch
      %2983 = sbr.rel (%p2981) target = $region36
    $region35: #{tpu_custom_call.1} parent=5 // pred_region
      %s2984 = ssub.s32 %s8, 2
      // Predicated region
      $region37: #{tpu_custom_call.1} parent=35 // pred_check
        %p2985 = pneg %p84
      $region38: #{tpu_custom_call.1} parent=35 // pred_check_branch
        %2987 = sbr.rel (%p2985) target = $region40
      $region39: #{tpu_custom_call.1} parent=35 // pred_region
        %p2988 = scmp.lt.s32.totalorder %s14, 1
        %s2989 = scalar_select %p2988, %s14, 1
        %s2990 = smul.addr %s2989, 32
        %s2991 = smul.addr %s2990, 8
        %s2992 = scalar_lea.vmem %s2, %s2991
      $region40: #{tpu_custom_call.1} parent=35 // pred_fallthru
        _
    $region36: #{tpu_custom_call.1} parent=5 // pred_fallthru
      _
  $region6: #{tpu_custom_call.1} parent=0 // loop_footer
    %s12 = sadd.s32 1, %s8
  $region7: #{tpu_custom_call.1} parent=0 // loop_footer_branch
    %7 = sbr.rel target = $region3
  $region8: #{tpu_custom_call.1} parent=0 // loop_exit
    _

</llo_original>
